<compile_context>
chip_gen: v5e
topology: v5e:2x2
jax: 0.10.0
libtpu: 0.0.40
codegen_flags: <defaults>
</compile_context>

<pallas_src>
import functools
import math

import jax
import jax.numpy as jnp
from jax import lax
from jax.experimental import pallas as pl
from jax.experimental.pallas import tpu as pltpu


# bf16 MXU operands with f32 accumulation. Softmax / LayerNorm / accumulation
# math stays in f32.
_MXU_DTYPE = jnp.bfloat16


@functools.lru_cache(maxsize=None)
def _vmem_limit():
    """Generation-aware scoped-VMEM budget for the pallas_calls below."""
    try:
        cap = pltpu.get_tpu_info().vmem_capacity_bytes
    except Exception:  # fall back to v5e/v6e-class capacity
        cap = 128 * 1024 * 1024
    # ~48 MiB on 128 MiB parts (v5e/v6e), ~32 MiB on 64 MiB parts (v7x).
    return int(min(48 * 1024 * 1024, max(cap // 2, 16 * 1024 * 1024)))


def _pick_tile(dim, target, align):
    """Largest tile <= target that is a multiple of `align` and divides `dim`.

    Falls back to the full dimension (always a legal TPU block)."""
    if dim <= target:
        return dim
    t = (target // align) * align
    while t >= align:
        if dim % t == 0:
            return t
        t -= align
    return dim


# ----------------------------------------------------------------------------
# Pallas kernels
# ----------------------------------------------------------------------------

def _matmul_bias_kernel(x_ref, w_ref, b_ref, o_ref, acc_ref, *, activation):
    """Tiled  y = x @ w + b  (+ optional ReLU), k-reduction accumulator.

    w_ref arrives pre-cast to bf16; x is cast per tile (residual stream is f32)."""
    @pl.when(pl.program_id(2) == 0)
    def _():
        acc_ref[...] = jnp.zeros_like(acc_ref)

    acc_ref[...] += jnp.dot(x_ref[...].astype(_MXU_DTYPE), w_ref[...],
                            preferred_element_type=jnp.float32)

    @pl.when(pl.program_id(2) == pl.num_programs(2) - 1)
    def _():
        y = acc_ref[...] + b_ref[...]
        if activation == "relu":
            y = jnp.maximum(y, 0.0)
        o_ref[...] = y.astype(o_ref.dtype)


def _matmul_add_ln_kernel(x_ref, w_ref, b_ref, r_ref, g_ref, bt_ref,
                          o_ref, acc_ref, *, eps):
    """Tiled  LayerNorm((x @ w + b) + residual)  — LN fused into the finalize."""
    @pl.when(pl.program_id(1) == 0)
    def _():
        acc_ref[...] = jnp.zeros_like(acc_ref)

    acc_ref[...] += jnp.dot(x_ref[...].astype(_MXU_DTYPE), w_ref[...],
                            preferred_element_type=jnp.float32)

    @pl.when(pl.program_id(1) == pl.num_programs(1) - 1)
    def _():
        y = acc_ref[...] + b_ref[...] + r_ref[...]
        mu = jnp.mean(y, axis=-1, keepdims=True)
        var = jnp.mean(jnp.square(y - mu), axis=-1, keepdims=True)
        y = (y - mu) * lax.rsqrt(var + eps) * g_ref[...] + bt_ref[...]
        o_ref[...] = y.astype(o_ref.dtype)


def _attn_kernel(q_ref, k_ref, v_ref, am_ref, kp_ref, o_ref, s_ref,
                 *, n_heads, scale):
    """All heads of one (batch, q-tile): scaled QK^T + mask -> softmax -> P@V.

    q_ref: (1, Tq, D) bf16   k_ref/v_ref: (1, Sk, D) bf16
    am_ref: (Tq, Sk) f32 additive attention mask (shared over batch)
    kp_ref: (1, 1, Sk) f32 additive key-padding row for this batch
    o_ref:  (1, Tq, D) bf16   s_ref: (1, H, Tq, Sk) f32
    Heads live in the lane dim (D = H*Dk) so the output store is lane-dense.
    """
    d = q_ref.shape[-1]
    dk = d // n_heads
    q = q_ref[0]                       # (Tq, D) bf16
    k = k_ref[0]                       # (Sk, D) bf16
    v = v_ref[0]                       # (Sk, D) bf16
    mask = am_ref[...] + kp_ref[0]     # (Tq, Sk) f32, combined in-kernel

    outs = []
    for h in range(n_heads):                       # static unroll over heads
        lo = h * dk
        qh = (q[:, lo:lo + dk] * scale).astype(_MXU_DTYPE)   # scale folded into Q
        kh = k[:, lo:lo + dk]
        vh = v[:, lo:lo + dk]

        # QK^T without materializing a transpose: contract last dims.
        s = lax.dot_general(qh, kh, (((1,), (1,)), ((), ())),
                            preferred_element_type=jnp.float32)
        s = s + mask
        s = s - jnp.max(s, axis=-1, keepdims=True)
        e = jnp.exp(s)                                        # f32 on EUP
        p = e / jnp.sum(e, axis=-1, keepdims=True)            # exact divide (scores returned)
        s_ref[0, h] = p.astype(s_ref.dtype)

        outs.append(jnp.dot(p.astype(_MXU_DTYPE), vh,
                            preferred_element_type=jnp.float32))

    # heads concatenated along lanes -> one dense (Tq, D) store
    o_ref[0] = jnp.concatenate(outs, axis=-1).astype(o_ref.dtype)


# ----------------------------------------------------------------------------
# Kernel wrappers
# ----------------------------------------------------------------------------

def matmul_bias(x, w, b, activation=None, out_dtype=jnp.float32,
                tm=256, tn=256, tk=512):
    """x:(M,K) @ w:(K,N) + b:(N,) [+ relu] -> (M,N), tiled with a K reduction."""
    M, K = x.shape
    _, N = w.shape
    tm = _pick_tile(M, tm, 16)
    tn = _pick_tile(N, tn, 128)
    tk = _pick_tile(K, tk, 128)
    kernel = functools.partial(_matmul_bias_kernel, activation=activation)
    out_isz = jnp.dtype(out_dtype).itemsize
    cost = pl.CostEstimate(
        flops=2 * M * N * K, transcendentals=0,
        bytes_accessed=(M * K * x.dtype.itemsize + K * N * w.dtype.itemsize
                        + M * N * out_isz + N * 4))
    return pl.pallas_call(
        kernel,
        grid=(M // tm, N // tn, K // tk),
        in_specs=[
            pl.BlockSpec((tm, tk), lambda i, j, k: (i, k)),
            pl.BlockSpec((tk, tn), lambda i, j, k: (k, j)),
            pl.BlockSpec((1, tn), lambda i, j, k: (0, j)),
        ],
        out_specs=pl.BlockSpec((tm, tn), lambda i, j, k: (i, j)),
        out_shape=jax.ShapeDtypeStruct((M, N), out_dtype),
        scratch_shapes=[pltpu.VMEM((tm, tn), jnp.float32)],
        compiler_params=pltpu.CompilerParams(
            dimension_semantics=("parallel", "parallel", "arbitrary"),
            vmem_limit_bytes=_vmem_limit()),
        cost_estimate=cost,
    )(x, w, b.reshape(1, N))


def matmul_add_layer_norm(x, w, b, residual, gamma, beta, eps=1e-5,
                          tm=256, tk=256):
    """LayerNorm(x @ w + b + residual) over the feature dim, fused finalize.

    x:(M,K) [bf16], w:(K,N=d_model) bf16, residual:(M,N) f32 -> (M,N) f32."""
    M, K = x.shape
    _, N = w.shape
    tm = _pick_tile(M, tm, 16)
    tk = _pick_tile(K, tk, 128)
    kernel = functools.partial(_matmul_add_ln_kernel, eps=eps)
    cost = pl.CostEstimate(
        flops=2 * M * N * K + 10 * M * N, transcendentals=M,
        bytes_accessed=(M * K * x.dtype.itemsize + K * N * w.dtype.itemsize
                        + 2 * M * N * 4 + 3 * N * 4))
    return pl.pallas_call(
        kernel,
        grid=(M // tm, K // tk),
        in_specs=[
            pl.BlockSpec((tm, tk), lambda i, k: (i, k)),
            pl.BlockSpec((tk, N), lambda i, k: (k, 0)),
            pl.BlockSpec((1, N), lambda i, k: (0, 0)),
            pl.BlockSpec((tm, N), lambda i, k: (i, 0)),
            pl.BlockSpec((1, N), lambda i, k: (0, 0)),
            pl.BlockSpec((1, N), lambda i, k: (0, 0)),
        ],
        out_specs=pl.BlockSpec((tm, N), lambda i, k: (i, 0)),
        out_shape=jax.ShapeDtypeStruct((M, N), jnp.float32),
        scratch_shapes=[pltpu.VMEM((tm, N), jnp.float32)],
        compiler_params=pltpu.CompilerParams(
            dimension_semantics=("parallel", "arbitrary"),
            vmem_limit_bytes=_vmem_limit()),
        cost_estimate=cost,
    )(x, w, b.reshape(1, N), residual, gamma.reshape(1, N), beta.reshape(1, N))


def _col_or_slice(arr, col, d_model):
    """Select feature columns [col*D, (col+1)*D) of a fused projection output.

    If D is 128-lane aligned the selection is expressed purely through the
    BlockSpec index_map (zero HBM copy); otherwise fall back to an XLA slice."""
    if arr.shape[-1] == d_model:
        return arr, 0
    if d_model % 128 == 0:
        return arr, col
    return lax.slice_in_dim(arr, col * d_model, (col + 1) * d_model,
                            axis=-1), 0


def attention_core(q_arr, k_arr, v_arr, attn_mask_add, key_pad_add, *,
                   d_model, n_heads, q_col=0, k_col=0, v_col=0, tq=128):
    """Multi-head attention core.

    q_arr:(B,Sq,*) bf16, k_arr/v_arr:(B,Sk,*) bf16 hold the (possibly fused)
    projections; *_col block indices pick the D-wide feature slab without a copy.
    attn_mask_add:(Sq,Sk) f32 additive mask shared over batch;
    key_pad_add:(B,1,Sk) f32 additive key-padding rows.
    Returns (out:(B,Sq,D) bf16 lane-dense, scores:(B,H,Sq,Sk) f32)."""
    q_arr, q_col = _col_or_slice(q_arr, q_col, d_model)
    k_arr, k_col = _col_or_slice(k_arr, k_col, d_model)
    v_arr, v_col = _col_or_slice(v_arr, v_col, d_model)

    B, Sq, _ = q_arr.shape
    Sk = k_arr.shape[1]
    dk = d_model // n_heads
    scale = 1.0 / math.sqrt(dk)
    tq = _pick_tile(Sq, tq, 16)

    kernel = functools.partial(_attn_kernel, n_heads=n_heads, scale=scale)
    cost = pl.CostEstimate(
        flops=4 * B * Sq * Sk * d_model + 6 * B * n_heads * Sq * Sk,
        transcendentals=B * n_heads * Sq * Sk,
        bytes_accessed=(2 * (2 * B * Sq * d_model + 2 * B * Sk * d_model)
                        + 4 * (Sq * Sk + B * Sk + B * n_heads * Sq * Sk)))

    out, scores = pl.pallas_call(
        kernel,
        grid=(B, Sq // tq),
        in_specs=[
            pl.BlockSpec((1, tq, d_model), lambda b, qi, c=q_col: (b, qi, c)),
            pl.BlockSpec((1, Sk, d_model), lambda b, qi, c=k_col: (b, 0, c)),
            pl.BlockSpec((1, Sk, d_model), lambda b, qi, c=v_col: (b, 0, c)),
            pl.BlockSpec((tq, Sk), lambda b, qi: (qi, 0)),
            pl.BlockSpec((1, 1, Sk), lambda b, qi: (b, 0, 0)),
        ],
        out_specs=[
            pl.BlockSpec((1, tq, d_model), lambda b, qi: (b, qi, 0)),
            pl.BlockSpec((1, n_heads, tq, Sk), lambda b, qi: (b, 0, qi, 0)),
        ],
        out_shape=(
            jax.ShapeDtypeStruct((B, Sq, d_model), _MXU_DTYPE),
            jax.ShapeDtypeStruct((B, n_heads, Sq, Sk), jnp.float32),
        ),
        compiler_params=pltpu.CompilerParams(
            dimension_semantics=("parallel", "parallel"),
            vmem_limit_bytes=_vmem_limit()),
        cost_estimate=cost,
    )(q_arr, k_arr, v_arr, attn_mask_add, key_pad_add)
    return out, scores


# ----------------------------------------------------------------------------
# Model glue: decoder layer, decoder stack
# ----------------------------------------------------------------------------

def _prepare_layer(p):
    """Fuse Q|K|V (self) and K|V (cross) projections; pre-cast weights to bf16."""
    sa, ca = p["self_attn"], p["cross_attn"]
    q = dict(p)
    q["w_qkv"] = jnp.concatenate([sa["wq"], sa["wk"], sa["wv"]],
                                 axis=1).astype(_MXU_DTYPE)
    q["b_qkv"] = jnp.concatenate([sa["bq"], sa["bk"], sa["bv"]])
    q["w_kv_mem"] = jnp.concatenate([ca["wk"], ca["wv"]],
                                    axis=1).astype(_MXU_DTYPE)
    q["b_kv_mem"] = jnp.concatenate([ca["bk"], ca["bv"]])
    q["wq_cross"] = ca["wq"].astype(_MXU_DTYPE)
    q["wo_self"] = sa["wo"].astype(_MXU_DTYPE)
    q["wo_cross"] = ca["wo"].astype(_MXU_DTYPE)
    q["w1_c"] = p["w1"].astype(_MXU_DTYPE)
    q["w2_c"] = p["w2"].astype(_MXU_DTYPE)
    return q


def decoder_layer_forward(y, memory_c, p, self_masks, cross_masks, n_heads,
                          eps=1e-5):
    B, Sq, D = y.shape
    Sk = memory_c.shape[1]
    y2 = y.reshape(B * Sq, D)              # f32 residual stream
    mem2 = memory_c.reshape(B * Sk, D)     # bf16 memory (cast once per call)

    self_am, self_kp = self_masks
    cross_am, cross_kp = cross_masks

    # ---- self attention (fused QKV, bf16) + fused out-proj/add/LN ----
    qkv = matmul_bias(y2, p["w_qkv"], p["b_qkv"],
                      out_dtype=_MXU_DTYPE).reshape(B, Sq, 3 * D)
    attn, self_score = attention_core(qkv, qkv, qkv, self_am, self_kp,
                                      d_model=D, n_heads=n_heads,
                                      q_col=0, k_col=1, v_col=2)
    y2 = matmul_add_layer_norm(attn.reshape(B * Sq, D),
                               p["wo_self"], p["self_attn"]["bo"],
                               y2, p["ln1_g"], p["ln1_b"], eps)

    # ---- cross attention (fused KV from memory, bf16) + fused out-proj/add/LN
    q = matmul_bias(y2, p["wq_cross"], p["cross_attn"]["bq"],
                    out_dtype=_MXU_DTYPE).reshape(B, Sq, D)
    kv = matmul_bias(mem2, p["w_kv_mem"], p["b_kv_mem"],
                     out_dtype=_MXU_DTYPE).reshape(B, Sk, 2 * D)
    attn, cross_score = attention_core(q, kv, kv, cross_am, cross_kp,
                                       d_model=D, n_heads=n_heads,
                                       q_col=0, k_col=0, v_col=1)
    y2 = matmul_add_layer_norm(attn.reshape(B * Sq, D),
                               p["wo_cross"], p["cross_attn"]["bo"],
                               y2, p["ln2_g"], p["ln2_b"], eps)

    # ---- feed forward: w1+ReLU (bf16 hidden), then w2 fused with add+LN ----
    # TODO(synk): fully fuse w1->relu->w2 with an inner d_ff reduction so h
    #             never touches HBM; emitting h in bf16 already halves it.
    h = matmul_bias(y2, p["w1_c"], p["b1"], activation="relu",
                    out_dtype=_MXU_DTYPE)
    y2 = matmul_add_layer_norm(h, p["w2_c"], p["b2"], y2,
                               p["ln3_g"], p["ln3_b"], eps)

    return y2.reshape(B, Sq, D), self_score, cross_score


def _build_masks(B, Sq, Sk, key_padding_mask, atten_mask):
    """key_padding_mask: bool (B,Sk), True = padded key (masked out).
       atten_mask:       bool (Sq,Sk), True = attention blocked.
       Returns (attn_mask_add:(Sq,Sk) f32, key_pad_add:(B,1,Sk) f32) — the
       (B,1,Sq,Sk) broadcast is never materialized; combined inside the kernel."""
    if atten_mask is not None:
        am = jnp.where(atten_mask, -1e9, 0.0).astype(jnp.float32)
    else:
        am = jnp.zeros((Sq, Sk), jnp.float32)
    if key_padding_mask is not None:
        kp = jnp.where(key_padding_mask, -1e9, 0.0).astype(jnp.float32)[:, None, :]
    else:
        kp = jnp.zeros((B, 1, Sk), jnp.float32)
    return am, kp


def decoder_forward(y, memory, layer_params, n_heads,
                    key_padding_mask=None, self_atten_mask=None,
                    memory_key_padding_mask=None, cross_atten_mask=None):
    """Mirrors Decoder.forward: loop over layers, collect self/cross scores."""
    B, Sq, _ = y.shape
    Sk = memory.shape[1]
    self_masks = _build_masks(B, Sq, Sq, key_padding_mask, self_atten_mask)
    cross_masks = _build_masks(B, Sq, Sk, memory_key_padding_mask,
                               cross_atten_mask)
    memory_c = memory.astype(_MXU_DTYPE)   # cast once; reused by every layer

    self_scores, cross_scores = [], []
    for p in layer_params:
        p = _prepare_layer(p)
        y, ss, cs = decoder_layer_forward(y, memory_c, p, self_masks,
                                          cross_masks, n_heads)
        self_scores.append(ss)
        cross_scores.append(cs)
    return y, self_scores, cross_scores


# ----------------------------------------------------------------------------
# Deterministic parameter init
# ----------------------------------------------------------------------------

def _init_mha_params(key, d_model):
    ks = jax.random.split(key, 4)
    s = 1.0 / math.sqrt(d_model)
    return {
        "wq": jax.random.normal(ks[0], (d_model, d_model), jnp.float32) * s,
        "wk": jax.random.normal(ks[1], (d_model, d_model), jnp.float32) * s,
        "wv": jax.random.normal(ks[2], (d_model, d_model), jnp.float32) * s,
        "wo": jax.random.normal(ks[3], (d_model, d_model), jnp.float32) * s,
        "bq": jnp.zeros((d_model,), jnp.float32),
        "bk": jnp.zeros((d_model,), jnp.float32),
        "bv": jnp.zeros((d_model,), jnp.float32),
        "bo": jnp.zeros((d_model,), jnp.float32),
    }


def _init_decoder_layer_params(key, d_model, d_ff):
    k1, k2, k3, k4 = jax.random.split(key, 4)
    return {
        "self_attn": _init_mha_params(k1, d_model),
        "cross_attn": _init_mha_params(k2, d_model),
        "w1": jax.random.normal(k3, (d_model, d_ff), jnp.float32) / math.sqrt(d_model),
        "b1": jnp.zeros((d_ff,), jnp.float32),
        "w2": jax.random.normal(k4, (d_ff, d_model), jnp.float32) / math.sqrt(d_ff),
        "b2": jnp.zeros((d_model,), jnp.float32),
        "ln1_g": jnp.ones((d_model,), jnp.float32), "ln1_b": jnp.zeros((d_model,), jnp.float32),
        "ln2_g": jnp.ones((d_model,), jnp.float32), "ln2_b": jnp.zeros((d_model,), jnp.float32),
        "ln3_g": jnp.ones((d_model,), jnp.float32), "ln3_b": jnp.zeros((d_model,), jnp.float32),
    }


# ----------------------------------------------------------------------------
# Demo
# ----------------------------------------------------------------------------

if __name__ == "__main__":
    B, S_TGT, S_SRC = 2, 8, 8
    D_MODEL, N_HEADS, D_FF, N_LAYERS = 128, 4, 256, 2

    root = jax.random.PRNGKey(0)
    k_layer, k_y, k_mem = jax.random.split(root, 3)

    # copy.deepcopy(decoder_layer) => every layer starts with identical weights.
    one_layer = _init_decoder_layer_params(k_layer, D_MODEL, D_FF)
    layer_params = [one_layer for _ in range(N_LAYERS)]

    y = jax.random.normal(k_y, (B, S_TGT, D_MODEL), jnp.float32)
    memory = jax.random.normal(k_mem, (B, S_SRC, D_MODEL), jnp.float32)

    # causal self-attention mask (True = blocked) and a memory key-padding mask
    # (True = padded key); last two memory positions of batch 1 are padding.
    causal = jnp.triu(jnp.ones((S_TGT, S_TGT), dtype=bool), k=1)
    mem_pad = jnp.zeros((B, S_SRC), dtype=bool).at[1, -2:].set(True)

    run = jax.jit(functools.partial(
        decoder_forward,
        n_heads=N_HEADS,
        key_padding_mask=None,
        self_atten_mask=causal,
        memory_key_padding_mask=mem_pad,
        cross_atten_mask=None,
    ))
    out, self_scores, cross_scores = run(y, memory, layer_params)

    jax.block_until_ready(out)
    jax.block_until_ready(self_scores)
    jax.block_until_ready(cross_scores)

    assert out.shape == (B, S_TGT, D_MODEL)
    assert out.dtype == jnp.float32
    assert len(self_scores) == N_LAYERS and len(cross_scores) == N_LAYERS
    assert self_scores[0].shape == (B, N_HEADS, S_TGT, S_TGT)
    assert cross_scores[0].shape == (B, N_HEADS, S_TGT, S_SRC)
    print("KERNEL_OK")
</pallas_src>

<mosaic_0001>
module attributes {stable_mosaic.version = 11 : i64} {
  func.func @_matmul_bias_kernel(%arg0: i32, %arg1: i32, %arg2: i32, %arg3: memref<16x128xf32, #tpu.memory_space<vmem>>, %arg4: memref<128x128xbf16, #tpu.memory_space<vmem>>, %arg5: memref<1x128xf32, #tpu.memory_space<vmem>>, %arg6: memref<16x128xbf16, #tpu.memory_space<vmem>>, %arg7: memref<16x128xf32, #tpu.memory_space<vmem>>) attributes {dimension_semantics = [#tpu.dimension_semantics<parallel>, #tpu.dimension_semantics<parallel>, #tpu.dimension_semantics<arbitrary>], iteration_bounds = array<i64: 1, 3, 1>, scalar_prefetch = 0 : i64, scratch_operands = 1 : i64, tpu.core_type = #tpu.core_type<tc>, window_params = [{transform_indices = @transform_0, window_bounds = array<i64: 16, 128>}, {transform_indices = @transform_1, window_bounds = array<i64: 128, 128>}, {transform_indices = @transform_2, window_bounds = array<i64: 1, 128>}, {transform_indices = @transform_3, window_bounds = array<i64: 16, 128>}]} {
    %c0_i32 = arith.constant 0 : i32
    %0 = arith.cmpi eq, %arg2, %c0_i32 : i32
    %1 = arith.extui %0 : i1 to i32
    %c0_i32_0 = arith.constant 0 : i32
    %2 = arith.cmpi ne, %1, %c0_i32_0 : i32
    scf.if %2 {
      %cst_10 = arith.constant 0.000000e+00 : f32
      %13 = vector.broadcast %cst_10 : f32 to vector<16x128xf32>
      %c0_11 = arith.constant 0 : index
      %c0_12 = arith.constant 0 : index
      %14 = vector.load %arg7[%c0_11, %c0_12] : memref<16x128xf32, #tpu.memory_space<vmem>>, vector<16x128xf32>
      tpu.vector_store %arg7[%c0_11, %c0_12], %13 {strides = array<i32>} : memref<16x128xf32, #tpu.memory_space<vmem>>, vector<16x128xf32>,
    } else {
    }
    %c0 = arith.constant 0 : index
    %c0_1 = arith.constant 0 : index
    %3 = vector.load %arg7[%c0, %c0_1] : memref<16x128xf32, #tpu.memory_space<vmem>>, vector<16x128xf32>
    %c0_2 = arith.constant 0 : index
    %c0_3 = arith.constant 0 : index
    %4 = vector.load %arg3[%c0_2, %c0_3] : memref<16x128xf32, #tpu.memory_space<vmem>>, vector<16x128xf32>
    %5 = arith.truncf %4 : vector<16x128xf32> to vector<16x128xbf16>
    %c0_4 = arith.constant 0 : index
    %c0_5 = arith.constant 0 : index
    %6 = vector.load %arg4[%c0_4, %c0_5] : memref<128x128xbf16, #tpu.memory_space<vmem>>, vector<128x128xbf16>
    %cst = arith.constant dense<0.000000e+00> : vector<16x128xf32>
    %7 = tpu.matmul %5, %6, %cst {dimension_numbers = #tpu.dot_dimension_numbers<[1], [0], [0], [1], [0, 0, 1, 1], [], []>} : vector<16x128xbf16>, vector<128x128xbf16>, vector<16x128xf32> -> vector<16x128xf32>
    %8 = arith.addf %3, %7 : vector<16x128xf32>
    %c0_6 = arith.constant 0 : index
    %c0_7 = arith.constant 0 : index
    %9 = vector.load %arg7[%c0_6, %c0_7] : memref<16x128xf32, #tpu.memory_space<vmem>>, vector<16x128xf32>
    tpu.vector_store %arg7[%c0_6, %c0_7], %8 {strides = array<i32>} : memref<16x128xf32, #tpu.memory_space<vmem>>, vector<16x128xf32>,
    %c0_i32_8 = arith.constant 0 : i32
    %10 = arith.cmpi eq, %arg2, %c0_i32_8 : i32
    %11 = arith.extui %10 : i1 to i32
    %c0_i32_9 = arith.constant 0 : i32
    %12 = arith.cmpi ne, %11, %c0_i32_9 : i32
    scf.if %12 {
      %c0_10 = arith.constant 0 : index
      %c0_11 = arith.constant 0 : index
      %13 = vector.load %arg7[%c0_10, %c0_11] : memref<16x128xf32, #tpu.memory_space<vmem>>, vector<16x128xf32>
      %c0_12 = arith.constant 0 : index
      %c0_13 = arith.constant 0 : index
      %14 = vector.load %arg5[%c0_12, %c0_13] : memref<1x128xf32, #tpu.memory_space<vmem>>, vector<1x128xf32>
      %15 = vector.broadcast %14 : vector<1x128xf32> to vector<16x128xf32>
      %16 = arith.addf %13, %15 : vector<16x128xf32>
      %17 = arith.truncf %16 : vector<16x128xf32> to vector<16x128xbf16>
      %c0_14 = arith.constant 0 : index
      %c0_15 = arith.constant 0 : index
      %18 = vector.load %arg6[%c0_14, %c0_15] : memref<16x128xbf16, #tpu.memory_space<vmem>>, vector<16x128xbf16>
      tpu.vector_store %arg6[%c0_14, %c0_15], %17 {strides = array<i32>} : memref<16x128xbf16, #tpu.memory_space<vmem>>, vector<16x128xbf16>,
    } else {
    }
    return
  }
  func.func @transform_0(%arg0: i32, %arg1: i32, %arg2: i32) -> (i32, i32) {
    %c0_i32 = arith.constant 0 : i32
    return %arg0, %arg2 : i32, i32
  }
  func.func @transform_1(%arg0: i32, %arg1: i32, %arg2: i32) -> (i32, i32) {
    %c0_i32 = arith.constant 0 : i32
    return %arg2, %arg1 : i32, i32
  }
  func.func @transform_2(%arg0: i32, %arg1: i32, %arg2: i32) -> (i32, i32) {
    %c0_i32 = arith.constant 0 : i32
    %c0_i32_0 = arith.constant 0 : i32
    return %c0_i32, %arg1 : i32, i32
  }
  func.func @transform_3(%arg0: i32, %arg1: i32, %arg2: i32) -> (i32, i32) {
    %c0_i32 = arith.constant 0 : i32
    return %arg0, %arg1 : i32, i32
  }
}

module attributes {stable_mosaic.version = 11 : i64} {
  func.func @_attn_kernel(%arg0: i32, %arg1: i32, %arg2: memref<1x8x128xbf16, #tpu.memory_space<vmem>>, %arg3: memref<1x8x128xbf16, #tpu.memory_space<vmem>>, %arg4: memref<1x8x128xbf16, #tpu.memory_space<vmem>>, %arg5: memref<8x8xf32, #tpu.memory_space<vmem>>, %arg6: memref<1x1x8xf32, #tpu.memory_space<vmem>>, %arg7: memref<1x8x128xbf16, #tpu.memory_space<vmem>>, %arg8: memref<1x4x8x8xf32, #tpu.memory_space<vmem>>) attributes {dimension_semantics = [#tpu.dimension_semantics<parallel>, #tpu.dimension_semantics<parallel>], iteration_bounds = array<i64: 2, 1>, scalar_prefetch = 0 : i64, scratch_operands = 0 : i64, tpu.core_type = #tpu.core_type<tc>, window_params = [{transform_indices = @transform_0, window_bounds = array<i64: 1, 8, 128>}, {transform_indices = @transform_1, window_bounds = array<i64: 1, 8, 128>}, {transform_indices = @transform_2, window_bounds = array<i64: 1, 8, 128>}, {transform_indices = @transform_3, window_bounds = array<i64: 8, 8>}, {transform_indices = @transform_4, window_bounds = array<i64: 1, 1, 8>}, {transform_indices = @transform_5, window_bounds = array<i64: 1, 8, 128>}, {transform_indices = @transform_6, window_bounds = array<i64: 1, 4, 8, 8>}]} {
    %c0 = arith.constant 0 : index
    %c0_0 = arith.constant 0 : index
    %c0_1 = arith.constant 0 : index
    %0 = vector.load %arg2[%c0, %c0_0, %c0_1] : memref<1x8x128xbf16, #tpu.memory_space<vmem>>, vector<1x8x128xbf16>
    %1 = vector.shape_cast %0 : vector<1x8x128xbf16> to vector<8x128xbf16>
    %c0_2 = arith.constant 0 : index
    %c0_3 = arith.constant 0 : index
    %c0_4 = arith.constant 0 : index
    %2 = vector.load %arg3[%c0_2, %c0_3, %c0_4] : memref<1x8x128xbf16, #tpu.memory_space<vmem>>, vector<1x8x128xbf16>
    %3 = vector.shape_cast %2 : vector<1x8x128xbf16> to vector<8x128xbf16>
    %c0_5 = arith.constant 0 : index
    %c0_6 = arith.constant 0 : index
    %c0_7 = arith.constant 0 : index
    %4 = vector.load %arg4[%c0_5, %c0_6, %c0_7] : memref<1x8x128xbf16, #tpu.memory_space<vmem>>, vector<1x8x128xbf16>
    %5 = vector.shape_cast %4 : vector<1x8x128xbf16> to vector<8x128xbf16>
    %c0_8 = arith.constant 0 : index
    %c0_9 = arith.constant 0 : index
    %6 = vector.load %arg5[%c0_8, %c0_9] : memref<8x8xf32, #tpu.memory_space<vmem>>, vector<8x8xf32>
    %c0_10 = arith.constant 0 : index
    %c0_11 = arith.constant 0 : index
    %c0_12 = arith.constant 0 : index
    %7 = vector.load %arg6[%c0_10, %c0_11, %c0_12] : memref<1x1x8xf32, #tpu.memory_space<vmem>>, vector<1x1x8xf32>
    %8 = vector.shape_cast %7 : vector<1x1x8xf32> to vector<1x8xf32>
    %9 = vector.broadcast %8 : vector<1x8xf32> to vector<8x8xf32>
    %10 = arith.addf %6, %9 : vector<8x8xf32>
    %11 = vector.extract_strided_slice %1 {offsets = [0, 0], sizes = [8, 32], strides = [1, 1]} : vector<8x128xbf16> to vector<8x32xbf16>
    %cst = arith.constant 1.767580e-01 : bf16
    %12 = vector.broadcast %cst : bf16 to vector<8x32xbf16>
    %13 = arith.mulf %11, %12 : vector<8x32xbf16>
    %14 = vector.extract_strided_slice %3 {offsets = [0, 0], sizes = [8, 32], strides = [1, 1]} : vector<8x128xbf16> to vector<8x32xbf16>
    %15 = vector.extract_strided_slice %5 {offsets = [0, 0], sizes = [8, 32], strides = [1, 1]} : vector<8x128xbf16> to vector<8x32xbf16>
    %cst_13 = arith.constant dense<0.000000e+00> : vector<8x8xf32>
    %16 = tpu.matmul %13, %14, %cst_13 {dimension_numbers = #tpu.dot_dimension_numbers<[1], [1], [0], [0], [0, 0, 1, 0], [], []>} : vector<8x32xbf16>, vector<8x32xbf16>, vector<8x8xf32> -> vector<8x8xf32>
    %17 = arith.addf %16, %10 : vector<8x8xf32>
    %cst_14 = arith.constant dense<0xFF800000> : vector<8xf32>
    %18 = vector.multi_reduction <maximumf>, %17, %cst_14 [1] : vector<8x8xf32> to vector<8xf32>
    %19 = vector.shape_cast %18 : vector<8xf32> to vector<8x1xf32>
    %20 = vector.broadcast %19 : vector<8x1xf32> to vector<8x8xf32>
    %21 = arith.subf %17, %20 : vector<8x8xf32>
    %22 = math.exp %21 : vector<8x8xf32>
    %cst_15 = arith.constant dense<0.000000e+00> : vector<8xf32>
    %23 = vector.multi_reduction <add>, %22, %cst_15 [1] : vector<8x8xf32> to vector<8xf32>
    %24 = vector.shape_cast %23 : vector<8xf32> to vector<8x1xf32>
    %25 = vector.broadcast %24 : vector<8x1xf32> to vector<8x8xf32>
    %26 = arith.divf %22, %25 : vector<8x8xf32>
    %c0_16 = arith.constant 0 : index
    %c0_17 = arith.constant 0 : index
    %c0_18 = arith.constant 0 : index
    %c0_19 = arith.constant 0 : index
    %27 = vector.load %arg8[%c0_16, %c0_17, %c0_18, %c0_19] : memref<1x4x8x8xf32, #tpu.memory_space<vmem>>, vector<1x1x8x8xf32>
    %28 = vector.shape_cast %27 : vector<1x1x8x8xf32> to vector<8x8xf32>
    %29 = vector.shape_cast %26 : vector<8x8xf32> to vector<1x1x8x8xf32>
    tpu.vector_store %arg8[%c0_16, %c0_17, %c0_18, %c0_19], %29 {strides = array<i32>} : memref<1x4x8x8xf32, #tpu.memory_space<vmem>>, vector<1x1x8x8xf32>,
    %30 = arith.truncf %26 : vector<8x8xf32> to vector<8x8xbf16>
    %cst_20 = arith.constant dense<0.000000e+00> : vector<8x32xf32>
    %31 = tpu.matmul %30, %15, %cst_20 {dimension_numbers = #tpu.dot_dimension_numbers<[1], [0], [0], [1], [0, 0, 1, 1], [], []>} : vector<8x8xbf16>, vector<8x32xbf16>, vector<8x32xf32> -> vector<8x32xf32>
    %32 = vector.extract_strided_slice %1 {offsets = [0, 32], sizes = [8, 32], strides = [1, 1]} : vector<8x128xbf16> to vector<8x32xbf16>
    %cst_21 = arith.constant 1.767580e-01 : bf16
    %33 = vector.broadcast %cst_21 : bf16 to vector<8x32xbf16>
    %34 = arith.mulf %32, %33 : vector<8x32xbf16>
    %35 = vector.extract_strided_slice %3 {offsets = [0, 32], sizes = [8, 32], strides = [1, 1]} : vector<8x128xbf16> to vector<8x32xbf16>
    %36 = vector.extract_strided_slice %5 {offsets = [0, 32], sizes = [8, 32], strides = [1, 1]} : vector<8x128xbf16> to vector<8x32xbf16>
    %cst_22 = arith.constant dense<0.000000e+00> : vector<8x8xf32>
    %37 = tpu.matmul %34, %35, %cst_22 {dimension_numbers = #tpu.dot_dimension_numbers<[1], [1], [0], [0], [0, 0, 1, 0], [], []>} : vector<8x32xbf16>, vector<8x32xbf16>, vector<8x8xf32> -> vector<8x8xf32>
    %38 = arith.addf %37, %10 : vector<8x8xf32>
    %cst_23 = arith.constant dense<0xFF800000> : vector<8xf32>
    %39 = vector.multi_reduction <maximumf>, %38, %cst_23 [1] : vector<8x8xf32> to vector<8xf32>
    %40 = vector.shape_cast %39 : vector<8xf32> to vector<8x1xf32>
    %41 = vector.broadcast %40 : vector<8x1xf32> to vector<8x8xf32>
    %42 = arith.subf %38, %41 : vector<8x8xf32>
    %43 = math.exp %42 : vector<8x8xf32>
    %cst_24 = arith.constant dense<0.000000e+00> : vector<8xf32>
    %44 = vector.multi_reduction <add>, %43, %cst_24 [1] : vector<8x8xf32> to vector<8xf32>
    %45 = vector.shape_cast %44 : vector<8xf32> to vector<8x1xf32>
    %46 = vector.broadcast %45 : vector<8x1xf32> to vector<8x8xf32>
    %47 = arith.divf %43, %46 : vector<8x8xf32>
    %c0_25 = arith.constant 0 : index
    %c1 = arith.constant 1 : index
    %c0_26 = arith.constant 0 : index
    %c0_27 = arith.constant 0 : index
    %48 = vector.load %arg8[%c0_25, %c1, %c0_26, %c0_27] : memref<1x4x8x8xf32, #tpu.memory_space<vmem>>, vector<1x1x8x8xf32>
    %49 = vector.shape_cast %48 : vector<1x1x8x8xf32> to vector<8x8xf32>
    %50 = vector.shape_cast %47 : vector<8x8xf32> to vector<1x1x8x8xf32>
    tpu.vector_store %arg8[%c0_25, %c1, %c0_26, %c0_27], %50 {strides = array<i32>} : memref<1x4x8x8xf32, #tpu.memory_space<vmem>>, vector<1x1x8x8xf32>,
    %51 = arith.truncf %47 : vector<8x8xf32> to vector<8x8xbf16>
    %cst_28 = arith.constant dense<0.000000e+00> : vector<8x32xf32>
    %52 = tpu.matmul %51, %36, %cst_28 {dimension_numbers = #tpu.dot_dimension_numbers<[1], [0], [0], [1], [0, 0, 1, 1], [], []>} : vector<8x8xbf16>, vector<8x32xbf16>, vector<8x32xf32> -> vector<8x32xf32>
    %53 = vector.extract_strided_slice %1 {offsets = [0, 64], sizes = [8, 32], strides = [1, 1]} : vector<8x128xbf16> to vector<8x32xbf16>
    %cst_29 = arith.constant 1.767580e-01 : bf16
    %54 = vector.broadcast %cst_29 : bf16 to vector<8x32xbf16>
    %55 = arith.mulf %53, %54 : vector<8x32xbf16>
    %56 = vector.extract_strided_slice %3 {offsets = [0, 64], sizes = [8, 32], strides = [1, 1]} : vector<8x128xbf16> to vector<8x32xbf16>
    %57 = vector.extract_strided_slice %5 {offsets = [0, 64], sizes = [8, 32], strides = [1, 1]} : vector<8x128xbf16> to vector<8x32xbf16>
    %cst_30 = arith.constant dense<0.000000e+00> : vector<8x8xf32>
    %58 = tpu.matmul %55, %56, %cst_30 {dimension_numbers = #tpu.dot_dimension_numbers<[1], [1], [0], [0], [0, 0, 1, 0], [], []>} : vector<8x32xbf16>, vector<8x32xbf16>, vector<8x8xf32> -> vector<8x8xf32>
    %59 = arith.addf %58, %10 : vector<8x8xf32>
    %cst_31 = arith.constant dense<0xFF800000> : vector<8xf32>
    %60 = vector.multi_reduction <maximumf>, %59, %cst_31 [1] : vector<8x8xf32> to vector<8xf32>
    %61 = vector.shape_cast %60 : vector<8xf32> to vector<8x1xf32>
    %62 = vector.broadcast %61 : vector<8x1xf32> to vector<8x8xf32>
    %63 = arith.subf %59, %62 : vector<8x8xf32>
    %64 = math.exp %63 : vector<8x8xf32>
    %cst_32 = arith.constant dense<0.000000e+00> : vector<8xf32>
    %65 = vector.multi_reduction <add>, %64, %cst_32 [1] : vector<8x8xf32> to vector<8xf32>
    %66 = vector.shape_cast %65 : vector<8xf32> to vector<8x1xf32>
    %67 = vector.broadcast %66 : vector<8x1xf32> to vector<8x8xf32>
    %68 = arith.divf %64, %67 : vector<8x8xf32>
    %c0_33 = arith.constant 0 : index
    %c2 = arith.constant 2 : index
    %c0_34 = arith.constant 0 : index
    %c0_35 = arith.constant 0 : index
    %69 = vector.load %arg8[%c0_33, %c2, %c0_34, %c0_35] : memref<1x4x8x8xf32, #tpu.memory_space<vmem>>, vector<1x1x8x8xf32>
    %70 = vector.shape_cast %69 : vector<1x1x8x8xf32> to vector<8x8xf32>
    %71 = vector.shape_cast %68 : vector<8x8xf32> to vector<1x1x8x8xf32>
    tpu.vector_store %arg8[%c0_33, %c2, %c0_34, %c0_35], %71 {strides = array<i32>} : memref<1x4x8x8xf32, #tpu.memory_space<vmem>>, vector<1x1x8x8xf32>,
    %72 = arith.truncf %68 : vector<8x8xf32> to vector<8x8xbf16>
    %cst_36 = arith.constant dense<0.000000e+00> : vector<8x32xf32>
    %73 = tpu.matmul %72, %57, %cst_36 {dimension_numbers = #tpu.dot_dimension_numbers<[1], [0], [0], [1], [0, 0, 1, 1], [], []>} : vector<8x8xbf16>, vector<8x32xbf16>, vector<8x32xf32> -> vector<8x32xf32>
    %74 = vector.extract_strided_slice %1 {offsets = [0, 96], sizes = [8, 32], strides = [1, 1]} : vector<8x128xbf16> to vector<8x32xbf16>
    %cst_37 = arith.constant 1.767580e-01 : bf16
    %75 = vector.broadcast %cst_37 : bf16 to vector<8x32xbf16>
    %76 = arith.mulf %74, %75 : vector<8x32xbf16>
    %77 = vector.extract_strided_slice %3 {offsets = [0, 96], sizes = [8, 32], strides = [1, 1]} : vector<8x128xbf16> to vector<8x32xbf16>
    %78 = vector.extract_strided_slice %5 {offsets = [0, 96], sizes = [8, 32], strides = [1, 1]} : vector<8x128xbf16> to vector<8x32xbf16>
    %cst_38 = arith.constant dense<0.000000e+00> : vector<8x8xf32>
    %79 = tpu.matmul %76, %77, %cst_38 {dimension_numbers = #tpu.dot_dimension_numbers<[1], [1], [0], [0], [0, 0, 1, 0], [], []>} : vector<8x32xbf16>, vector<8x32xbf16>, vector<8x8xf32> -> vector<8x8xf32>
    %80 = arith.addf %79, %10 : vector<8x8xf32>
    %cst_39 = arith.constant dense<0xFF800000> : vector<8xf32>
    %81 = vector.multi_reduction <maximumf>, %80, %cst_39 [1] : vector<8x8xf32> to vector<8xf32>
    %82 = vector.shape_cast %81 : vector<8xf32> to vector<8x1xf32>
    %83 = vector.broadcast %82 : vector<8x1xf32> to vector<8x8xf32>
    %84 = arith.subf %80, %83 : vector<8x8xf32>
    %85 = math.exp %84 : vector<8x8xf32>
    %cst_40 = arith.constant dense<0.000000e+00> : vector<8xf32>
    %86 = vector.multi_reduction <add>, %85, %cst_40 [1] : vector<8x8xf32> to vector<8xf32>
    %87 = vector.shape_cast %86 : vector<8xf32> to vector<8x1xf32>
    %88 = vector.broadcast %87 : vector<8x1xf32> to vector<8x8xf32>
    %89 = arith.divf %85, %88 : vector<8x8xf32>
    %c0_41 = arith.constant 0 : index
    %c3 = arith.constant 3 : index
    %c0_42 = arith.constant 0 : index
    %c0_43 = arith.constant 0 : index
    %90 = vector.load %arg8[%c0_41, %c3, %c0_42, %c0_43] : memref<1x4x8x8xf32, #tpu.memory_space<vmem>>, vector<1x1x8x8xf32>
    %91 = vector.shape_cast %90 : vector<1x1x8x8xf32> to vector<8x8xf32>
    %92 = vector.shape_cast %89 : vector<8x8xf32> to vector<1x1x8x8xf32>
    tpu.vector_store %arg8[%c0_41, %c3, %c0_42, %c0_43], %92 {strides = array<i32>} : memref<1x4x8x8xf32, #tpu.memory_space<vmem>>, vector<1x1x8x8xf32>,
    %93 = arith.truncf %89 : vector<8x8xf32> to vector<8x8xbf16>
    %cst_44 = arith.constant dense<0.000000e+00> : vector<8x32xf32>
    %94 = tpu.matmul %93, %78, %cst_44 {dimension_numbers = #tpu.dot_dimension_numbers<[1], [0], [0], [1], [0, 0, 1, 1], [], []>} : vector<8x8xbf16>, vector<8x32xbf16>, vector<8x32xf32> -> vector<8x32xf32>
    %95 = tpu.concatenate %31, %52, %73, %94 in 1 : vector<8x32xf32>, vector<8x32xf32>, vector<8x32xf32>, vector<8x32xf32> -> vector<8x128xf32>
    %96 = arith.truncf %95 : vector<8x128xf32> to vector<8x128xbf16>
    %c0_45 = arith.constant 0 : index
    %c0_46 = arith.constant 0 : index
    %c0_47 = arith.constant 0 : index
    %97 = vector.load %arg7[%c0_45, %c0_46, %c0_47] : memref<1x8x128xbf16, #tpu.memory_space<vmem>>, vector<1x8x128xbf16>
    %98 = vector.shape_cast %97 : vector<1x8x128xbf16> to vector<8x128xbf16>
    %99 = vector.shape_cast %96 : vector<8x128xbf16> to vector<1x8x128xbf16>
    tpu.vector_store %arg7[%c0_45, %c0_46, %c0_47], %99 {strides = array<i32>} : memref<1x8x128xbf16, #tpu.memory_space<vmem>>, vector<1x8x128xbf16>,
    return
  }
  func.func @transform_0(%arg0: i32, %arg1: i32) -> (i32, i32, i32) {
    %c0_i32 = arith.constant 0 : i32
    %c0_i32_0 = arith.constant 0 : i32
    return %arg0, %arg1, %c0_i32 : i32, i32, i32
  }
  func.func @transform_1(%arg0: i32, %arg1: i32) -> (i32, i32, i32) {
    %c0_i32 = arith.constant 0 : i32
    %c1_i32 = arith.constant 1 : i32
    %c0_i32_0 = arith.constant 0 : i32
    return %arg0, %c0_i32, %c1_i32 : i32, i32, i32
  }
  func.func @transform_2(%arg0: i32, %arg1: i32) -> (i32, i32, i32) {
    %c0_i32 = arith.constant 0 : i32
    %c2_i32 = arith.constant 2 : i32
    %c0_i32_0 = arith.constant 0 : i32
    return %arg0, %c0_i32, %c2_i32 : i32, i32, i32
  }
  func.func @transform_3(%arg0: i32, %arg1: i32) -> (i32, i32) {
    %c0_i32 = arith.constant 0 : i32
    %c0_i32_0 = arith.constant 0 : i32
    return %arg1, %c0_i32 : i32, i32
  }
  func.func @transform_4(%arg0: i32, %arg1: i32) -> (i32, i32, i32) {
    %c0_i32 = arith.constant 0 : i32
    %c0_i32_0 = arith.constant 0 : i32
    %c0_i32_1 = arith.constant 0 : i32
    return %arg0, %c0_i32, %c0_i32_0 : i32, i32, i32
  }
  func.func @transform_5(%arg0: i32, %arg1: i32) -> (i32, i32, i32) {
    %c0_i32 = arith.constant 0 : i32
    %c0_i32_0 = arith.constant 0 : i32
    return %arg0, %arg1, %c0_i32 : i32, i32, i32
  }
  func.func @transform_6(%arg0: i32, %arg1: i32) -> (i32, i32, i32, i32) {
    %c0_i32 = arith.constant 0 : i32
    %c0_i32_0 = arith.constant 0 : i32
    %c0_i32_1 = arith.constant 0 : i32
    return %arg0, %c0_i32, %arg1, %c0_i32_0 : i32, i32, i32, i32
  }
}

module attributes {stable_mosaic.version = 11 : i64} {
  func.func @_matmul_bias_kernel(%arg0: i32, %arg1: i32, %arg2: i32, %arg3: memref<16x128xf32, #tpu.memory_space<vmem>>, %arg4: memref<128x128xbf16, #tpu.memory_space<vmem>>, %arg5: memref<1x128xf32, #tpu.memory_space<vmem>>, %arg6: memref<16x128xbf16, #tpu.memory_space<vmem>>, %arg7: memref<16x128xf32, #tpu.memory_space<vmem>>) attributes {dimension_semantics = [#tpu.dimension_semantics<parallel>, #tpu.dimension_semantics<parallel>, #tpu.dimension_semantics<arbitrary>], iteration_bounds = array<i64: 1, 1, 1>, scalar_prefetch = 0 : i64, scratch_operands = 1 : i64, tpu.core_type = #tpu.core_type<tc>, window_params = [{transform_indices = @transform_0, window_bounds = array<i64: 16, 128>}, {transform_indices = @transform_1, window_bounds = array<i64: 128, 128>}, {transform_indices = @transform_2, window_bounds = array<i64: 1, 128>}, {transform_indices = @transform_3, window_bounds = array<i64: 16, 128>}]} {
    %c0_i32 = arith.constant 0 : i32
    %0 = arith.cmpi eq, %arg2, %c0_i32 : i32
    %1 = arith.extui %0 : i1 to i32
    %c0_i32_0 = arith.constant 0 : i32
    %2 = arith.cmpi ne, %1, %c0_i32_0 : i32
    scf.if %2 {
      %cst_10 = arith.constant 0.000000e+00 : f32
      %13 = vector.broadcast %cst_10 : f32 to vector<16x128xf32>
      %c0_11 = arith.constant 0 : index
      %c0_12 = arith.constant 0 : index
      %14 = vector.load %arg7[%c0_11, %c0_12] : memref<16x128xf32, #tpu.memory_space<vmem>>, vector<16x128xf32>
      tpu.vector_store %arg7[%c0_11, %c0_12], %13 {strides = array<i32>} : memref<16x128xf32, #tpu.memory_space<vmem>>, vector<16x128xf32>,
    } else {
    }
    %c0 = arith.constant 0 : index
    %c0_1 = arith.constant 0 : index
    %3 = vector.load %arg7[%c0, %c0_1] : memref<16x128xf32, #tpu.memory_space<vmem>>, vector<16x128xf32>
    %c0_2 = arith.constant 0 : index
    %c0_3 = arith.constant 0 : index
    %4 = vector.load %arg3[%c0_2, %c0_3] : memref<16x128xf32, #tpu.memory_space<vmem>>, vector<16x128xf32>
    %5 = arith.truncf %4 : vector<16x128xf32> to vector<16x128xbf16>
    %c0_4 = arith.constant 0 : index
    %c0_5 = arith.constant 0 : index
    %6 = vector.load %arg4[%c0_4, %c0_5] : memref<128x128xbf16, #tpu.memory_space<vmem>>, vector<128x128xbf16>
    %cst = arith.constant dense<0.000000e+00> : vector<16x128xf32>
    %7 = tpu.matmul %5, %6, %cst {dimension_numbers = #tpu.dot_dimension_numbers<[1], [0], [0], [1], [0, 0, 1, 1], [], []>} : vector<16x128xbf16>, vector<128x128xbf16>, vector<16x128xf32> -> vector<16x128xf32>
    %8 = arith.addf %3, %7 : vector<16x128xf32>
    %c0_6 = arith.constant 0 : index
    %c0_7 = arith.constant 0 : index
    %9 = vector.load %arg7[%c0_6, %c0_7] : memref<16x128xf32, #tpu.memory_space<vmem>>, vector<16x128xf32>
    tpu.vector_store %arg7[%c0_6, %c0_7], %8 {strides = array<i32>} : memref<16x128xf32, #tpu.memory_space<vmem>>, vector<16x128xf32>,
    %c0_i32_8 = arith.constant 0 : i32
    %10 = arith.cmpi eq, %arg2, %c0_i32_8 : i32
    %11 = arith.extui %10 : i1 to i32
    %c0_i32_9 = arith.constant 0 : i32
    %12 = arith.cmpi ne, %11, %c0_i32_9 : i32
    scf.if %12 {
      %c0_10 = arith.constant 0 : index
      %c0_11 = arith.constant 0 : index
      %13 = vector.load %arg7[%c0_10, %c0_11] : memref<16x128xf32, #tpu.memory_space<vmem>>, vector<16x128xf32>
      %c0_12 = arith.constant 0 : index
      %c0_13 = arith.constant 0 : index
      %14 = vector.load %arg5[%c0_12, %c0_13] : memref<1x128xf32, #tpu.memory_space<vmem>>, vector<1x128xf32>
      %15 = vector.broadcast %14 : vector<1x128xf32> to vector<16x128xf32>
      %16 = arith.addf %13, %15 : vector<16x128xf32>
      %17 = arith.truncf %16 : vector<16x128xf32> to vector<16x128xbf16>
      %c0_14 = arith.constant 0 : index
      %c0_15 = arith.constant 0 : index
      %18 = vector.load %arg6[%c0_14, %c0_15] : memref<16x128xbf16, #tpu.memory_space<vmem>>, vector<16x128xbf16>
      tpu.vector_store %arg6[%c0_14, %c0_15], %17 {strides = array<i32>} : memref<16x128xbf16, #tpu.memory_space<vmem>>, vector<16x128xbf16>,
    } else {
    }
    return
  }
  func.func @transform_0(%arg0: i32, %arg1: i32, %arg2: i32) -> (i32, i32) {
    %c0_i32 = arith.constant 0 : i32
    return %arg0, %arg2 : i32, i32
  }
  func.func @transform_1(%arg0: i32, %arg1: i32, %arg2: i32) -> (i32, i32) {
    %c0_i32 = arith.constant 0 : i32
    return %arg2, %arg1 : i32, i32
  }
  func.func @transform_2(%arg0: i32, %arg1: i32, %arg2: i32) -> (i32, i32) {
    %c0_i32 = arith.constant 0 : i32
    %c0_i32_0 = arith.constant 0 : i32
    return %c0_i32, %arg1 : i32, i32
  }
  func.func @transform_3(%arg0: i32, %arg1: i32, %arg2: i32) -> (i32, i32) {
    %c0_i32 = arith.constant 0 : i32
    return %arg0, %arg1 : i32, i32
  }
}

module attributes {stable_mosaic.version = 11 : i64} {
  func.func @_matmul_add_ln_kernel(%arg0: i32, %arg1: i32, %arg2: memref<16x128xbf16, #tpu.memory_space<vmem>>, %arg3: memref<128x128xbf16, #tpu.memory_space<vmem>>, %arg4: memref<1x128xf32, #tpu.memory_space<vmem>>, %arg5: memref<16x128xf32, #tpu.memory_space<vmem>>, %arg6: memref<1x128xf32, #tpu.memory_space<vmem>>, %arg7: memref<1x128xf32, #tpu.memory_space<vmem>>, %arg8: memref<16x128xf32, #tpu.memory_space<vmem>>, %arg9: memref<16x128xf32, #tpu.memory_space<vmem>>) attributes {dimension_semantics = [#tpu.dimension_semantics<parallel>, #tpu.dimension_semantics<arbitrary>], iteration_bounds = array<i64: 1, 1>, scalar_prefetch = 0 : i64, scratch_operands = 1 : i64, tpu.core_type = #tpu.core_type<tc>, window_params = [{transform_indices = @transform_0, window_bounds = array<i64: 16, 128>}, {transform_indices = @transform_1, window_bounds = array<i64: 128, 128>}, {pipeline_mode = #tpu.pipeline_mode<synchronous>, transform_indices = @transform_2, window_bounds = array<i64: 1, 128>}, {transform_indices = @transform_3, window_bounds = array<i64: 16, 128>}, {pipeline_mode = #tpu.pipeline_mode<synchronous>, transform_indices = @transform_4, window_bounds = array<i64: 1, 128>}, {pipeline_mode = #tpu.pipeline_mode<synchronous>, transform_indices = @transform_5, window_bounds = array<i64: 1, 128>}, {transform_indices = @transform_6, window_bounds = array<i64: 16, 128>}]} {
    %c0_i32 = arith.constant 0 : i32
    %0 = arith.cmpi eq, %arg1, %c0_i32 : i32
    %1 = arith.extui %0 : i1 to i32
    %c0_i32_0 = arith.constant 0 : i32
    %2 = arith.cmpi ne, %1, %c0_i32_0 : i32
    scf.if %2 {
      %cst_10 = arith.constant 0.000000e+00 : f32
      %12 = vector.broadcast %cst_10 : f32 to vector<16x128xf32>
      %c0_11 = arith.constant 0 : index
      %c0_12 = arith.constant 0 : index
      %13 = vector.load %arg9[%c0_11, %c0_12] : memref<16x128xf32, #tpu.memory_space<vmem>>, vector<16x128xf32>
      tpu.vector_store %arg9[%c0_11, %c0_12], %12 {strides = array<i32>} : memref<16x128xf32, #tpu.memory_space<vmem>>, vector<16x128xf32>,
    } else {
    }
    %c0 = arith.constant 0 : index
    %c0_1 = arith.constant 0 : index
    %3 = vector.load %arg9[%c0, %c0_1] : memref<16x128xf32, #tpu.memory_space<vmem>>, vector<16x128xf32>
    %c0_2 = arith.constant 0 : index
    %c0_3 = arith.constant 0 : index
    %4 = vector.load %arg2[%c0_2, %c0_3] : memref<16x128xbf16, #tpu.memory_space<vmem>>, vector<16x128xbf16>
    %c0_4 = arith.constant 0 : index
    %c0_5 = arith.constant 0 : index
    %5 = vector.load %arg3[%c0_4, %c0_5] : memref<128x128xbf16, #tpu.memory_space<vmem>>, vector<128x128xbf16>
    %cst = arith.constant dense<0.000000e+00> : vector<16x128xf32>
    %6 = tpu.matmul %4, %5, %cst {dimension_numbers = #tpu.dot_dimension_numbers<[1], [0], [0], [1], [0, 0, 1, 1], [], []>} : vector<16x128xbf16>, vector<128x128xbf16>, vector<16x128xf32> -> vector<16x128xf32>
    %7 = arith.addf %3, %6 : vector<16x128xf32>
    %c0_6 = arith.constant 0 : index
    %c0_7 = arith.constant 0 : index
    %8 = vector.load %arg9[%c0_6, %c0_7] : memref<16x128xf32, #tpu.memory_space<vmem>>, vector<16x128xf32>
    tpu.vector_store %arg9[%c0_6, %c0_7], %7 {strides = array<i32>} : memref<16x128xf32, #tpu.memory_space<vmem>>, vector<16x128xf32>,
    %c0_i32_8 = arith.constant 0 : i32
    %9 = arith.cmpi eq, %arg1, %c0_i32_8 : i32
    %10 = arith.extui %9 : i1 to i32
    %c0_i32_9 = arith.constant 0 : i32
    %11 = arith.cmpi ne, %10, %c0_i32_9 : i32
    scf.if %11 {
      %c0_10 = arith.constant 0 : index
      %c0_11 = arith.constant 0 : index
      %12 = vector.load %arg9[%c0_10, %c0_11] : memref<16x128xf32, #tpu.memory_space<vmem>>, vector<16x128xf32>
      %c0_12 = arith.constant 0 : index
      %c0_13 = arith.constant 0 : index
      %13 = vector.load %arg4[%c0_12, %c0_13] : memref<1x128xf32, #tpu.memory_space<vmem>>, vector<1x128xf32>
      %14 = vector.broadcast %13 : vector<1x128xf32> to vector<16x128xf32>
      %15 = arith.addf %12, %14 : vector<16x128xf32>
      %c0_14 = arith.constant 0 : index
      %c0_15 = arith.constant 0 : index
      %16 = vector.load %arg5[%c0_14, %c0_15] : memref<16x128xf32, #tpu.memory_space<vmem>>, vector<16x128xf32>
      %17 = arith.addf %15, %16 : vector<16x128xf32>
      %cst_16 = arith.constant dense<0.000000e+00> : vector<16xf32>
      %18 = vector.multi_reduction <add>, %17, %cst_16 [1] : vector<16x128xf32> to vector<16xf32>
      %19 = vector.shape_cast %18 : vector<16xf32> to vector<16x1xf32>
      %cst_17 = arith.constant 1.280000e+02 : f32
      %20 = vector.broadcast %cst_17 : f32 to vector<16x1xf32>
      %21 = arith.divf %19, %20 : vector<16x1xf32>
      %22 = vector.broadcast %21 : vector<16x1xf32> to vector<16x128xf32>
      %23 = arith.subf %17, %22 : vector<16x128xf32>
      %24 = arith.mulf %23, %23 : vector<16x128xf32>
      %cst_18 = arith.constant dense<0.000000e+00> : vector<16xf32>
      %25 = vector.multi_reduction <add>, %24, %cst_18 [1] : vector<16x128xf32> to vector<16xf32>
      %26 = vector.shape_cast %25 : vector<16xf32> to vector<16x1xf32>
      %cst_19 = arith.constant 1.280000e+02 : f32
      %27 = vector.broadcast %cst_19 : f32 to vector<16x1xf32>
      %28 = arith.divf %26, %27 : vector<16x1xf32>
      %29 = vector.broadcast %21 : vector<16x1xf32> to vector<16x128xf32>
      %30 = arith.subf %17, %29 : vector<16x128xf32>
      %cst_20 = arith.constant 9.99999974E-6 : f32
      %31 = vector.broadcast %cst_20 : f32 to vector<16x1xf32>
      %32 = arith.addf %28, %31 : vector<16x1xf32>
      %33 = math.rsqrt %32 : vector<16x1xf32>
      %34 = vector.broadcast %33 : vector<16x1xf32> to vector<16x128xf32>
      %35 = arith.mulf %30, %34 : vector<16x128xf32>
      %c0_21 = arith.constant 0 : index
      %c0_22 = arith.constant 0 : index
      %36 = vector.load %arg6[%c0_21, %c0_22] : memref<1x128xf32, #tpu.memory_space<vmem>>, vector<1x128xf32>
      %37 = vector.broadcast %36 : vector<1x128xf32> to vector<16x128xf32>
      %38 = arith.mulf %35, %37 : vector<16x128xf32>
      %c0_23 = arith.constant 0 : index
      %c0_24 = arith.constant 0 : index
      %39 = vector.load %arg7[%c0_23, %c0_24] : memref<1x128xf32, #tpu.memory_space<vmem>>, vector<1x128xf32>
      %40 = vector.broadcast %39 : vector<1x128xf32> to vector<16x128xf32>
      %41 = arith.addf %38, %40 : vector<16x128xf32>
      %c0_25 = arith.constant 0 : index
      %c0_26 = arith.constant 0 : index
      %42 = vector.load %arg8[%c0_25, %c0_26] : memref<16x128xf32, #tpu.memory_space<vmem>>, vector<16x128xf32>
      tpu.vector_store %arg8[%c0_25, %c0_26], %41 {strides = array<i32>} : memref<16x128xf32, #tpu.memory_space<vmem>>, vector<16x128xf32>,
    } else {
    }
    return
  }
  func.func @transform_0(%arg0: i32, %arg1: i32) -> (i32, i32) {
    %c0_i32 = arith.constant 0 : i32
    return %arg0, %arg1 : i32, i32
  }
  func.func @transform_1(%arg0: i32, %arg1: i32) -> (i32, i32) {
    %c0_i32 = arith.constant 0 : i32
    %c0_i32_0 = arith.constant 0 : i32
    return %arg1, %c0_i32 : i32, i32
  }
  func.func @transform_2(%arg0: i32, %arg1: i32) -> (i32, i32) {
    %c0_i32 = arith.constant 0 : i32
    %c0_i32_0 = arith.constant 0 : i32
    %c0_i32_1 = arith.constant 0 : i32
    return %c0_i32, %c0_i32_0 : i32, i32
  }
  func.func @transform_3(%arg0: i32, %arg1: i32) -> (i32, i32) {
    %c0_i32 = arith.constant 0 : i32
    %c0_i32_0 = arith.constant 0 : i32
    return %arg0, %c0_i32 : i32, i32
  }
  func.func @transform_4(%arg0: i32, %arg1: i32) -> (i32, i32) {
    %c0_i32 = arith.constant 0 : i32
    %c0_i32_0 = arith.constant 0 : i32
    %c0_i32_1 = arith.constant 0 : i32
    return %c0_i32, %c0_i32_0 : i32, i32
  }
  func.func @transform_5(%arg0: i32, %arg1: i32) -> (i32, i32) {
    %c0_i32 = arith.constant 0 : i32
    %c0_i32_0 = arith.constant 0 : i32
    %c0_i32_1 = arith.constant 0 : i32
    return %c0_i32, %c0_i32_0 : i32, i32
  }
  func.func @transform_6(%arg0: i32, %arg1: i32) -> (i32, i32) {
    %c0_i32 = arith.constant 0 : i32
    %c0_i32_0 = arith.constant 0 : i32
    return %arg0, %c0_i32 : i32, i32
  }
}

module attributes {stable_mosaic.version = 11 : i64} {
  func.func @_matmul_bias_kernel(%arg0: i32, %arg1: i32, %arg2: i32, %arg3: memref<16x128xbf16, #tpu.memory_space<vmem>>, %arg4: memref<128x256xbf16, #tpu.memory_space<vmem>>, %arg5: memref<1x256xf32, #tpu.memory_space<vmem>>, %arg6: memref<16x256xbf16, #tpu.memory_space<vmem>>, %arg7: memref<16x256xf32, #tpu.memory_space<vmem>>) attributes {dimension_semantics = [#tpu.dimension_semantics<parallel>, #tpu.dimension_semantics<parallel>, #tpu.dimension_semantics<arbitrary>], iteration_bounds = array<i64: 1, 1, 1>, scalar_prefetch = 0 : i64, scratch_operands = 1 : i64, tpu.core_type = #tpu.core_type<tc>, window_params = [{transform_indices = @transform_0, window_bounds = array<i64: 16, 128>}, {transform_indices = @transform_1, window_bounds = array<i64: 128, 256>}, {transform_indices = @transform_2, window_bounds = array<i64: 1, 256>}, {transform_indices = @transform_3, window_bounds = array<i64: 16, 256>}]} {
    %c0_i32 = arith.constant 0 : i32
    %0 = arith.cmpi eq, %arg2, %c0_i32 : i32
    %1 = arith.extui %0 : i1 to i32
    %c0_i32_0 = arith.constant 0 : i32
    %2 = arith.cmpi ne, %1, %c0_i32_0 : i32
    scf.if %2 {
      %cst_10 = arith.constant 0.000000e+00 : f32
      %12 = vector.broadcast %cst_10 : f32 to vector<16x256xf32>
      %c0_11 = arith.constant 0 : index
      %c0_12 = arith.constant 0 : index
      %13 = vector.load %arg7[%c0_11, %c0_12] : memref<16x256xf32, #tpu.memory_space<vmem>>, vector<16x256xf32>
      tpu.vector_store %arg7[%c0_11, %c0_12], %12 {strides = array<i32>} : memref<16x256xf32, #tpu.memory_space<vmem>>, vector<16x256xf32>,
    } else {
    }
    %c0 = arith.constant 0 : index
    %c0_1 = arith.constant 0 : index
    %3 = vector.load %arg7[%c0, %c0_1] : memref<16x256xf32, #tpu.memory_space<vmem>>, vector<16x256xf32>
    %c0_2 = arith.constant 0 : index
    %c0_3 = arith.constant 0 : index
    %4 = vector.load %arg3[%c0_2, %c0_3] : memref<16x128xbf16, #tpu.memory_space<vmem>>, vector<16x128xbf16>
    %c0_4 = arith.constant 0 : index
    %c0_5 = arith.constant 0 : index
    %5 = vector.load %arg4[%c0_4, %c0_5] : memref<128x256xbf16, #tpu.memory_space<vmem>>, vector<128x256xbf16>
    %cst = arith.constant dense<0.000000e+00> : vector<16x256xf32>
    %6 = tpu.matmul %4, %5, %cst {dimension_numbers = #tpu.dot_dimension_numbers<[1], [0], [0], [1], [0, 0, 1, 1], [], []>} : vector<16x128xbf16>, vector<128x256xbf16>, vector<16x256xf32> -> vector<16x256xf32>
    %7 = arith.addf %3, %6 : vector<16x256xf32>
    %c0_6 = arith.constant 0 : index
    %c0_7 = arith.constant 0 : index
    %8 = vector.load %arg7[%c0_6, %c0_7] : memref<16x256xf32, #tpu.memory_space<vmem>>, vector<16x256xf32>
    tpu.vector_store %arg7[%c0_6, %c0_7], %7 {strides = array<i32>} : memref<16x256xf32, #tpu.memory_space<vmem>>, vector<16x256xf32>,
    %c0_i32_8 = arith.constant 0 : i32
    %9 = arith.cmpi eq, %arg2, %c0_i32_8 : i32
    %10 = arith.extui %9 : i1 to i32
    %c0_i32_9 = arith.constant 0 : i32
    %11 = arith.cmpi ne, %10, %c0_i32_9 : i32
    scf.if %11 {
      %c0_10 = arith.constant 0 : index
      %c0_11 = arith.constant 0 : index
      %12 = vector.load %arg7[%c0_10, %c0_11] : memref<16x256xf32, #tpu.memory_space<vmem>>, vector<16x256xf32>
      %c0_12 = arith.constant 0 : index
      %c0_13 = arith.constant 0 : index
      %13 = vector.load %arg5[%c0_12, %c0_13] : memref<1x256xf32, #tpu.memory_space<vmem>>, vector<1x256xf32>
      %14 = vector.broadcast %13 : vector<1x256xf32> to vector<16x256xf32>
      %15 = arith.addf %12, %14 : vector<16x256xf32>
      %16 = arith.truncf %15 : vector<16x256xf32> to vector<16x256xbf16>
      %c0_14 = arith.constant 0 : index
      %c0_15 = arith.constant 0 : index
      %17 = vector.load %arg6[%c0_14, %c0_15] : memref<16x256xbf16, #tpu.memory_space<vmem>>, vector<16x256xbf16>
      tpu.vector_store %arg6[%c0_14, %c0_15], %16 {strides = array<i32>} : memref<16x256xbf16, #tpu.memory_space<vmem>>, vector<16x256xbf16>,
    } else {
    }
    return
  }
  func.func @transform_0(%arg0: i32, %arg1: i32, %arg2: i32) -> (i32, i32) {
    %c0_i32 = arith.constant 0 : i32
    return %arg0, %arg2 : i32, i32
  }
  func.func @transform_1(%arg0: i32, %arg1: i32, %arg2: i32) -> (i32, i32) {
    %c0_i32 = arith.constant 0 : i32
    return %arg2, %arg1 : i32, i32
  }
  func.func @transform_2(%arg0: i32, %arg1: i32, %arg2: i32) -> (i32, i32) {
    %c0_i32 = arith.constant 0 : i32
    %c0_i32_0 = arith.constant 0 : i32
    return %c0_i32, %arg1 : i32, i32
  }
  func.func @transform_3(%arg0: i32, %arg1: i32, %arg2: i32) -> (i32, i32) {
    %c0_i32 = arith.constant 0 : i32
    return %arg0, %arg1 : i32, i32
  }
}

module attributes {stable_mosaic.version = 11 : i64} {
  func.func @_attn_kernel(%arg0: i32, %arg1: i32, %arg2: memref<1x8x128xbf16, #tpu.memory_space<vmem>>, %arg3: memref<1x8x128xbf16, #tpu.memory_space<vmem>>, %arg4: memref<1x8x128xbf16, #tpu.memory_space<vmem>>, %arg5: memref<8x8xf32, #tpu.memory_space<vmem>>, %arg6: memref<1x1x8xf32, #tpu.memory_space<vmem>>, %arg7: memref<1x8x128xbf16, #tpu.memory_space<vmem>>, %arg8: memref<1x4x8x8xf32, #tpu.memory_space<vmem>>) attributes {dimension_semantics = [#tpu.dimension_semantics<parallel>, #tpu.dimension_semantics<parallel>], iteration_bounds = array<i64: 2, 1>, scalar_prefetch = 0 : i64, scratch_operands = 0 : i64, tpu.core_type = #tpu.core_type<tc>, window_params = [{transform_indices = @transform_0, window_bounds = array<i64: 1, 8, 128>}, {transform_indices = @transform_1, window_bounds = array<i64: 1, 8, 128>}, {transform_indices = @transform_2, window_bounds = array<i64: 1, 8, 128>}, {transform_indices = @transform_3, window_bounds = array<i64: 8, 8>}, {transform_indices = @transform_4, window_bounds = array<i64: 1, 1, 8>}, {transform_indices = @transform_5, window_bounds = array<i64: 1, 8, 128>}, {transform_indices = @transform_6, window_bounds = array<i64: 1, 4, 8, 8>}]} {
    %c0 = arith.constant 0 : index
    %c0_0 = arith.constant 0 : index
    %c0_1 = arith.constant 0 : index
    %0 = vector.load %arg2[%c0, %c0_0, %c0_1] : memref<1x8x128xbf16, #tpu.memory_space<vmem>>, vector<1x8x128xbf16>
    %1 = vector.shape_cast %0 : vector<1x8x128xbf16> to vector<8x128xbf16>
    %c0_2 = arith.constant 0 : index
    %c0_3 = arith.constant 0 : index
    %c0_4 = arith.constant 0 : index
    %2 = vector.load %arg3[%c0_2, %c0_3, %c0_4] : memref<1x8x128xbf16, #tpu.memory_space<vmem>>, vector<1x8x128xbf16>
    %3 = vector.shape_cast %2 : vector<1x8x128xbf16> to vector<8x128xbf16>
    %c0_5 = arith.constant 0 : index
    %c0_6 = arith.constant 0 : index
    %c0_7 = arith.constant 0 : index
    %4 = vector.load %arg4[%c0_5, %c0_6, %c0_7] : memref<1x8x128xbf16, #tpu.memory_space<vmem>>, vector<1x8x128xbf16>
    %5 = vector.shape_cast %4 : vector<1x8x128xbf16> to vector<8x128xbf16>
    %c0_8 = arith.constant 0 : index
    %c0_9 = arith.constant 0 : index
    %6 = vector.load %arg5[%c0_8, %c0_9] : memref<8x8xf32, #tpu.memory_space<vmem>>, vector<8x8xf32>
    %c0_10 = arith.constant 0 : index
    %c0_11 = arith.constant 0 : index
    %c0_12 = arith.constant 0 : index
    %7 = vector.load %arg6[%c0_10, %c0_11, %c0_12] : memref<1x1x8xf32, #tpu.memory_space<vmem>>, vector<1x1x8xf32>
    %8 = vector.shape_cast %7 : vector<1x1x8xf32> to vector<1x8xf32>
    %9 = vector.broadcast %8 : vector<1x8xf32> to vector<8x8xf32>
    %10 = arith.addf %6, %9 : vector<8x8xf32>
    %11 = vector.extract_strided_slice %1 {offsets = [0, 0], sizes = [8, 32], strides = [1, 1]} : vector<8x128xbf16> to vector<8x32xbf16>
    %cst = arith.constant 1.767580e-01 : bf16
    %12 = vector.broadcast %cst : bf16 to vector<8x32xbf16>
    %13 = arith.mulf %11, %12 : vector<8x32xbf16>
    %14 = vector.extract_strided_slice %3 {offsets = [0, 0], sizes = [8, 32], strides = [1, 1]} : vector<8x128xbf16> to vector<8x32xbf16>
    %15 = vector.extract_strided_slice %5 {offsets = [0, 0], sizes = [8, 32], strides = [1, 1]} : vector<8x128xbf16> to vector<8x32xbf16>
    %cst_13 = arith.constant dense<0.000000e+00> : vector<8x8xf32>
    %16 = tpu.matmul %13, %14, %cst_13 {dimension_numbers = #tpu.dot_dimension_numbers<[1], [1], [0], [0], [0, 0, 1, 0], [], []>} : vector<8x32xbf16>, vector<8x32xbf16>, vector<8x8xf32> -> vector<8x8xf32>
    %17 = arith.addf %16, %10 : vector<8x8xf32>
    %cst_14 = arith.constant dense<0xFF800000> : vector<8xf32>
    %18 = vector.multi_reduction <maximumf>, %17, %cst_14 [1] : vector<8x8xf32> to vector<8xf32>
    %19 = vector.shape_cast %18 : vector<8xf32> to vector<8x1xf32>
    %20 = vector.broadcast %19 : vector<8x1xf32> to vector<8x8xf32>
    %21 = arith.subf %17, %20 : vector<8x8xf32>
    %22 = math.exp %21 : vector<8x8xf32>
    %cst_15 = arith.constant dense<0.000000e+00> : vector<8xf32>
    %23 = vector.multi_reduction <add>, %22, %cst_15 [1] : vector<8x8xf32> to vector<8xf32>
    %24 = vector.shape_cast %23 : vector<8xf32> to vector<8x1xf32>
    %25 = vector.broadcast %24 : vector<8x1xf32> to vector<8x8xf32>
    %26 = arith.divf %22, %25 : vector<8x8xf32>
    %c0_16 = arith.constant 0 : index
    %c0_17 = arith.constant 0 : index
    %c0_18 = arith.constant 0 : index
    %c0_19 = arith.constant 0 : index
    %27 = vector.load %arg8[%c0_16, %c0_17, %c0_18, %c0_19] : memref<1x4x8x8xf32, #tpu.memory_space<vmem>>, vector<1x1x8x8xf32>
    %28 = vector.shape_cast %27 : vector<1x1x8x8xf32> to vector<8x8xf32>
    %29 = vector.shape_cast %26 : vector<8x8xf32> to vector<1x1x8x8xf32>
    tpu.vector_store %arg8[%c0_16, %c0_17, %c0_18, %c0_19], %29 {strides = array<i32>} : memref<1x4x8x8xf32, #tpu.memory_space<vmem>>, vector<1x1x8x8xf32>,
    %30 = arith.truncf %26 : vector<8x8xf32> to vector<8x8xbf16>
    %cst_20 = arith.constant dense<0.000000e+00> : vector<8x32xf32>
    %31 = tpu.matmul %30, %15, %cst_20 {dimension_numbers = #tpu.dot_dimension_numbers<[1], [0], [0], [1], [0, 0, 1, 1], [], []>} : vector<8x8xbf16>, vector<8x32xbf16>, vector<8x32xf32> -> vector<8x32xf32>
    %32 = vector.extract_strided_slice %1 {offsets = [0, 32], sizes = [8, 32], strides = [1, 1]} : vector<8x128xbf16> to vector<8x32xbf16>
    %cst_21 = arith.constant 1.767580e-01 : bf16
    %33 = vector.broadcast %cst_21 : bf16 to vector<8x32xbf16>
    %34 = arith.mulf %32, %33 : vector<8x32xbf16>
    %35 = vector.extract_strided_slice %3 {offsets = [0, 32], sizes = [8, 32], strides = [1, 1]} : vector<8x128xbf16> to vector<8x32xbf16>
    %36 = vector.extract_strided_slice %5 {offsets = [0, 32], sizes = [8, 32], strides = [1, 1]} : vector<8x128xbf16> to vector<8x32xbf16>
    %cst_22 = arith.constant dense<0.000000e+00> : vector<8x8xf32>
    %37 = tpu.matmul %34, %35, %cst_22 {dimension_numbers = #tpu.dot_dimension_numbers<[1], [1], [0], [0], [0, 0, 1, 0], [], []>} : vector<8x32xbf16>, vector<8x32xbf16>, vector<8x8xf32> -> vector<8x8xf32>
    %38 = arith.addf %37, %10 : vector<8x8xf32>
    %cst_23 = arith.constant dense<0xFF800000> : vector<8xf32>
    %39 = vector.multi_reduction <maximumf>, %38, %cst_23 [1] : vector<8x8xf32> to vector<8xf32>
    %40 = vector.shape_cast %39 : vector<8xf32> to vector<8x1xf32>
    %41 = vector.broadcast %40 : vector<8x1xf32> to vector<8x8xf32>
    %42 = arith.subf %38, %41 : vector<8x8xf32>
    %43 = math.exp %42 : vector<8x8xf32>
    %cst_24 = arith.constant dense<0.000000e+00> : vector<8xf32>
    %44 = vector.multi_reduction <add>, %43, %cst_24 [1] : vector<8x8xf32> to vector<8xf32>
    %45 = vector.shape_cast %44 : vector<8xf32> to vector<8x1xf32>
    %46 = vector.broadcast %45 : vector<8x1xf32> to vector<8x8xf32>
    %47 = arith.divf %43, %46 : vector<8x8xf32>
    %c0_25 = arith.constant 0 : index
    %c1 = arith.constant 1 : index
    %c0_26 = arith.constant 0 : index
    %c0_27 = arith.constant 0 : index
    %48 = vector.load %arg8[%c0_25, %c1, %c0_26, %c0_27] : memref<1x4x8x8xf32, #tpu.memory_space<vmem>>, vector<1x1x8x8xf32>
    %49 = vector.shape_cast %48 : vector<1x1x8x8xf32> to vector<8x8xf32>
    %50 = vector.shape_cast %47 : vector<8x8xf32> to vector<1x1x8x8xf32>
    tpu.vector_store %arg8[%c0_25, %c1, %c0_26, %c0_27], %50 {strides = array<i32>} : memref<1x4x8x8xf32, #tpu.memory_space<vmem>>, vector<1x1x8x8xf32>,
    %51 = arith.truncf %47 : vector<8x8xf32> to vector<8x8xbf16>
    %cst_28 = arith.constant dense<0.000000e+00> : vector<8x32xf32>
    %52 = tpu.matmul %51, %36, %cst_28 {dimension_numbers = #tpu.dot_dimension_numbers<[1], [0], [0], [1], [0, 0, 1, 1], [], []>} : vector<8x8xbf16>, vector<8x32xbf16>, vector<8x32xf32> -> vector<8x32xf32>
    %53 = vector.extract_strided_slice %1 {offsets = [0, 64], sizes = [8, 32], strides = [1, 1]} : vector<8x128xbf16> to vector<8x32xbf16>
    %cst_29 = arith.constant 1.767580e-01 : bf16
    %54 = vector.broadcast %cst_29 : bf16 to vector<8x32xbf16>
    %55 = arith.mulf %53, %54 : vector<8x32xbf16>
    %56 = vector.extract_strided_slice %3 {offsets = [0, 64], sizes = [8, 32], strides = [1, 1]} : vector<8x128xbf16> to vector<8x32xbf16>
    %57 = vector.extract_strided_slice %5 {offsets = [0, 64], sizes = [8, 32], strides = [1, 1]} : vector<8x128xbf16> to vector<8x32xbf16>
    %cst_30 = arith.constant dense<0.000000e+00> : vector<8x8xf32>
    %58 = tpu.matmul %55, %56, %cst_30 {dimension_numbers = #tpu.dot_dimension_numbers<[1], [1], [0], [0], [0, 0, 1, 0], [], []>} : vector<8x32xbf16>, vector<8x32xbf16>, vector<8x8xf32> -> vector<8x8xf32>
    %59 = arith.addf %58, %10 : vector<8x8xf32>
    %cst_31 = arith.constant dense<0xFF800000> : vector<8xf32>
    %60 = vector.multi_reduction <maximumf>, %59, %cst_31 [1] : vector<8x8xf32> to vector<8xf32>
    %61 = vector.shape_cast %60 : vector<8xf32> to vector<8x1xf32>
    %62 = vector.broadcast %61 : vector<8x1xf32> to vector<8x8xf32>
    %63 = arith.subf %59, %62 : vector<8x8xf32>
    %64 = math.exp %63 : vector<8x8xf32>
    %cst_32 = arith.constant dense<0.000000e+00> : vector<8xf32>
    %65 = vector.multi_reduction <add>, %64, %cst_32 [1] : vector<8x8xf32> to vector<8xf32>
    %66 = vector.shape_cast %65 : vector<8xf32> to vector<8x1xf32>
    %67 = vector.broadcast %66 : vector<8x1xf32> to vector<8x8xf32>
    %68 = arith.divf %64, %67 : vector<8x8xf32>
    %c0_33 = arith.constant 0 : index
    %c2 = arith.constant 2 : index
    %c0_34 = arith.constant 0 : index
    %c0_35 = arith.constant 0 : index
    %69 = vector.load %arg8[%c0_33, %c2, %c0_34, %c0_35] : memref<1x4x8x8xf32, #tpu.memory_space<vmem>>, vector<1x1x8x8xf32>
    %70 = vector.shape_cast %69 : vector<1x1x8x8xf32> to vector<8x8xf32>
    %71 = vector.shape_cast %68 : vector<8x8xf32> to vector<1x1x8x8xf32>
    tpu.vector_store %arg8[%c0_33, %c2, %c0_34, %c0_35], %71 {strides = array<i32>} : memref<1x4x8x8xf32, #tpu.memory_space<vmem>>, vector<1x1x8x8xf32>,
    %72 = arith.truncf %68 : vector<8x8xf32> to vector<8x8xbf16>
    %cst_36 = arith.constant dense<0.000000e+00> : vector<8x32xf32>
    %73 = tpu.matmul %72, %57, %cst_36 {dimension_numbers = #tpu.dot_dimension_numbers<[1], [0], [0], [1], [0, 0, 1, 1], [], []>} : vector<8x8xbf16>, vector<8x32xbf16>, vector<8x32xf32> -> vector<8x32xf32>
    %74 = vector.extract_strided_slice %1 {offsets = [0, 96], sizes = [8, 32], strides = [1, 1]} : vector<8x128xbf16> to vector<8x32xbf16>
    %cst_37 = arith.constant 1.767580e-01 : bf16
    %75 = vector.broadcast %cst_37 : bf16 to vector<8x32xbf16>
    %76 = arith.mulf %74, %75 : vector<8x32xbf16>
    %77 = vector.extract_strided_slice %3 {offsets = [0, 96], sizes = [8, 32], strides = [1, 1]} : vector<8x128xbf16> to vector<8x32xbf16>
    %78 = vector.extract_strided_slice %5 {offsets = [0, 96], sizes = [8, 32], strides = [1, 1]} : vector<8x128xbf16> to vector<8x32xbf16>
    %cst_38 = arith.constant dense<0.000000e+00> : vector<8x8xf32>
    %79 = tpu.matmul %76, %77, %cst_38 {dimension_numbers = #tpu.dot_dimension_numbers<[1], [1], [0], [0], [0, 0, 1, 0], [], []>} : vector<8x32xbf16>, vector<8x32xbf16>, vector<8x8xf32> -> vector<8x8xf32>
    %80 = arith.addf %79, %10 : vector<8x8xf32>
    %cst_39 = arith.constant dense<0xFF800000> : vector<8xf32>
    %81 = vector.multi_reduction <maximumf>, %80, %cst_39 [1] : vector<8x8xf32> to vector<8xf32>
    %82 = vector.shape_cast %81 : vector<8xf32> to vector<8x1xf32>
    %83 = vector.broadcast %82 : vector<8x1xf32> to vector<8x8xf32>
    %84 = arith.subf %80, %83 : vector<8x8xf32>
    %85 = math.exp %84 : vector<8x8xf32>
    %cst_40 = arith.constant dense<0.000000e+00> : vector<8xf32>
    %86 = vector.multi_reduction <add>, %85, %cst_40 [1] : vector<8x8xf32> to vector<8xf32>
    %87 = vector.shape_cast %86 : vector<8xf32> to vector<8x1xf32>
    %88 = vector.broadcast %87 : vector<8x1xf32> to vector<8x8xf32>
    %89 = arith.divf %85, %88 : vector<8x8xf32>
    %c0_41 = arith.constant 0 : index
    %c3 = arith.constant 3 : index
    %c0_42 = arith.constant 0 : index
    %c0_43 = arith.constant 0 : index
    %90 = vector.load %arg8[%c0_41, %c3, %c0_42, %c0_43] : memref<1x4x8x8xf32, #tpu.memory_space<vmem>>, vector<1x1x8x8xf32>
    %91 = vector.shape_cast %90 : vector<1x1x8x8xf32> to vector<8x8xf32>
    %92 = vector.shape_cast %89 : vector<8x8xf32> to vector<1x1x8x8xf32>
    tpu.vector_store %arg8[%c0_41, %c3, %c0_42, %c0_43], %92 {strides = array<i32>} : memref<1x4x8x8xf32, #tpu.memory_space<vmem>>, vector<1x1x8x8xf32>,
    %93 = arith.truncf %89 : vector<8x8xf32> to vector<8x8xbf16>
    %cst_44 = arith.constant dense<0.000000e+00> : vector<8x32xf32>
    %94 = tpu.matmul %93, %78, %cst_44 {dimension_numbers = #tpu.dot_dimension_numbers<[1], [0], [0], [1], [0, 0, 1, 1], [], []>} : vector<8x8xbf16>, vector<8x32xbf16>, vector<8x32xf32> -> vector<8x32xf32>
    %95 = tpu.concatenate %31, %52, %73, %94 in 1 : vector<8x32xf32>, vector<8x32xf32>, vector<8x32xf32>, vector<8x32xf32> -> vector<8x128xf32>
    %96 = arith.truncf %95 : vector<8x128xf32> to vector<8x128xbf16>
    %c0_45 = arith.constant 0 : index
    %c0_46 = arith.constant 0 : index
    %c0_47 = arith.constant 0 : index
    %97 = vector.load %arg7[%c0_45, %c0_46, %c0_47] : memref<1x8x128xbf16, #tpu.memory_space<vmem>>, vector<1x8x128xbf16>
    %98 = vector.shape_cast %97 : vector<1x8x128xbf16> to vector<8x128xbf16>
    %99 = vector.shape_cast %96 : vector<8x128xbf16> to vector<1x8x128xbf16>
    tpu.vector_store %arg7[%c0_45, %c0_46, %c0_47], %99 {strides = array<i32>} : memref<1x8x128xbf16, #tpu.memory_space<vmem>>, vector<1x8x128xbf16>,
    return
  }
  func.func @transform_0(%arg0: i32, %arg1: i32) -> (i32, i32, i32) {
    %c0_i32 = arith.constant 0 : i32
    %c0_i32_0 = arith.constant 0 : i32
    return %arg0, %arg1, %c0_i32 : i32, i32, i32
  }
  func.func @transform_1(%arg0: i32, %arg1: i32) -> (i32, i32, i32) {
    %c0_i32 = arith.constant 0 : i32
    %c0_i32_0 = arith.constant 0 : i32
    %c0_i32_1 = arith.constant 0 : i32
    return %arg0, %c0_i32, %c0_i32_0 : i32, i32, i32
  }
  func.func @transform_2(%arg0: i32, %arg1: i32) -> (i32, i32, i32) {
    %c0_i32 = arith.constant 0 : i32
    %c1_i32 = arith.constant 1 : i32
    %c0_i32_0 = arith.constant 0 : i32
    return %arg0, %c0_i32, %c1_i32 : i32, i32, i32
  }
  func.func @transform_3(%arg0: i32, %arg1: i32) -> (i32, i32) {
    %c0_i32 = arith.constant 0 : i32
    %c0_i32_0 = arith.constant 0 : i32
    return %arg1, %c0_i32 : i32, i32
  }
  func.func @transform_4(%arg0: i32, %arg1: i32) -> (i32, i32, i32) {
    %c0_i32 = arith.constant 0 : i32
    %c0_i32_0 = arith.constant 0 : i32
    %c0_i32_1 = arith.constant 0 : i32
    return %arg0, %c0_i32, %c0_i32_0 : i32, i32, i32
  }
  func.func @transform_5(%arg0: i32, %arg1: i32) -> (i32, i32, i32) {
    %c0_i32 = arith.constant 0 : i32
    %c0_i32_0 = arith.constant 0 : i32
    return %arg0, %arg1, %c0_i32 : i32, i32, i32
  }
  func.func @transform_6(%arg0: i32, %arg1: i32) -> (i32, i32, i32, i32) {
    %c0_i32 = arith.constant 0 : i32
    %c0_i32_0 = arith.constant 0 : i32
    %c0_i32_1 = arith.constant 0 : i32
    return %arg0, %c0_i32, %arg1, %c0_i32_0 : i32, i32, i32, i32
  }
}

module attributes {stable_mosaic.version = 11 : i64} {
  func.func @_matmul_add_ln_kernel(%arg0: i32, %arg1: i32, %arg2: memref<16x256xbf16, #tpu.memory_space<vmem>>, %arg3: memref<256x128xbf16, #tpu.memory_space<vmem>>, %arg4: memref<1x128xf32, #tpu.memory_space<vmem>>, %arg5: memref<16x128xf32, #tpu.memory_space<vmem>>, %arg6: memref<1x128xf32, #tpu.memory_space<vmem>>, %arg7: memref<1x128xf32, #tpu.memory_space<vmem>>, %arg8: memref<16x128xf32, #tpu.memory_space<vmem>>, %arg9: memref<16x128xf32, #tpu.memory_space<vmem>>) attributes {dimension_semantics = [#tpu.dimension_semantics<parallel>, #tpu.dimension_semantics<arbitrary>], iteration_bounds = array<i64: 1, 1>, scalar_prefetch = 0 : i64, scratch_operands = 1 : i64, tpu.core_type = #tpu.core_type<tc>, window_params = [{transform_indices = @transform_0, window_bounds = array<i64: 16, 256>}, {transform_indices = @transform_1, window_bounds = array<i64: 256, 128>}, {pipeline_mode = #tpu.pipeline_mode<synchronous>, transform_indices = @transform_2, window_bounds = array<i64: 1, 128>}, {transform_indices = @transform_3, window_bounds = array<i64: 16, 128>}, {pipeline_mode = #tpu.pipeline_mode<synchronous>, transform_indices = @transform_4, window_bounds = array<i64: 1, 128>}, {pipeline_mode = #tpu.pipeline_mode<synchronous>, transform_indices = @transform_5, window_bounds = array<i64: 1, 128>}, {transform_indices = @transform_6, window_bounds = array<i64: 16, 128>}]} {
    %c0_i32 = arith.constant 0 : i32
    %0 = arith.cmpi eq, %arg1, %c0_i32 : i32
    %1 = arith.extui %0 : i1 to i32
    %c0_i32_0 = arith.constant 0 : i32
    %2 = arith.cmpi ne, %1, %c0_i32_0 : i32
    scf.if %2 {
      %cst_10 = arith.constant 0.000000e+00 : f32
      %12 = vector.broadcast %cst_10 : f32 to vector<16x128xf32>
      %c0_11 = arith.constant 0 : index
      %c0_12 = arith.constant 0 : index
      %13 = vector.load %arg9[%c0_11, %c0_12] : memref<16x128xf32, #tpu.memory_space<vmem>>, vector<16x128xf32>
      tpu.vector_store %arg9[%c0_11, %c0_12], %12 {strides = array<i32>} : memref<16x128xf32, #tpu.memory_space<vmem>>, vector<16x128xf32>,
    } else {
    }
    %c0 = arith.constant 0 : index
    %c0_1 = arith.constant 0 : index
    %3 = vector.load %arg9[%c0, %c0_1] : memref<16x128xf32, #tpu.memory_space<vmem>>, vector<16x128xf32>
    %c0_2 = arith.constant 0 : index
    %c0_3 = arith.constant 0 : index
    %4 = vector.load %arg2[%c0_2, %c0_3] : memref<16x256xbf16, #tpu.memory_space<vmem>>, vector<16x256xbf16>
    %c0_4 = arith.constant 0 : index
    %c0_5 = arith.constant 0 : index
    %5 = vector.load %arg3[%c0_4, %c0_5] : memref<256x128xbf16, #tpu.memory_space<vmem>>, vector<256x128xbf16>
    %cst = arith.constant dense<0.000000e+00> : vector<16x128xf32>
    %6 = tpu.matmul %4, %5, %cst {dimension_numbers = #tpu.dot_dimension_numbers<[1], [0], [0], [1], [0, 0, 1, 1], [], []>} : vector<16x256xbf16>, vector<256x128xbf16>, vector<16x128xf32> -> vector<16x128xf32>
    %7 = arith.addf %3, %6 : vector<16x128xf32>
    %c0_6 = arith.constant 0 : index
    %c0_7 = arith.constant 0 : index
    %8 = vector.load %arg9[%c0_6, %c0_7] : memref<16x128xf32, #tpu.memory_space<vmem>>, vector<16x128xf32>
    tpu.vector_store %arg9[%c0_6, %c0_7], %7 {strides = array<i32>} : memref<16x128xf32, #tpu.memory_space<vmem>>, vector<16x128xf32>,
    %c0_i32_8 = arith.constant 0 : i32
    %9 = arith.cmpi eq, %arg1, %c0_i32_8 : i32
    %10 = arith.extui %9 : i1 to i32
    %c0_i32_9 = arith.constant 0 : i32
    %11 = arith.cmpi ne, %10, %c0_i32_9 : i32
    scf.if %11 {
      %c0_10 = arith.constant 0 : index
      %c0_11 = arith.constant 0 : index
      %12 = vector.load %arg9[%c0_10, %c0_11] : memref<16x128xf32, #tpu.memory_space<vmem>>, vector<16x128xf32>
      %c0_12 = arith.constant 0 : index
      %c0_13 = arith.constant 0 : index
      %13 = vector.load %arg4[%c0_12, %c0_13] : memref<1x128xf32, #tpu.memory_space<vmem>>, vector<1x128xf32>
      %14 = vector.broadcast %13 : vector<1x128xf32> to vector<16x128xf32>
      %15 = arith.addf %12, %14 : vector<16x128xf32>
      %c0_14 = arith.constant 0 : index
      %c0_15 = arith.constant 0 : index
      %16 = vector.load %arg5[%c0_14, %c0_15] : memref<16x128xf32, #tpu.memory_space<vmem>>, vector<16x128xf32>
      %17 = arith.addf %15, %16 : vector<16x128xf32>
      %cst_16 = arith.constant dense<0.000000e+00> : vector<16xf32>
      %18 = vector.multi_reduction <add>, %17, %cst_16 [1] : vector<16x128xf32> to vector<16xf32>
      %19 = vector.shape_cast %18 : vector<16xf32> to vector<16x1xf32>
      %cst_17 = arith.constant 1.280000e+02 : f32
      %20 = vector.broadcast %cst_17 : f32 to vector<16x1xf32>
      %21 = arith.divf %19, %20 : vector<16x1xf32>
      %22 = vector.broadcast %21 : vector<16x1xf32> to vector<16x128xf32>
      %23 = arith.subf %17, %22 : vector<16x128xf32>
      %24 = arith.mulf %23, %23 : vector<16x128xf32>
      %cst_18 = arith.constant dense<0.000000e+00> : vector<16xf32>
      %25 = vector.multi_reduction <add>, %24, %cst_18 [1] : vector<16x128xf32> to vector<16xf32>
      %26 = vector.shape_cast %25 : vector<16xf32> to vector<16x1xf32>
      %cst_19 = arith.constant 1.280000e+02 : f32
      %27 = vector.broadcast %cst_19 : f32 to vector<16x1xf32>
      %28 = arith.divf %26, %27 : vector<16x1xf32>
      %29 = vector.broadcast %21 : vector<16x1xf32> to vector<16x128xf32>
      %30 = arith.subf %17, %29 : vector<16x128xf32>
      %cst_20 = arith.constant 9.99999974E-6 : f32
      %31 = vector.broadcast %cst_20 : f32 to vector<16x1xf32>
      %32 = arith.addf %28, %31 : vector<16x1xf32>
      %33 = math.rsqrt %32 : vector<16x1xf32>
      %34 = vector.broadcast %33 : vector<16x1xf32> to vector<16x128xf32>
      %35 = arith.mulf %30, %34 : vector<16x128xf32>
      %c0_21 = arith.constant 0 : index
      %c0_22 = arith.constant 0 : index
      %36 = vector.load %arg6[%c0_21, %c0_22] : memref<1x128xf32, #tpu.memory_space<vmem>>, vector<1x128xf32>
      %37 = vector.broadcast %36 : vector<1x128xf32> to vector<16x128xf32>
      %38 = arith.mulf %35, %37 : vector<16x128xf32>
      %c0_23 = arith.constant 0 : index
      %c0_24 = arith.constant 0 : index
      %39 = vector.load %arg7[%c0_23, %c0_24] : memref<1x128xf32, #tpu.memory_space<vmem>>, vector<1x128xf32>
      %40 = vector.broadcast %39 : vector<1x128xf32> to vector<16x128xf32>
      %41 = arith.addf %38, %40 : vector<16x128xf32>
      %c0_25 = arith.constant 0 : index
      %c0_26 = arith.constant 0 : index
      %42 = vector.load %arg8[%c0_25, %c0_26] : memref<16x128xf32, #tpu.memory_space<vmem>>, vector<16x128xf32>
      tpu.vector_store %arg8[%c0_25, %c0_26], %41 {strides = array<i32>} : memref<16x128xf32, #tpu.memory_space<vmem>>, vector<16x128xf32>,
    } else {
    }
    return
  }
  func.func @transform_0(%arg0: i32, %arg1: i32) -> (i32, i32) {
    %c0_i32 = arith.constant 0 : i32
    return %arg0, %arg1 : i32, i32
  }
  func.func @transform_1(%arg0: i32, %arg1: i32) -> (i32, i32) {
    %c0_i32 = arith.constant 0 : i32
    %c0_i32_0 = arith.constant 0 : i32
    return %arg1, %c0_i32 : i32, i32
  }
  func.func @transform_2(%arg0: i32, %arg1: i32) -> (i32, i32) {
    %c0_i32 = arith.constant 0 : i32
    %c0_i32_0 = arith.constant 0 : i32
    %c0_i32_1 = arith.constant 0 : i32
    return %c0_i32, %c0_i32_0 : i32, i32
  }
  func.func @transform_3(%arg0: i32, %arg1: i32) -> (i32, i32) {
    %c0_i32 = arith.constant 0 : i32
    %c0_i32_0 = arith.constant 0 : i32
    return %arg0, %c0_i32 : i32, i32
  }
  func.func @transform_4(%arg0: i32, %arg1: i32) -> (i32, i32) {
    %c0_i32 = arith.constant 0 : i32
    %c0_i32_0 = arith.constant 0 : i32
    %c0_i32_1 = arith.constant 0 : i32
    return %c0_i32, %c0_i32_0 : i32, i32
  }
  func.func @transform_5(%arg0: i32, %arg1: i32) -> (i32, i32) {
    %c0_i32 = arith.constant 0 : i32
    %c0_i32_0 = arith.constant 0 : i32
    %c0_i32_1 = arith.constant 0 : i32
    return %c0_i32, %c0_i32_0 : i32, i32
  }
  func.func @transform_6(%arg0: i32, %arg1: i32) -> (i32, i32) {
    %c0_i32 = arith.constant 0 : i32
    %c0_i32_0 = arith.constant 0 : i32
    return %arg0, %c0_i32 : i32, i32
  }
}

module attributes {stable_mosaic.version = 11 : i64} {
  func.func @_matmul_bias_kernel(%arg0: i32, %arg1: i32, %arg2: i32, %arg3: memref<16x128xf32, #tpu.memory_space<vmem>>, %arg4: memref<128x256xbf16, #tpu.memory_space<vmem>>, %arg5: memref<1x256xf32, #tpu.memory_space<vmem>>, %arg6: memref<16x256xbf16, #tpu.memory_space<vmem>>, %arg7: memref<16x256xf32, #tpu.memory_space<vmem>>) attributes {dimension_semantics = [#tpu.dimension_semantics<parallel>, #tpu.dimension_semantics<parallel>, #tpu.dimension_semantics<arbitrary>], iteration_bounds = array<i64: 1, 1, 1>, scalar_prefetch = 0 : i64, scratch_operands = 1 : i64, tpu.core_type = #tpu.core_type<tc>, window_params = [{transform_indices = @transform_0, window_bounds = array<i64: 16, 128>}, {transform_indices = @transform_1, window_bounds = array<i64: 128, 256>}, {transform_indices = @transform_2, window_bounds = array<i64: 1, 256>}, {transform_indices = @transform_3, window_bounds = array<i64: 16, 256>}]} {
    %c0_i32 = arith.constant 0 : i32
    %0 = arith.cmpi eq, %arg2, %c0_i32 : i32
    %1 = arith.extui %0 : i1 to i32
    %c0_i32_0 = arith.constant 0 : i32
    %2 = arith.cmpi ne, %1, %c0_i32_0 : i32
    scf.if %2 {
      %cst_10 = arith.constant 0.000000e+00 : f32
      %13 = vector.broadcast %cst_10 : f32 to vector<16x256xf32>
      %c0_11 = arith.constant 0 : index
      %c0_12 = arith.constant 0 : index
      %14 = vector.load %arg7[%c0_11, %c0_12] : memref<16x256xf32, #tpu.memory_space<vmem>>, vector<16x256xf32>
      tpu.vector_store %arg7[%c0_11, %c0_12], %13 {strides = array<i32>} : memref<16x256xf32, #tpu.memory_space<vmem>>, vector<16x256xf32>,
    } else {
    }
    %c0 = arith.constant 0 : index
    %c0_1 = arith.constant 0 : index
    %3 = vector.load %arg7[%c0, %c0_1] : memref<16x256xf32, #tpu.memory_space<vmem>>, vector<16x256xf32>
    %c0_2 = arith.constant 0 : index
    %c0_3 = arith.constant 0 : index
    %4 = vector.load %arg3[%c0_2, %c0_3] : memref<16x128xf32, #tpu.memory_space<vmem>>, vector<16x128xf32>
    %5 = arith.truncf %4 : vector<16x128xf32> to vector<16x128xbf16>
    %c0_4 = arith.constant 0 : index
    %c0_5 = arith.constant 0 : index
    %6 = vector.load %arg4[%c0_4, %c0_5] : memref<128x256xbf16, #tpu.memory_space<vmem>>, vector<128x256xbf16>
    %cst = arith.constant dense<0.000000e+00> : vector<16x256xf32>
    %7 = tpu.matmul %5, %6, %cst {dimension_numbers = #tpu.dot_dimension_numbers<[1], [0], [0], [1], [0, 0, 1, 1], [], []>} : vector<16x128xbf16>, vector<128x256xbf16>, vector<16x256xf32> -> vector<16x256xf32>
    %8 = arith.addf %3, %7 : vector<16x256xf32>
    %c0_6 = arith.constant 0 : index
    %c0_7 = arith.constant 0 : index
    %9 = vector.load %arg7[%c0_6, %c0_7] : memref<16x256xf32, #tpu.memory_space<vmem>>, vector<16x256xf32>
    tpu.vector_store %arg7[%c0_6, %c0_7], %8 {strides = array<i32>} : memref<16x256xf32, #tpu.memory_space<vmem>>, vector<16x256xf32>,
    %c0_i32_8 = arith.constant 0 : i32
    %10 = arith.cmpi eq, %arg2, %c0_i32_8 : i32
    %11 = arith.extui %10 : i1 to i32
    %c0_i32_9 = arith.constant 0 : i32
    %12 = arith.cmpi ne, %11, %c0_i32_9 : i32
    scf.if %12 {
      %c0_10 = arith.constant 0 : index
      %c0_11 = arith.constant 0 : index
      %13 = vector.load %arg7[%c0_10, %c0_11] : memref<16x256xf32, #tpu.memory_space<vmem>>, vector<16x256xf32>
      %c0_12 = arith.constant 0 : index
      %c0_13 = arith.constant 0 : index
      %14 = vector.load %arg5[%c0_12, %c0_13] : memref<1x256xf32, #tpu.memory_space<vmem>>, vector<1x256xf32>
      %15 = vector.broadcast %14 : vector<1x256xf32> to vector<16x256xf32>
      %16 = arith.addf %13, %15 : vector<16x256xf32>
      %cst_14 = arith.constant 0.000000e+00 : f32
      %17 = vector.broadcast %cst_14 : f32 to vector<16x256xf32>
      %18 = arith.maximumf %16, %17 : vector<16x256xf32>
      %19 = arith.truncf %18 : vector<16x256xf32> to vector<16x256xbf16>
      %c0_15 = arith.constant 0 : index
      %c0_16 = arith.constant 0 : index
      %20 = vector.load %arg6[%c0_15, %c0_16] : memref<16x256xbf16, #tpu.memory_space<vmem>>, vector<16x256xbf16>
      tpu.vector_store %arg6[%c0_15, %c0_16], %19 {strides = array<i32>} : memref<16x256xbf16, #tpu.memory_space<vmem>>, vector<16x256xbf16>,
    } else {
    }
    return
  }
  func.func @transform_0(%arg0: i32, %arg1: i32, %arg2: i32) -> (i32, i32) {
    %c0_i32 = arith.constant 0 : i32
    return %arg0, %arg2 : i32, i32
  }
  func.func @transform_1(%arg0: i32, %arg1: i32, %arg2: i32) -> (i32, i32) {
    %c0_i32 = arith.constant 0 : i32
    return %arg2, %arg1 : i32, i32
  }
  func.func @transform_2(%arg0: i32, %arg1: i32, %arg2: i32) -> (i32, i32) {
    %c0_i32 = arith.constant 0 : i32
    %c0_i32_0 = arith.constant 0 : i32
    return %c0_i32, %arg1 : i32, i32
  }
  func.func @transform_3(%arg0: i32, %arg1: i32, %arg2: i32) -> (i32, i32) {
    %c0_i32 = arith.constant 0 : i32
    return %arg0, %arg1 : i32, i32
  }
}

module attributes {stable_mosaic.version = 11 : i64} {
  func.func @_matmul_add_ln_kernel(%arg0: i32, %arg1: i32, %arg2: memref<16x256xbf16, #tpu.memory_space<vmem>>, %arg3: memref<256x128xbf16, #tpu.memory_space<vmem>>, %arg4: memref<1x128xf32, #tpu.memory_space<vmem>>, %arg5: memref<16x128xf32, #tpu.memory_space<vmem>>, %arg6: memref<1x128xf32, #tpu.memory_space<vmem>>, %arg7: memref<1x128xf32, #tpu.memory_space<vmem>>, %arg8: memref<16x128xf32, #tpu.memory_space<vmem>>, %arg9: memref<16x128xf32, #tpu.memory_space<vmem>>) attributes {dimension_semantics = [#tpu.dimension_semantics<parallel>, #tpu.dimension_semantics<arbitrary>], iteration_bounds = array<i64: 1, 1>, scalar_prefetch = 0 : i64, scratch_operands = 1 : i64, tpu.core_type = #tpu.core_type<tc>, window_params = [{transform_indices = @transform_0, window_bounds = array<i64: 16, 256>}, {transform_indices = @transform_1, window_bounds = array<i64: 256, 128>}, {pipeline_mode = #tpu.pipeline_mode<synchronous>, transform_indices = @transform_2, window_bounds = array<i64: 1, 128>}, {transform_indices = @transform_3, window_bounds = array<i64: 16, 128>}, {pipeline_mode = #tpu.pipeline_mode<synchronous>, transform_indices = @transform_4, window_bounds = array<i64: 1, 128>}, {pipeline_mode = #tpu.pipeline_mode<synchronous>, transform_indices = @transform_5, window_bounds = array<i64: 1, 128>}, {transform_indices = @transform_6, window_bounds = array<i64: 16, 128>}]} {
    %c0_i32 = arith.constant 0 : i32
    %0 = arith.cmpi eq, %arg1, %c0_i32 : i32
    %1 = arith.extui %0 : i1 to i32
    %c0_i32_0 = arith.constant 0 : i32
    %2 = arith.cmpi ne, %1, %c0_i32_0 : i32
    scf.if %2 {
      %cst_10 = arith.constant 0.000000e+00 : f32
      %12 = vector.broadcast %cst_10 : f32 to vector<16x128xf32>
      %c0_11 = arith.constant 0 : index
      %c0_12 = arith.constant 0 : index
      %13 = vector.load %arg9[%c0_11, %c0_12] : memref<16x128xf32, #tpu.memory_space<vmem>>, vector<16x128xf32>
      tpu.vector_store %arg9[%c0_11, %c0_12], %12 {strides = array<i32>} : memref<16x128xf32, #tpu.memory_space<vmem>>, vector<16x128xf32>,
    } else {
    }
    %c0 = arith.constant 0 : index
    %c0_1 = arith.constant 0 : index
    %3 = vector.load %arg9[%c0, %c0_1] : memref<16x128xf32, #tpu.memory_space<vmem>>, vector<16x128xf32>
    %c0_2 = arith.constant 0 : index
    %c0_3 = arith.constant 0 : index
    %4 = vector.load %arg2[%c0_2, %c0_3] : memref<16x256xbf16, #tpu.memory_space<vmem>>, vector<16x256xbf16>
    %c0_4 = arith.constant 0 : index
    %c0_5 = arith.constant 0 : index
    %5 = vector.load %arg3[%c0_4, %c0_5] : memref<256x128xbf16, #tpu.memory_space<vmem>>, vector<256x128xbf16>
    %cst = arith.constant dense<0.000000e+00> : vector<16x128xf32>
    %6 = tpu.matmul %4, %5, %cst {dimension_numbers = #tpu.dot_dimension_numbers<[1], [0], [0], [1], [0, 0, 1, 1], [], []>} : vector<16x256xbf16>, vector<256x128xbf16>, vector<16x128xf32> -> vector<16x128xf32>
    %7 = arith.addf %3, %6 : vector<16x128xf32>
    %c0_6 = arith.constant 0 : index
    %c0_7 = arith.constant 0 : index
    %8 = vector.load %arg9[%c0_6, %c0_7] : memref<16x128xf32, #tpu.memory_space<vmem>>, vector<16x128xf32>
    tpu.vector_store %arg9[%c0_6, %c0_7], %7 {strides = array<i32>} : memref<16x128xf32, #tpu.memory_space<vmem>>, vector<16x128xf32>,
    %c0_i32_8 = arith.constant 0 : i32
    %9 = arith.cmpi eq, %arg1, %c0_i32_8 : i32
    %10 = arith.extui %9 : i1 to i32
    %c0_i32_9 = arith.constant 0 : i32
    %11 = arith.cmpi ne, %10, %c0_i32_9 : i32
    scf.if %11 {
      %c0_10 = arith.constant 0 : index
      %c0_11 = arith.constant 0 : index
      %12 = vector.load %arg9[%c0_10, %c0_11] : memref<16x128xf32, #tpu.memory_space<vmem>>, vector<16x128xf32>
      %c0_12 = arith.constant 0 : index
      %c0_13 = arith.constant 0 : index
      %13 = vector.load %arg4[%c0_12, %c0_13] : memref<1x128xf32, #tpu.memory_space<vmem>>, vector<1x128xf32>
      %14 = vector.broadcast %13 : vector<1x128xf32> to vector<16x128xf32>
      %15 = arith.addf %12, %14 : vector<16x128xf32>
      %c0_14 = arith.constant 0 : index
      %c0_15 = arith.constant 0 : index
      %16 = vector.load %arg5[%c0_14, %c0_15] : memref<16x128xf32, #tpu.memory_space<vmem>>, vector<16x128xf32>
      %17 = arith.addf %15, %16 : vector<16x128xf32>
      %cst_16 = arith.constant dense<0.000000e+00> : vector<16xf32>
      %18 = vector.multi_reduction <add>, %17, %cst_16 [1] : vector<16x128xf32> to vector<16xf32>
      %19 = vector.shape_cast %18 : vector<16xf32> to vector<16x1xf32>
      %cst_17 = arith.constant 1.280000e+02 : f32
      %20 = vector.broadcast %cst_17 : f32 to vector<16x1xf32>
      %21 = arith.divf %19, %20 : vector<16x1xf32>
      %22 = vector.broadcast %21 : vector<16x1xf32> to vector<16x128xf32>
      %23 = arith.subf %17, %22 : vector<16x128xf32>
      %24 = arith.mulf %23, %23 : vector<16x128xf32>
      %cst_18 = arith.constant dense<0.000000e+00> : vector<16xf32>
      %25 = vector.multi_reduction <add>, %24, %cst_18 [1] : vector<16x128xf32> to vector<16xf32>
      %26 = vector.shape_cast %25 : vector<16xf32> to vector<16x1xf32>
      %cst_19 = arith.constant 1.280000e+02 : f32
      %27 = vector.broadcast %cst_19 : f32 to vector<16x1xf32>
      %28 = arith.divf %26, %27 : vector<16x1xf32>
      %29 = vector.broadcast %21 : vector<16x1xf32> to vector<16x128xf32>
      %30 = arith.subf %17, %29 : vector<16x128xf32>
      %cst_20 = arith.constant 9.99999974E-6 : f32
      %31 = vector.broadcast %cst_20 : f32 to vector<16x1xf32>
      %32 = arith.addf %28, %31 : vector<16x1xf32>
      %33 = math.rsqrt %32 : vector<16x1xf32>
      %34 = vector.broadcast %33 : vector<16x1xf32> to vector<16x128xf32>
      %35 = arith.mulf %30, %34 : vector<16x128xf32>
      %c0_21 = arith.constant 0 : index
      %c0_22 = arith.constant 0 : index
      %36 = vector.load %arg6[%c0_21, %c0_22] : memref<1x128xf32, #tpu.memory_space<vmem>>, vector<1x128xf32>
      %37 = vector.broadcast %36 : vector<1x128xf32> to vector<16x128xf32>
      %38 = arith.mulf %35, %37 : vector<16x128xf32>
      %c0_23 = arith.constant 0 : index
      %c0_24 = arith.constant 0 : index
      %39 = vector.load %arg7[%c0_23, %c0_24] : memref<1x128xf32, #tpu.memory_space<vmem>>, vector<1x128xf32>
      %40 = vector.broadcast %39 : vector<1x128xf32> to vector<16x128xf32>
      %41 = arith.addf %38, %40 : vector<16x128xf32>
      %c0_25 = arith.constant 0 : index
      %c0_26 = arith.constant 0 : index
      %42 = vector.load %arg8[%c0_25, %c0_26] : memref<16x128xf32, #tpu.memory_space<vmem>>, vector<16x128xf32>
      tpu.vector_store %arg8[%c0_25, %c0_26], %41 {strides = array<i32>} : memref<16x128xf32, #tpu.memory_space<vmem>>, vector<16x128xf32>,
    } else {
    }
    return
  }
  func.func @transform_0(%arg0: i32, %arg1: i32) -> (i32, i32) {
    %c0_i32 = arith.constant 0 : i32
    return %arg0, %arg1 : i32, i32
  }
  func.func @transform_1(%arg0: i32, %arg1: i32) -> (i32, i32) {
    %c0_i32 = arith.constant 0 : i32
    %c0_i32_0 = arith.constant 0 : i32
    return %arg1, %c0_i32 : i32, i32
  }
  func.func @transform_2(%arg0: i32, %arg1: i32) -> (i32, i32) {
    %c0_i32 = arith.constant 0 : i32
    %c0_i32_0 = arith.constant 0 : i32
    %c0_i32_1 = arith.constant 0 : i32
    return %c0_i32, %c0_i32_0 : i32, i32
  }
  func.func @transform_3(%arg0: i32, %arg1: i32) -> (i32, i32) {
    %c0_i32 = arith.constant 0 : i32
    %c0_i32_0 = arith.constant 0 : i32
    return %arg0, %c0_i32 : i32, i32
  }
  func.func @transform_4(%arg0: i32, %arg1: i32) -> (i32, i32) {
    %c0_i32 = arith.constant 0 : i32
    %c0_i32_0 = arith.constant 0 : i32
    %c0_i32_1 = arith.constant 0 : i32
    return %c0_i32, %c0_i32_0 : i32, i32
  }
  func.func @transform_5(%arg0: i32, %arg1: i32) -> (i32, i32) {
    %c0_i32 = arith.constant 0 : i32
    %c0_i32_0 = arith.constant 0 : i32
    %c0_i32_1 = arith.constant 0 : i32
    return %c0_i32, %c0_i32_0 : i32, i32
  }
  func.func @transform_6(%arg0: i32, %arg1: i32) -> (i32, i32) {
    %c0_i32 = arith.constant 0 : i32
    %c0_i32_0 = arith.constant 0 : i32
    return %arg0, %c0_i32 : i32, i32
  }
}

</mosaic_0001>

<llo_original>
// kernel: decoder_forward.21
$region0: #{decoder_forward.21}
  #allocation0 [shape = 'u32[]', space=smem, size = 0x4, offset = 0x4, fixed_abs, tag = 'smem constant byte address 0x4 - core index']
  #allocation1 [shape = 'u32[72,128]{1,0:T(1,128)}', space=vmem, size = 0x9000, scoped, tag = 'internal scratch']
  #allocation2 [shape = 'f32[16,128]{1,0:T(8,128)}', space=vmem, size = 0x2000, scoped, tag = 'scratch operand']
  %s0 = inlined_call_operand.vmem [shape: f32[16,128], index: 0, kind: input, shape index: {}]
  %s1 = inlined_call_operand.vmem [shape: bf16[128,128], index: 1, kind: input, shape index: {}]
  %s2 = inlined_call_operand.vmem [shape: f32[1,128], index: 2, kind: input, shape index: {}]
  %s3 = inlined_call_operand.vmem [shape: bf16[16,128], index: 3, kind: output, shape index: {}]
  %s4 = sld [smem:[#allocation0]]
  $region30: #{decoder_forward.21} parent=0
    _
  %s6 = ssub.s32 1, %s4
  %s7 = scalar_select 0, %s6, %s4
  // Predicated region
  $region2: #{decoder_forward.21} parent=0 // pred_check
    _
  $region3: #{decoder_forward.21} parent=0 // pred_check_branch
    %9 = sbr.rel (0) target = $region5
  $region4: #{decoder_forward.21} parent=0 // pred_region
    _
  $region5: #{decoder_forward.21} parent=0 // pred_fallthru
    _
  // Predicated region
  $region6: #{decoder_forward.21} parent=0 // pred_check
    _
  $region7: #{decoder_forward.21} parent=0 // pred_check_branch
    %11 = sbr.rel (0) target = $region9
  $region8: #{decoder_forward.21} parent=0 // pred_region
    _
  $region9: #{decoder_forward.21} parent=0 // pred_fallthru
    _
  // Predicated region
  $region10: #{decoder_forward.21} parent=0 // pred_check
    _
  $region11: #{decoder_forward.21} parent=0 // pred_check_branch
    %13 = sbr.rel (0) target = $region13
  $region12: #{decoder_forward.21} parent=0 // pred_region
    _
  $region13: #{decoder_forward.21} parent=0 // pred_fallthru
    _
  %p14 = scmp.eq.s32.totalorder 0, 0
  // Predicated region
  $region14: #{decoder_forward.21} parent=0 // pred_check
    %p15 = pneg %p14
  $region15: #{decoder_forward.21} parent=0 // pred_check_branch
    %17 = sbr.rel (%p15) target = $region17
  $region16: #{decoder_forward.21} parent=0 // pred_region
    %18 = vst [vmem:[#allocation2] sm:$0xff] 0.0
    %19 = vst [vmem:[#allocation2 + $0x8] sm:$0xff] 0.0
  $region17: #{decoder_forward.21} parent=0 // pred_fallthru
    _
  %v20 = vld [vmem:[#allocation2] sm:$0xff]
  %v21 = vld [vmem:[#allocation2 + $0x8] sm:$0xff]
  %v22 = vld [vmem:[%s0] sm:$0xff]
  %v23 = vld [vmem:[%s0 + $0x8] sm:$0xff]
  %v24 = vpack.c.bf16 %v23, %v22
  %v25 = vld [vmem:[%s1] sm:$0xf]
  %v26 = vld [vmem:[%s1 + $0x4] sm:$0xf]
  %v27 = vld [vmem:[%s1 + $0x8] sm:$0xf]
  %v28 = vld [vmem:[%s1 + $0xc] sm:$0xf]
  %v29 = vld [vmem:[%s1 + $0x10] sm:$0xf]
  %v30 = vld [vmem:[%s1 + $0x14] sm:$0xf]
  %v31 = vld [vmem:[%s1 + $0x18] sm:$0xf]
  %v32 = vld [vmem:[%s1 + $0x1c] sm:$0xf]
  %v33 = vld [vmem:[%s1 + $0x20] sm:$0xf]
  %v34 = vld [vmem:[%s1 + $0x24] sm:$0xf]
  %v35 = vld [vmem:[%s1 + $0x28] sm:$0xf]
  %v36 = vld [vmem:[%s1 + $0x2c] sm:$0xf]
  %v37 = vld [vmem:[%s1 + $0x30] sm:$0xf]
  %v38 = vld [vmem:[%s1 + $0x34] sm:$0xf]
  %v39 = vld [vmem:[%s1 + $0x38] sm:$0xf]
  %v40 = vld [vmem:[%s1 + $0x3c] sm:$0xf]
  %v57 = vunpack.c.l.b16 %v25
  %v58 = vunpack.c.l.b16 %v26
  %v59 = vunpack.c.l.b16 %v27
  %v60 = vunpack.c.l.b16 %v28
  %v61 = vunpack.c.l.b16 %v29
  %v62 = vunpack.c.l.b16 %v30
  %v63 = vunpack.c.l.b16 %v31
  %v64 = vunpack.c.l.b16 %v32
  %v65 = vunpack.c.l.b16 %v33
  %v66 = vunpack.c.l.b16 %v34
  %v67 = vunpack.c.l.b16 %v35
  %v68 = vunpack.c.l.b16 %v36
  %v69 = vunpack.c.l.b16 %v37
  %v70 = vunpack.c.l.b16 %v38
  %v71 = vunpack.c.l.b16 %v39
  %v72 = vunpack.c.l.b16 %v40
  %v73 = vpack.c.b16 %v58, %v57
  %v74 = vpack.c.b16 %v60, %v59
  %v75 = vpack.c.b16 %v62, %v61
  %v76 = vpack.c.b16 %v64, %v63
  %v77 = vpack.c.b16 %v66, %v65
  %v78 = vpack.c.b16 %v68, %v67
  %v79 = vpack.c.b16 %v70, %v69
  %v80 = vpack.c.b16 %v72, %v71
  %89 = vmatpush.bf16.msra.mxu0 %v80
  %90 = vmatpush.bf16.msra.mxu0 %v79
  %91 = vmatpush.bf16.msra.mxu0 %v78
  %92 = vmatpush.bf16.msra.mxu0 %v77
  %93 = vmatpush.bf16.msra.mxu0 %v76
  %94 = vmatpush.bf16.msra.mxu0 %v75
  %95 = vmatpush.bf16.msra.mxu0 %v74
  %96 = vmatpush.bf16.msra.mxu0 %v73
  %97 = vmatmul.bf16.gmra.mxu0 %v24
  %v98 = vpop.f32.mrf.mxu0
  %v99 = vadd.f32 0.0, %v98
  %v100 = vpop.f32.mrf.mxu0
  %v101 = vadd.f32 0.0, %v100
  %102 = vdwg.mxu0
  %v103 = vadd.f32 %v20, %v99
  %v104 = vadd.f32 %v21, %v101
  %105 = vst [vmem:[#allocation2] sm:$0xff] %v103
  %106 = vst [vmem:[#allocation2 + $0x8] sm:$0xff] %v104
  // Predicated region
  $region18: #{decoder_forward.21} parent=0 // pred_check
    %p107 = pneg %p14
  $region19: #{decoder_forward.21} parent=0 // pred_check_branch
    %109 = sbr.rel (%p107) target = $region21
  $region20: #{decoder_forward.21} parent=0 // pred_region
    %v110 = vld [vmem:[#allocation2] sm:$0xff]
    %v111 = vld [vmem:[#allocation2 + $0x8] sm:$0xff]
    %v112 = vld [vmem:[%s2] sm:$0x1]
    %v114 = vperm.slane %v112, 0
    %v116 = vadd.f32 %v110, %v114
    %v117 = vadd.f32 %v111, %v114
    %v118 = vpack.c.bf16 %v116, %v116
    %v119 = vpack.c.bf16 %v117, %v117
    %120 = vst [vmem:[%s3] sm:$0xf] %v118
    %121 = vst [vmem:[%s3 + $0x4] sm:$0xf] %v119
  $region21: #{decoder_forward.21} parent=0 // pred_fallthru
    _
  // Predicated region
  $region22: #{decoder_forward.21} parent=0 // pred_check
    _
  $region23: #{decoder_forward.21} parent=0 // pred_check_branch
    %123 = sbr.rel (0) target = $region25
  $region24: #{decoder_forward.21} parent=0 // pred_region
    _
  $region25: #{decoder_forward.21} parent=0 // pred_fallthru
    _
  // Predicated region
  $region26: #{decoder_forward.21} parent=0 // pred_check
    _
  $region27: #{decoder_forward.21} parent=0 // pred_check_branch
    %125 = sbr.rel (0) target = $region29
  $region28: #{decoder_forward.21} parent=0 // pred_region
    _
  $region29: #{decoder_forward.21} parent=0 // pred_fallthru
    _

// kernel: decoder_forward.20
$region0: #{decoder_forward.20}
  #allocation0 [shape = 'u32[]', space=smem, size = 0x4, offset = 0x4, fixed_abs, tag = 'smem constant byte address 0x4 - core index']
  #allocation1 [shape = 'u32[72,128]{1,0:T(1,128)}', space=vmem, size = 0x9000, scoped, tag = 'internal scratch']
  #allocation2 [shape = 'f32[16,128]{1,0:T(8,128)}', space=vmem, size = 0x2000, scoped, tag = 'scratch operand']
  %s0 = inlined_call_operand.vmem [shape: bf16[16,128], index: 0, kind: input, shape index: {}]
  %s1 = inlined_call_operand.vmem [shape: bf16[128,128], index: 1, kind: input, shape index: {}]
  %s2 = inlined_call_operand.vmem [shape: f32[1,128], index: 2, kind: input, shape index: {}]
  %s3 = inlined_call_operand.vmem [shape: f32[16,128], index: 3, kind: input, shape index: {}]
  %s4 = inlined_call_operand.vmem [shape: f32[1,128], index: 4, kind: input, shape index: {}]
  %s5 = inlined_call_operand.vmem [shape: f32[1,128], index: 5, kind: input, shape index: {}]
  %s6 = inlined_call_operand.vmem [shape: f32[16,128], index: 6, kind: output, shape index: {}]
  %s7 = sld [smem:[#allocation0]]
  $region42: #{decoder_forward.20} parent=0
    _
  %s9 = ssub.s32 1, %s7
  %s10 = scalar_select 0, %s9, %s7
  // Predicated region
  $region2: #{decoder_forward.20} parent=0 // pred_check
    _
  $region3: #{decoder_forward.20} parent=0 // pred_check_branch
    %12 = sbr.rel (0) target = $region5
  $region4: #{decoder_forward.20} parent=0 // pred_region
    _
  $region5: #{decoder_forward.20} parent=0 // pred_fallthru
    _
  // Predicated region
  $region6: #{decoder_forward.20} parent=0 // pred_check
    _
  $region7: #{decoder_forward.20} parent=0 // pred_check_branch
    %14 = sbr.rel (0) target = $region9
  $region8: #{decoder_forward.20} parent=0 // pred_region
    _
  $region9: #{decoder_forward.20} parent=0 // pred_fallthru
    _
  // Predicated region
  $region10: #{decoder_forward.20} parent=0 // pred_check
    _
  $region11: #{decoder_forward.20} parent=0 // pred_check_branch
    %16 = sbr.rel (0) target = $region13
  $region12: #{decoder_forward.20} parent=0 // pred_region
    _
  $region13: #{decoder_forward.20} parent=0 // pred_fallthru
    _
  // Predicated region
  $region14: #{decoder_forward.20} parent=0 // pred_check
    _
  $region15: #{decoder_forward.20} parent=0 // pred_check_branch
    %18 = sbr.rel (0) target = $region17
  $region16: #{decoder_forward.20} parent=0 // pred_region
    _
  $region17: #{decoder_forward.20} parent=0 // pred_fallthru
    _
  // Predicated region
  $region18: #{decoder_forward.20} parent=0 // pred_check
    _
  $region19: #{decoder_forward.20} parent=0 // pred_check_branch
    %20 = sbr.rel (0) target = $region21
  $region20: #{decoder_forward.20} parent=0 // pred_region
    _
  $region21: #{decoder_forward.20} parent=0 // pred_fallthru
    _
  // Predicated region
  $region22: #{decoder_forward.20} parent=0 // pred_check
    _
  $region23: #{decoder_forward.20} parent=0 // pred_check_branch
    %22 = sbr.rel (0) target = $region25
  $region24: #{decoder_forward.20} parent=0 // pred_region
    _
  $region25: #{decoder_forward.20} parent=0 // pred_fallthru
    _
  %p23 = scmp.eq.s32.totalorder 0, 0
  // Predicated region
  $region26: #{decoder_forward.20} parent=0 // pred_check
    %p24 = pneg %p23
  $region27: #{decoder_forward.20} parent=0 // pred_check_branch
    %26 = sbr.rel (%p24) target = $region29
  $region28: #{decoder_forward.20} parent=0 // pred_region
    %27 = vst [vmem:[#allocation2] sm:$0xff] 0.0
    %28 = vst [vmem:[#allocation2 + $0x8] sm:$0xff] 0.0
  $region29: #{decoder_forward.20} parent=0 // pred_fallthru
    _
  %v29 = vld [vmem:[#allocation2] sm:$0xff]
  %v30 = vld [vmem:[#allocation2 + $0x8] sm:$0xff]
  %v31 = vld [vmem:[%s0] sm:$0xf]
  %v32 = vld [vmem:[%s0 + $0x4] sm:$0xf]
  %v33 = vld [vmem:[%s1] sm:$0xf]
  %v34 = vld [vmem:[%s1 + $0x4] sm:$0xf]
  %v35 = vld [vmem:[%s1 + $0x8] sm:$0xf]
  %v36 = vld [vmem:[%s1 + $0xc] sm:$0xf]
  %v37 = vld [vmem:[%s1 + $0x10] sm:$0xf]
  %v38 = vld [vmem:[%s1 + $0x14] sm:$0xf]
  %v39 = vld [vmem:[%s1 + $0x18] sm:$0xf]
  %v40 = vld [vmem:[%s1 + $0x1c] sm:$0xf]
  %v41 = vld [vmem:[%s1 + $0x20] sm:$0xf]
  %v42 = vld [vmem:[%s1 + $0x24] sm:$0xf]
  %v43 = vld [vmem:[%s1 + $0x28] sm:$0xf]
  %v44 = vld [vmem:[%s1 + $0x2c] sm:$0xf]
  %v45 = vld [vmem:[%s1 + $0x30] sm:$0xf]
  %v46 = vld [vmem:[%s1 + $0x34] sm:$0xf]
  %v47 = vld [vmem:[%s1 + $0x38] sm:$0xf]
  %v48 = vld [vmem:[%s1 + $0x3c] sm:$0xf]
  %v51 = vunpack.c.l.b16 %v31
  %v52 = vunpack.c.l.b16 %v32
  %v53 = vpack.c.b16 %v52, %v51
  %v71 = vunpack.c.l.b16 %v33
  %v72 = vunpack.c.l.b16 %v34
  %v73 = vunpack.c.l.b16 %v35
  %v74 = vunpack.c.l.b16 %v36
  %v75 = vunpack.c.l.b16 %v37
  %v76 = vunpack.c.l.b16 %v38
  %v77 = vunpack.c.l.b16 %v39
  %v78 = vunpack.c.l.b16 %v40
  %v79 = vunpack.c.l.b16 %v41
  %v80 = vunpack.c.l.b16 %v42
  %v81 = vunpack.c.l.b16 %v43
  %v82 = vunpack.c.l.b16 %v44
  %v83 = vunpack.c.l.b16 %v45
  %v84 = vunpack.c.l.b16 %v46
  %v85 = vunpack.c.l.b16 %v47
  %v86 = vunpack.c.l.b16 %v48
  %v87 = vpack.c.b16 %v72, %v71
  %v88 = vpack.c.b16 %v74, %v73
  %v89 = vpack.c.b16 %v76, %v75
  %v90 = vpack.c.b16 %v78, %v77
  %v91 = vpack.c.b16 %v80, %v79
  %v92 = vpack.c.b16 %v82, %v81
  %v93 = vpack.c.b16 %v84, %v83
  %v94 = vpack.c.b16 %v86, %v85
  %103 = vmatpush.bf16.msra.mxu0 %v94
  %104 = vmatpush.bf16.msra.mxu0 %v93
  %105 = vmatpush.bf16.msra.mxu0 %v92
  %106 = vmatpush.bf16.msra.mxu0 %v91
  %107 = vmatpush.bf16.msra.mxu0 %v90
  %108 = vmatpush.bf16.msra.mxu0 %v89
  %109 = vmatpush.bf16.msra.mxu0 %v88
  %110 = vmatpush.bf16.msra.mxu0 %v87
  %111 = vmatmul.bf16.gmra.mxu0 %v53
  %v112 = vpop.f32.mrf.mxu0
  %v113 = vadd.f32 0.0, %v112
  %v114 = vpop.f32.mrf.mxu0
  %v115 = vadd.f32 0.0, %v114
  %116 = vdwg.mxu0
  %v117 = vadd.f32 %v29, %v113
  %v118 = vadd.f32 %v30, %v115
  %119 = vst [vmem:[#allocation2] sm:$0xff] %v117
  %120 = vst [vmem:[#allocation2 + $0x8] sm:$0xff] %v118
  // Predicated region
  $region30: #{decoder_forward.20} parent=0 // pred_check
    %p121 = pneg %p23
  $region31: #{decoder_forward.20} parent=0 // pred_check_branch
    %123 = sbr.rel (%p121) target = $region33
  $region32: #{decoder_forward.20} parent=0 // pred_region
    %v124 = vld [vmem:[#allocation2] sm:$0xff]
    %v125 = vld [vmem:[#allocation2 + $0x8] sm:$0xff]
    %v126 = vld [vmem:[%s2] sm:$0x1]
    %v128 = vperm.slane %v126, 0
    %v130 = vadd.f32 %v124, %v128
    %v131 = vadd.f32 %v125, %v128
    %v132 = vld [vmem:[%s3] sm:$0xff]
    %v133 = vld [vmem:[%s3 + $0x8] sm:$0xff]
    %v134 = vadd.f32 %v130, %v132
    %v135 = vadd.f32 %v131, %v133
    %136 = vadd.xlane.f32.xlu0 %v134
    %v137 = vpop.xlane.xlu0 %136
    %138 = vadd.xlane.f32.xlu0 %v135
    %v139 = vpop.xlane.xlu0 %138
    %v140 = vrcp.pop 128.0
    %v141 = vmul.f32 128.0, %v140
    %v142 = vsub.f32 1.0, %v141
    %v143 = vmul.f32 %v140, %v142
    %v144 = vadd.f32 %v140, %v143
    %vm145 = vweird.f32 %v140
    %v146 = vsel %vm145, %v140, %v144
    %v147 = vmul.f32 %v137, %v146
    %v148 = vmul.f32 %v139, %v146
    %v149 = vsub.f32 %v134, %v147
    %v150 = vsub.f32 %v135, %v148
    %v151 = vmul.f32 %v149, %v149
    %v152 = vmul.f32 %v150, %v150
    %153 = vadd.xlane.f32.xlu0 %v151
    %v154 = vpop.xlane.xlu0 %153
    %155 = vadd.xlane.f32.xlu0 %v152
    %v156 = vpop.xlane.xlu0 %155
    %v157 = vmul.f32 %v154, %v146
    %v158 = vmul.f32 %v156, %v146
    %v159 = vadd.f32 %v157, 1e-05
    %v160 = vadd.f32 %v158, 1e-05
    %v161 = vrsqrt.pop %v159
    %v162 = vmul.f32 %v161, %v159
    %v163 = vmul.f32 %v162, %v161
    %v164 = vmul.f32 0.5, %v163
    %v165 = vsub.f32 1.5, %v164
    %v166 = vmul.f32 %v161, %v165
    %vm167 = vweird.f32 %v159
    %vm168 = vweird.f32 %v161
    %vm169 = vmor %vm167, %vm168
    %v170 = vsel %vm169, %v161, %v166
    %v171 = vrsqrt.pop %v160
    %v172 = vmul.f32 %v171, %v160
    %v173 = vmul.f32 %v172, %v171
    %v174 = vmul.f32 0.5, %v173
    %v175 = vsub.f32 1.5, %v174
    %v176 = vmul.f32 %v171, %v175
    %vm177 = vweird.f32 %v160
    %vm178 = vweird.f32 %v171
    %vm179 = vmor %vm177, %vm178
    %v180 = vsel %vm179, %v171, %v176
    %v181 = vmul.f32 %v149, %v170
    %v182 = vmul.f32 %v150, %v180
    %v183 = vld [vmem:[%s4] sm:$0x1]
    %v185 = vperm.slane %v183, 0
    %v187 = vmul.f32 %v181, %v185
    %v188 = vmul.f32 %v182, %v185
    %v189 = vld [vmem:[%s5] sm:$0x1]
    %v191 = vperm.slane %v189, 0
    %v193 = vadd.f32 %v187, %v191
    %v194 = vadd.f32 %v188, %v191
    %195 = vst [vmem:[%s6] sm:$0xff] %v193
    %196 = vst [vmem:[%s6 + $0x8] sm:$0xff] %v194
  $region33: #{decoder_forward.20} parent=0 // pred_fallthru
    _
  // Predicated region
  $region34: #{decoder_forward.20} parent=0 // pred_check
    _
  $region35: #{decoder_forward.20} parent=0 // pred_check_branch
    %198 = sbr.rel (0) target = $region37
  $region36: #{decoder_forward.20} parent=0 // pred_region
    _
  $region37: #{decoder_forward.20} parent=0 // pred_fallthru
    _
  // Predicated region
  $region38: #{decoder_forward.20} parent=0 // pred_check
    _
  $region39: #{decoder_forward.20} parent=0 // pred_check_branch
    %200 = sbr.rel (0) target = $region41
  $region40: #{decoder_forward.20} parent=0 // pred_region
    _
  $region41: #{decoder_forward.20} parent=0 // pred_fallthru
    _

// kernel: decoder_forward.19
$region0: #{decoder_forward.19}
  #allocation0 [shape = 'u32[]', space=smem, size = 0x4, offset = 0x4, fixed_abs, tag = 'smem constant byte address 0x4 - core index']
  #allocation1 [shape = 'u32[72,128]{1,0:T(1,128)}', space=vmem, size = 0x9000, scoped, tag = 'internal scratch']
  %s0 = inlined_call_operand.vmem [shape: bf16[2,8,384], index: 0, kind: input, shape index: {}, may-alias: {0,1,2}]
  %s1 = inlined_call_operand.vmem [shape: bf16[2,8,384], index: 1, kind: input, shape index: {}, may-alias: {0,1,2}]
  %s2 = inlined_call_operand.vmem [shape: bf16[2,8,384], index: 2, kind: input, shape index: {}, may-alias: {0,1,2}]
  %s3 = inlined_call_operand.vmem [shape: f32[8,8], index: 3, kind: input, shape index: {}]
  %s4 = inlined_call_operand.vmem [shape: f32[2,1,8], index: 4, kind: input, shape index: {}]
  %s5 = inlined_call_operand.vmem [shape: bf16[2,8,128], index: 5, kind: output, shape index: {0}]
  %s6 = inlined_call_operand.hbm [shape: f32[2,4,8,8], index: 6, kind: output, shape index: {1}]
  %7 = xla_tuple %s5, %s6
  %s8 = sld [smem:[#allocation0]]
  $region61: #{decoder_forward.19} parent=0
    _
  %s10 = ssub.s32 1, %s8
  %s11 = scalar_select 0, %s10, %s8
  $region1: #{decoder_forward.19} parent=0
    #allocation2 [shape = 'u8[32768]{0}', space=vmem, size = 0x8000, scoped, tag = 'output window, operand 1']
    #allocation3 [shape = 's32[2]{0}', space=sflag, size = 0x8, scoped, tag = 'scoped memory for decoder_forward.19']
    %12 = vsyncpa [#allocation3], 0
    %s13 = scalar_lea.sflag [#allocation3], 1
    %14 = vsyncpa %s13, 0
    loop: start=0, step=1, limit=4
    $region2: #{decoder_forward.19} parent=1 // loop_pre_header
      _
    $region3: #{decoder_forward.19} parent=1 // loop_header
      %s16 = sphi 0, %s20
      %p17 = scmp.ge.s32.totalorder %s16, 4
      %s23 = sphi 0, %s35
      %s24 = sphi 0, %s31
      %s25 = sphi 0, %s23
      %s26 = sphi 0, %s24
      %s27 = sphi 0, %s25
      %s28 = sphi 0, %s26
      %s40 = sphi 0, %s42
      %s43 = sphi 0, %s40
      %s44 = sphi 0, %s43
      %s60 = sphi 0, %s44
      %s66 = sphi 0, %s68
      %s69 = sphi 0, %s66
      %s70 = sphi 0, %s69
      %s86 = sphi 0, %s70
      %s92 = sphi 0, %s94
      %s95 = sphi 0, %s92
      %s96 = sphi 0, %s95
      %s112 = sphi 0, %s96
      %s118 = sphi 0, %s120
      %s121 = sphi 0, %s118
      %s122 = sphi 0, %s121
      %s138 = sphi 0, %s122
      %s144 = sphi 0, %s146
      %s147 = sphi 0, %s144
      %s148 = sphi 0, %s147
      %s164 = sphi 0, %s148
      %s172 = sphi 0, %s174
      %s175 = sphi 0, %s172
      %s176 = sphi 0, %s175
      %s192 = sphi 0, %s176
      %s200 = sphi 0, %s202
      %s203 = sphi 0, %s200
      %s204 = sphi 0, %s203
      %s220 = sphi 0, %s204
    $region4: #{decoder_forward.19} parent=1 // loop_header_branch
      %19 = sbr.rel (%p17) target = $region8
    $region5: #{decoder_forward.19} parent=1 // loop_body
      %s21 = ssub.s32 %s16, 1
      %s22 = ssub.s32 %s16, 2
      %s29 = sadd.s32 1, %s24
      %p30 = scmp.ge.s32.totalorder %s29, 1
      %s31 = scalar_select %p30, 0, %s29
      %s32 = sadd.s32 1, %s23
      %s33 = scalar_select %p30, %s32, %s23
      %p34 = scmp.ge.s32.totalorder %s33, 2
      %s35 = scalar_select %p34, 0, %s33
      %s36 = ssub.s32 %s23, %s35
      %s37 = ssub.s32 %s24, %s31
      %s38 = sor.u32 %s36, %s37
      %p39 = scmp.eq.s32.totalorder %s38, 0
      %s41 = sadd.s32 %s40, 1
      %s42 = scalar_select %p39, %s40, %s41
      %p45 = pneg %p39
      %p46 = scmp.eq.s32.totalorder %s16, 1
      %p47 = por %p45, %p46
      %p48 = scmp.ne.s32.totalorder %s40, %s43
      %p49 = scmp.eq.s32.totalorder %s16, 0
      %p50 = por %p48, %p49
      %p51 = scmp.ne.s32.totalorder %s40, %s43
      %p52 = scmp.eq.s32.totalorder %s21, 1
      %p53 = por %p51, %p52
      %p54 = scmp.ne.s32.totalorder %s43, %s44
      %p55 = scmp.eq.s32.totalorder %s21, 0
      %p56 = por %p54, %p55
      %p57 = scmp.ne.s32.totalorder %s43, %s44
      %p58 = scmp.eq.s32.totalorder %s22, 1
      %p59 = por %p57, %p58
      %p61 = scmp.ne.s32.totalorder %s44, %s60
      %p62 = scmp.eq.s32.totalorder %s22, 0
      %p63 = por %p61, %p62
      %s64 = ssub.s32 %s23, %s35
      %p65 = scmp.eq.s32.totalorder %s64, 0
      %s67 = sadd.s32 %s66, 1
      %s68 = scalar_select %p65, %s66, %s67
      %p71 = pneg %p65
      %p72 = scmp.eq.s32.totalorder %s16, 1
      %p73 = por %p71, %p72
      %p74 = scmp.ne.s32.totalorder %s66, %s69
      %p75 = scmp.eq.s32.totalorder %s16, 0
      %p76 = por %p74, %p75
      %p77 = scmp.ne.s32.totalorder %s66, %s69
      %p78 = scmp.eq.s32.totalorder %s21, 1
      %p79 = por %p77, %p78
      %p80 = scmp.ne.s32.totalorder %s69, %s70
      %p81 = scmp.eq.s32.totalorder %s21, 0
      %p82 = por %p80, %p81
      %p83 = scmp.ne.s32.totalorder %s69, %s70
      %p84 = scmp.eq.s32.totalorder %s22, 1
      %p85 = por %p83, %p84
      %p87 = scmp.ne.s32.totalorder %s70, %s86
      %p88 = scmp.eq.s32.totalorder %s22, 0
      %p89 = por %p87, %p88
      %s90 = ssub.s32 %s23, %s35
      %p91 = scmp.eq.s32.totalorder %s90, 0
      %s93 = sadd.s32 %s92, 1
      %s94 = scalar_select %p91, %s92, %s93
      %p97 = pneg %p91
      %p98 = scmp.eq.s32.totalorder %s16, 1
      %p99 = por %p97, %p98
      %p100 = scmp.ne.s32.totalorder %s92, %s95
      %p101 = scmp.eq.s32.totalorder %s16, 0
      %p102 = por %p100, %p101
      %p103 = scmp.ne.s32.totalorder %s92, %s95
      %p104 = scmp.eq.s32.totalorder %s21, 1
      %p105 = por %p103, %p104
      %p106 = scmp.ne.s32.totalorder %s95, %s96
      %p107 = scmp.eq.s32.totalorder %s21, 0
      %p108 = por %p106, %p107
      %p109 = scmp.ne.s32.totalorder %s95, %s96
      %p110 = scmp.eq.s32.totalorder %s22, 1
      %p111 = por %p109, %p110
      %p113 = scmp.ne.s32.totalorder %s96, %s112
      %p114 = scmp.eq.s32.totalorder %s22, 0
      %p115 = por %p113, %p114
      %s116 = ssub.s32 %s24, %s31
      %p117 = scmp.eq.s32.totalorder %s116, 0
      %s119 = sadd.s32 %s118, 1
      %s120 = scalar_select %p117, %s118, %s119
      %p123 = pneg %p117
      %p124 = scmp.eq.s32.totalorder %s16, 1
      %p125 = por %p123, %p124
      %p126 = scmp.ne.s32.totalorder %s118, %s121
      %p127 = scmp.eq.s32.totalorder %s16, 0
      %p128 = por %p126, %p127
      %p129 = scmp.ne.s32.totalorder %s118, %s121
      %p130 = scmp.eq.s32.totalorder %s21, 1
      %p131 = por %p129, %p130
      %p132 = scmp.ne.s32.totalorder %s121, %s122
      %p133 = scmp.eq.s32.totalorder %s21, 0
      %p134 = por %p132, %p133
      %p135 = scmp.ne.s32.totalorder %s121, %s122
      %p136 = scmp.eq.s32.totalorder %s22, 1
      %p137 = por %p135, %p136
      %p139 = scmp.ne.s32.totalorder %s122, %s138
      %p140 = scmp.eq.s32.totalorder %s22, 0
      %p141 = por %p139, %p140
      %s142 = ssub.s32 %s23, %s35
      %p143 = scmp.eq.s32.totalorder %s142, 0
      %s145 = sadd.s32 %s144, 1
      %s146 = scalar_select %p143, %s144, %s145
      %p149 = pneg %p143
      %p150 = scmp.eq.s32.totalorder %s16, 1
      %p151 = por %p149, %p150
      %p152 = scmp.ne.s32.totalorder %s144, %s147
      %p153 = scmp.eq.s32.totalorder %s16, 0
      %p154 = por %p152, %p153
      %p155 = scmp.ne.s32.totalorder %s144, %s147
      %p156 = scmp.eq.s32.totalorder %s21, 1
      %p157 = por %p155, %p156
      %p158 = scmp.ne.s32.totalorder %s147, %s148
      %p159 = scmp.eq.s32.totalorder %s21, 0
      %p160 = por %p158, %p159
      %p161 = scmp.ne.s32.totalorder %s147, %s148
      %p162 = scmp.eq.s32.totalorder %s22, 1
      %p163 = por %p161, %p162
      %p165 = scmp.ne.s32.totalorder %s148, %s164
      %p166 = scmp.eq.s32.totalorder %s22, 0
      %p167 = por %p165, %p166
      %s168 = ssub.s32 %s23, %s35
      %s169 = ssub.s32 %s24, %s31
      %s170 = sor.u32 %s168, %s169
      %p171 = scmp.eq.s32.totalorder %s170, 0
      %s173 = sadd.s32 %s172, 1
      %s174 = scalar_select %p171, %s172, %s173
      %p177 = pneg %p171
      %p178 = scmp.eq.s32.totalorder %s16, 1
      %p179 = por %p177, %p178
      %p180 = scmp.ne.s32.totalorder %s172, %s175
      %p181 = scmp.eq.s32.totalorder %s16, 0
      %p182 = por %p180, %p181
      %p183 = scmp.ne.s32.totalorder %s172, %s175
      %p184 = scmp.eq.s32.totalorder %s21, 1
      %p185 = por %p183, %p184
      %p186 = scmp.ne.s32.totalorder %s175, %s176
      %p187 = scmp.eq.s32.totalorder %s21, 0
      %p188 = por %p186, %p187
      %p189 = scmp.ne.s32.totalorder %s175, %s176
      %p190 = scmp.eq.s32.totalorder %s22, 1
      %p191 = por %p189, %p190
      %p193 = scmp.ne.s32.totalorder %s176, %s192
      %p194 = scmp.eq.s32.totalorder %s22, 0
      %p195 = por %p193, %p194
      %s196 = ssub.s32 %s23, %s35
      %s197 = ssub.s32 %s24, %s31
      %s198 = sor.u32 %s196, %s197
      %p199 = scmp.eq.s32.totalorder %s198, 0
      %s201 = sadd.s32 %s200, 1
      %s202 = scalar_select %p199, %s200, %s201
      %p205 = pneg %p199
      %p206 = scmp.eq.s32.totalorder %s16, 1
      %p207 = por %p205, %p206
      %p208 = scmp.ne.s32.totalorder %s200, %s203
      %p209 = scmp.eq.s32.totalorder %s16, 0
      %p210 = por %p208, %p209
      %p211 = scmp.ne.s32.totalorder %s200, %s203
      %p212 = scmp.eq.s32.totalorder %s21, 1
      %p213 = por %p211, %p212
      %p214 = scmp.ne.s32.totalorder %s203, %s204
      %p215 = scmp.eq.s32.totalorder %s21, 0
      %p216 = por %p214, %p215
      %p217 = scmp.ne.s32.totalorder %s203, %s204
      %p218 = scmp.eq.s32.totalorder %s22, 1
      %p219 = por %p217, %p218
      %p221 = scmp.ne.s32.totalorder %s204, %s220
      %p222 = scmp.eq.s32.totalorder %s22, 0
      %p223 = por %p221, %p222
      %p224 = scmp.le.s32.totalorder 1, %s16
      %p225 = scmp.lt.s32.totalorder %s16, 3
      %p226 = pnand %p224, %p225
      %p227 = pneg %p226
      // Predicated region
      $region9: #{decoder_forward.19} parent=5 // pred_check
        _
      $region10: #{decoder_forward.19} parent=5 // pred_check_branch
        %229 = sbr.rel (%p226) target = $region12
      $region11: #{decoder_forward.19} parent=5 // pred_region
        %s230 = ssub.s32 %s16, 1
        // Predicated region
        $region13: #{decoder_forward.19} parent=11 // pred_check
          %p231 = pneg %p134
        $region14: #{decoder_forward.19} parent=11 // pred_check_branch
          %233 = sbr.rel (%p231) target = $region16
        $region15: #{decoder_forward.19} parent=11 // pred_region
          %p234 = scmp.lt.s32.totalorder %s26, 0
          %s235 = scalar_select %p234, %s26, 0
          %s236 = smul.addr %s235, 8
          %s237 = scalar_lea.vmem %s3, %s236
        $region16: #{decoder_forward.19} parent=11 // pred_fallthru
          _
      $region12: #{decoder_forward.19} parent=5 // pred_fallthru
        _
      %p238 = scmp.lt.s32.totalorder %s16, 2
      // Predicated region
      $region17: #{decoder_forward.19} parent=5 // pred_check
        %p239 = pneg %p238
      $region18: #{decoder_forward.19} parent=5 // pred_check_branch
        %241 = sbr.rel (%p239) target = $region20
      $region19: #{decoder_forward.19} parent=5 // pred_region
        // Predicated region
        $region21: #{decoder_forward.19} parent=19 // pred_check
          %p242 = pneg %p50
        $region22: #{decoder_forward.19} parent=19 // pred_check_branch
          %244 = sbr.rel (%p242) target = $region24
        $region23: #{decoder_forward.19} parent=19 // pred_region
          %p245 = scmp.lt.s32.totalorder %s23, 1
          %s246 = scalar_select %p245, %s23, 1
          %p247 = scmp.lt.s32.totalorder %s24, 0
          %s248 = scalar_select %p247, %s24, 0
          %s249 = smul.addr %s248, 3
          %s250 = smul.addr %s246, 3
          %s251 = sadd.s32 %s249, %s250
          %s252 = smul.addr %s251, 4
          %s253 = scalar_lea.vmem %s0, %s252
        $region24: #{decoder_forward.19} parent=19 // pred_fallthru
          _
        // Predicated region
        $region25: #{decoder_forward.19} parent=19 // pred_check
          %p254 = pneg %p76
        $region26: #{decoder_forward.19} parent=19 // pred_check_branch
          %256 = sbr.rel (%p254) target = $region28
        $region27: #{decoder_forward.19} parent=19 // pred_region
          %p257 = scmp.lt.s32.totalorder %s23, 1
          %s258 = scalar_select %p257, %s23, 1
          %s259 = smul.addr %s258, 3
          %s260 = sadd.s32 1, %s259
          %s261 = smul.addr %s260, 4
          %s262 = scalar_lea.vmem %s1, %s261
        $region28: #{decoder_forward.19} parent=19 // pred_fallthru
          _
        // Predicated region
        $region29: #{decoder_forward.19} parent=19 // pred_check
          %p263 = pneg %p102
        $region30: #{decoder_forward.19} parent=19 // pred_check_branch
          %265 = sbr.rel (%p263) target = $region32
        $region31: #{decoder_forward.19} parent=19 // pred_region
          %p266 = scmp.lt.s32.totalorder %s23, 1
          %s267 = scalar_select %p266, %s23, 1
          %s268 = smul.addr %s267, 3
          %s269 = sadd.s32 2, %s268
          %s270 = smul.addr %s269, 4
          %s271 = scalar_lea.vmem %s2, %s270
        $region32: #{decoder_forward.19} parent=19 // pred_fallthru
          _
        // Predicated region
        $region33: #{decoder_forward.19} parent=19 // pred_check
          %p272 = pneg %p154
        $region34: #{decoder_forward.19} parent=19 // pred_check_branch
          %274 = sbr.rel (%p272) target = $region36
        $region35: #{decoder_forward.19} parent=19 // pred_region
          %p275 = scmp.lt.s32.totalorder %s23, 1
          %s276 = scalar_select %p275, %s23, 1
          %s277 = scalar_lea.vmem %s4, %s276
        $region36: #{decoder_forward.19} parent=19 // pred_fallthru
          _
      $region20: #{decoder_forward.19} parent=5 // pred_fallthru
        _
      %p278 = scmp.le.s32.totalorder 1, %s16
      %p279 = scmp.lt.s32.totalorder %s16, 3
      %p280 = pnand %p278, %p279
      %p281 = pneg %p280
      // Predicated region
      $region37: #{decoder_forward.19} parent=5 // pred_check
        _
      $region38: #{decoder_forward.19} parent=5 // pred_check_branch
        %283 = sbr.rel (%p280) target = $region40
      $region39: #{decoder_forward.19} parent=5 // pred_region
        %s284 = ssub.s32 %s16, 1
        %p285 = scmp.lt.s32.totalorder %s25, 1
        %s286 = scalar_select %p285, %s25, 1
        %p287 = scmp.lt.s32.totalorder %s26, 0
        %s288 = scalar_select %p287, %s26, 0
        %s289 = smul.addr %s288, 3
        %s290 = smul.addr %s286, 3
        %s291 = sadd.s32 %s289, %s290
        %s292 = smul.addr %s291, 4
        %s293 = scalar_lea.vmem %s0, %s292
        %p294 = pneg %p56
        %p295 = pneg %p53
        %p296 = scmp.lt.s32.totalorder %s25, 1
        %s297 = scalar_select %p296, %s25, 1
        %s298 = smul.addr %s297, 3
        %s299 = sadd.s32 1, %s298
        %s300 = smul.addr %s299, 4
        %s301 = scalar_lea.vmem %s1, %s300
        %p302 = pneg %p82
        %p303 = pneg %p79
        %p304 = scmp.lt.s32.totalorder %s25, 1
        %s305 = scalar_select %p304, %s25, 1
        %s306 = smul.addr %s305, 3
        %s307 = sadd.s32 2, %s306
        %s308 = smul.addr %s307, 4
        %s309 = scalar_lea.vmem %s2, %s308
        %p310 = pneg %p108
        %p311 = pneg %p105
        %p312 = scmp.lt.s32.totalorder %s26, 0
        %s313 = scalar_select %p312, %s26, 0
        %s314 = smul.addr %s313, 8
        %s315 = scalar_lea.vmem %s3, %s314
        %p316 = pneg %p134
        %p317 = pneg %p131
        %p318 = scmp.lt.s32.totalorder %s25, 1
        %s319 = scalar_select %p318, %s25, 1
        %s320 = scalar_lea.vmem %s4, %s319
        %p321 = pneg %p160
        %p322 = pneg %p157
        %p323 = pneg %p188
        %p324 = pneg %p185
        %p325 = scmp.lt.s32.totalorder %s25, 1
        %s326 = scalar_select %p325, %s25, 1
        %p327 = scmp.lt.s32.totalorder %s26, 0
        %s328 = scalar_select %p327, %s26, 0
        %s329 = sadd.s32 %s328, %s326
        %s330 = smul.addr %s329, 4
        %s331 = scalar_lea.vmem %s5, %s330
        %p332 = pneg %p216
        %p333 = pneg %p213
        %s334 = sand.u32 %s203, 1
        %s335 = scalar_lea.sflag [#allocation3], %s334
        %s336 = sand.u32 %s203, 1
        %s337 = smul.addr %s336, 32
        %s338 = scalar_lea.vmem [#allocation2], %s337
        %p339 = scmp.lt.s32.totalorder %s25, 1
        %s340 = scalar_select %p339, %s25, 1
        %p341 = scmp.lt.s32.totalorder %s26, 0
        %s342 = scalar_select %p341, %s26, 0
        %s343 = smul.addr %s342, 3
        %s344 = smul.addr %s340, 3
        %s345 = sadd.s32 %s343, %s344
        %s346 = smul.addr %s345, 4
        %s347 = scalar_lea.vmem %s0, %s346
        %p348 = scmp.lt.s32.totalorder %s25, 1
        %s349 = scalar_select %p348, %s25, 1
        %s350 = smul.addr %s349, 3
        %s351 = sadd.s32 1, %s350
        %s352 = smul.addr %s351, 4
        %s353 = scalar_lea.vmem %s1, %s352
        %p354 = scmp.lt.s32.totalorder %s25, 1
        %s355 = scalar_select %p354, %s25, 1
        %s356 = smul.addr %s355, 3
        %s357 = sadd.s32 2, %s356
        %s358 = smul.addr %s357, 4
        %s359 = scalar_lea.vmem %s2, %s358
        %p360 = scmp.lt.s32.totalorder %s26, 0
        %s361 = scalar_select %p360, %s26, 0
        %s362 = smul.addr %s361, 8
        %s363 = scalar_lea.vmem %s3, %s362
        %p364 = scmp.lt.s32.totalorder %s25, 1
        %s365 = scalar_select %p364, %s25, 1
        %s366 = scalar_lea.vmem %s4, %s365
        %p367 = scmp.lt.s32.totalorder %s25, 1
        %s368 = scalar_select %p367, %s25, 1
        %p369 = scmp.lt.s32.totalorder %s26, 0
        %s370 = scalar_select %p369, %s26, 0
        %s371 = sadd.s32 %s370, %s368
        %s372 = smul.addr %s371, 4
        %s373 = scalar_lea.vmem %s5, %s372
        %v375 = vld [vmem:[%s347] sm:$0xf]
        %v376 = vld [vmem:[%s353] sm:$0xf]
        %v377 = vld [vmem:[%s359] sm:$0xf]
        %v378 = vld [vmem:[%s363] sm:$0xff]
        %v379 = vld [vmem:[%s366] sm:$0x1]
        %v381 = vperm.slane %v379, 0
        %v383 = vadd.f32 %v378, %v381
        %v384 = vunpack.c.l.bf16 %v375
        %v385 = vmul.f32 %v384, 0.17675781
        %v386 = vpack.c.bf16 %v385, %v385
        %vm387 = vcmask 261120
        %v389 = vsel %vm387, %v386, 0
        %v392 = vsel %vm387, %v376, 0
        %394 = vmatpush.bf16.xpose.msra.mxu0 0
        %395 = vmatpush.bf16.xpose.msra.mxu0 0
        %396 = vmatpush.bf16.xpose.msra.mxu0 0
        %397 = vmatpush.bf16.xpose.msra.mxu0 0
        %398 = vmatpush.bf16.xpose.msra.mxu0 0
        %399 = vmatpush.bf16.xpose.msra.mxu0 0
        %400 = vmatpush.bf16.xpose.msra.mxu0 0
        %401 = vmatpush.bf16.xpose.msra.mxu0 %v392
        %402 = vmatmul.bf16.gmra.mxu0 %v389
        %v403 = vpop.f32.mrf.mxu0
        %v404 = vadd.f32 %v383, %v403
        %v405 = vpop.f32.mrf.mxu0
        %406 = vdwg.mxu0
        %vm407 = vcmask 64512
        %v408 = vsel %vm407, %v404, -inf
        %409 = vmax.xlane.f32.xlu0 %v408
        %v410 = vpop.xlane.xlu0 %409
        %v411 = vsub.f32 %v404, %v410
        %v412 = vmul.f32 %v411, 1.442695
        %v413 = vpow.pop %v412
        %v414 = vsel %vm407, %v413, 0.0
        %415 = vadd.xlane.f32.xlu0 %v414
        %v416 = vpop.xlane.xlu0 %415
        %v417 = vrcp.pop %v416
        %v418 = vmul.f32 %v416, %v417
        %v419 = vsub.f32 1.0, %v418
        %v420 = vmul.f32 %v417, %v419
        %v421 = vadd.f32 %v417, %v420
        %vm422 = vweird.f32 %v416
        %vm423 = vweird.f32 %v417
        %vm424 = vmor %vm422, %vm423
        %v425 = vsel %vm424, %v417, %v421
        %v426 = vand.u32 2147483647, %v416
        %vm427 = vcmp.eq.f32.partialorder %v426, 8.507059e+37
        %v428 = vand.u32 %v416, 2147483648
        %v429 = vor.u32 1.1754944e-38, %v428
        %v430 = vsel %vm427, %v429, %v425
        %v431 = vmul.f32 %v413, %v430
        %432 = vst.msk [vmem:[%s338] sm:$0xff] %vm407, %v431
        %v433 = vpack.c.bf16 %v431, %v431
        %v435 = vsel %vm407, %v433, 0
        %vm437 = vcmask 1043456
        %v439 = vsel %vm437, %v377, 0
        %441 = vmatpush.bf16.msra.mxu0 0
        %442 = vmatpush.bf16.msra.mxu0 0
        %443 = vmatpush.bf16.msra.mxu0 0
        %444 = vmatpush.bf16.msra.mxu0 0
        %445 = vmatpush.bf16.msra.mxu0 0
        %446 = vmatpush.bf16.msra.mxu0 0
        %447 = vmatpush.bf16.msra.mxu0 0
        %448 = vmatpush.bf16.msra.mxu0 %v439
        %449 = vmatmul.bf16.gmra.mxu0 %v435
        %v450 = vpop.f32.mrf.mxu0
        %v451 = vadd.f32 0.0, %v450
        %v452 = vpop.f32.mrf.mxu0
        %453 = vdwg.mxu0
        %455 = vrot.lane.b32.xlu0 %v386, 96
        %v456 = vpop.permute.xlu0 %455
        %v458 = vunpack.c.l.b16 %v376
        %v459 = vpack.c.b16 %v458, %v458
        %460 = vrot.lane.b32.xlu0 %v459, 96
        %v461 = vpop.permute.xlu0 %460
        %v463 = vsel %vm387, %v456, 0
        %v466 = vsel %vm387, %v461, 0
        %468 = vmatpush.bf16.xpose.msra.mxu0 0
        %469 = vmatpush.bf16.xpose.msra.mxu0 0
        %470 = vmatpush.bf16.xpose.msra.mxu0 0
        %471 = vmatpush.bf16.xpose.msra.mxu0 0
        %472 = vmatpush.bf16.xpose.msra.mxu0 0
        %473 = vmatpush.bf16.xpose.msra.mxu0 0
        %474 = vmatpush.bf16.xpose.msra.mxu0 0
        %475 = vmatpush.bf16.xpose.msra.mxu0 %v466
        %476 = vmatmul.bf16.gmra.mxu0 %v463
        %v477 = vpop.f32.mrf.mxu0
        %v478 = vadd.f32 %v383, %v477
        %v479 = vpop.f32.mrf.mxu0
        %480 = vdwg.mxu0
        %v481 = vsel %vm407, %v478, -inf
        %482 = vmax.xlane.f32.xlu0 %v481
        %v483 = vpop.xlane.xlu0 %482
        %v484 = vsub.f32 %v478, %v483
        %v485 = vmul.f32 %v484, 1.442695
        %v486 = vpow.pop %v485
        %v487 = vsel %vm407, %v486, 0.0
        %488 = vadd.xlane.f32.xlu0 %v487
        %v489 = vpop.xlane.xlu0 %488
        %v490 = vrcp.pop %v489
        %v491 = vmul.f32 %v489, %v490
        %v492 = vsub.f32 1.0, %v491
        %v493 = vmul.f32 %v490, %v492
        %v494 = vadd.f32 %v490, %v493
        %vm495 = vweird.f32 %v489
        %vm496 = vweird.f32 %v490
        %vm497 = vmor %vm495, %vm496
        %v498 = vsel %vm497, %v490, %v494
        %v499 = vand.u32 2147483647, %v489
        %vm500 = vcmp.eq.f32.partialorder %v499, 8.507059e+37
        %v501 = vand.u32 %v489, 2147483648
        %v502 = vor.u32 1.1754944e-38, %v501
        %v503 = vsel %vm500, %v502, %v498
        %v504 = vmul.f32 %v486, %v503
        %s505 = scalar_lea.vmem %s338, 8 [#allocation2]
        %506 = vst.msk [vmem:[%s505] sm:$0xff] %vm407, %v504
        %v507 = vpack.c.bf16 %v504, %v504
        %v509 = vunpack.c.l.b16 %v377
        %v510 = vpack.c.b16 %v509, %v509
        %511 = vrot.lane.b32.xlu0 %v510, 96
        %v512 = vpop.permute.xlu0 %511
        %v514 = vsel %vm407, %v507, 0
        %v517 = vsel %vm437, %v512, 0
        %519 = vmatpush.bf16.msra.mxu0 0
        %520 = vmatpush.bf16.msra.mxu0 0
        %521 = vmatpush.bf16.msra.mxu0 0
        %522 = vmatpush.bf16.msra.mxu0 0
        %523 = vmatpush.bf16.msra.mxu0 0
        %524 = vmatpush.bf16.msra.mxu0 0
        %525 = vmatpush.bf16.msra.mxu0 0
        %526 = vmatpush.bf16.msra.mxu0 %v517
        %527 = vmatmul.bf16.gmra.mxu0 %v514
        %v528 = vpop.f32.mrf.mxu0
        %v529 = vadd.f32 0.0, %v528
        %v530 = vpop.f32.mrf.mxu0
        %531 = vdwg.mxu0
        %532 = vrot.lane.b32.xlu0 %v386, 64
        %v533 = vpop.permute.xlu0 %532
        %534 = vrot.lane.b32.xlu0 %v459, 64
        %v535 = vpop.permute.xlu0 %534
        %v537 = vsel %vm387, %v533, 0
        %v540 = vsel %vm387, %v535, 0
        %542 = vmatpush.bf16.xpose.msra.mxu0 0
        %543 = vmatpush.bf16.xpose.msra.mxu0 0
        %544 = vmatpush.bf16.xpose.msra.mxu0 0
        %545 = vmatpush.bf16.xpose.msra.mxu0 0
        %546 = vmatpush.bf16.xpose.msra.mxu0 0
        %547 = vmatpush.bf16.xpose.msra.mxu0 0
        %548 = vmatpush.bf16.xpose.msra.mxu0 0
        %549 = vmatpush.bf16.xpose.msra.mxu0 %v540
        %550 = vmatmul.bf16.gmra.mxu0 %v537
        %v551 = vpop.f32.mrf.mxu0
        %v552 = vadd.f32 %v383, %v551
        %v553 = vpop.f32.mrf.mxu0
        %554 = vdwg.mxu0
        %v555 = vsel %vm407, %v552, -inf
        %556 = vmax.xlane.f32.xlu0 %v555
        %v557 = vpop.xlane.xlu0 %556
        %v558 = vsub.f32 %v552, %v557
        %v559 = vmul.f32 %v558, 1.442695
        %v560 = vpow.pop %v559
        %v561 = vsel %vm407, %v560, 0.0
        %562 = vadd.xlane.f32.xlu0 %v561
        %v563 = vpop.xlane.xlu0 %562
        %v564 = vrcp.pop %v563
        %v565 = vmul.f32 %v563, %v564
        %v566 = vsub.f32 1.0, %v565
        %v567 = vmul.f32 %v564, %v566
        %v568 = vadd.f32 %v564, %v567
        %vm569 = vweird.f32 %v563
        %vm570 = vweird.f32 %v564
        %vm571 = vmor %vm569, %vm570
        %v572 = vsel %vm571, %v564, %v568
        %v573 = vand.u32 2147483647, %v563
        %vm574 = vcmp.eq.f32.partialorder %v573, 8.507059e+37
        %v575 = vand.u32 %v563, 2147483648
        %v576 = vor.u32 1.1754944e-38, %v575
        %v577 = vsel %vm574, %v576, %v572
        %v578 = vmul.f32 %v560, %v577
        %s579 = scalar_lea.vmem %s338, 16 [#allocation2]
        %580 = vst.msk [vmem:[%s579] sm:$0xff] %vm407, %v578
        %v581 = vpack.c.bf16 %v578, %v578
        %582 = vrot.lane.b32.xlu0 %v510, 64
        %v583 = vpop.permute.xlu0 %582
        %v585 = vsel %vm407, %v581, 0
        %v588 = vsel %vm437, %v583, 0
        %590 = vmatpush.bf16.msra.mxu0 0
        %591 = vmatpush.bf16.msra.mxu0 0
        %592 = vmatpush.bf16.msra.mxu0 0
        %593 = vmatpush.bf16.msra.mxu0 0
        %594 = vmatpush.bf16.msra.mxu0 0
        %595 = vmatpush.bf16.msra.mxu0 0
        %596 = vmatpush.bf16.msra.mxu0 0
        %597 = vmatpush.bf16.msra.mxu0 %v588
        %598 = vmatmul.bf16.gmra.mxu0 %v585
        %v599 = vpop.f32.mrf.mxu0
        %v600 = vadd.f32 0.0, %v599
        %v601 = vpop.f32.mrf.mxu0
        %602 = vdwg.mxu0
        %603 = vrot.lane.b32.xlu0 %v386, 32
        %v604 = vpop.permute.xlu0 %603
        %605 = vrot.lane.b32.xlu0 %v459, 32
        %v606 = vpop.permute.xlu0 %605
        %v608 = vsel %vm387, %v604, 0
        %v611 = vsel %vm387, %v606, 0
        %613 = vmatpush.bf16.xpose.msra.mxu0 0
        %614 = vmatpush.bf16.xpose.msra.mxu0 0
        %615 = vmatpush.bf16.xpose.msra.mxu0 0
        %616 = vmatpush.bf16.xpose.msra.mxu0 0
        %617 = vmatpush.bf16.xpose.msra.mxu0 0
        %618 = vmatpush.bf16.xpose.msra.mxu0 0
        %619 = vmatpush.bf16.xpose.msra.mxu0 0
        %620 = vmatpush.bf16.xpose.msra.mxu0 %v611
        %621 = vmatmul.bf16.gmra.mxu0 %v608
        %v622 = vpop.f32.mrf.mxu0
        %v623 = vadd.f32 %v383, %v622
        %v624 = vpop.f32.mrf.mxu0
        %625 = vdwg.mxu0
        %v626 = vsel %vm407, %v623, -inf
        %627 = vmax.xlane.f32.xlu0 %v626
        %v628 = vpop.xlane.xlu0 %627
        %v629 = vsub.f32 %v623, %v628
        %v630 = vmul.f32 %v629, 1.442695
        %v631 = vpow.pop %v630
        %v632 = vsel %vm407, %v631, 0.0
        %633 = vadd.xlane.f32.xlu0 %v632
        %v634 = vpop.xlane.xlu0 %633
        %v635 = vrcp.pop %v634
        %v636 = vmul.f32 %v634, %v635
        %v637 = vsub.f32 1.0, %v636
        %v638 = vmul.f32 %v635, %v637
        %v639 = vadd.f32 %v635, %v638
        %vm640 = vweird.f32 %v634
        %vm641 = vweird.f32 %v635
        %vm642 = vmor %vm640, %vm641
        %v643 = vsel %vm642, %v635, %v639
        %v644 = vand.u32 2147483647, %v634
        %vm645 = vcmp.eq.f32.partialorder %v644, 8.507059e+37
        %v646 = vand.u32 %v634, 2147483648
        %v647 = vor.u32 1.1754944e-38, %v646
        %v648 = vsel %vm645, %v647, %v643
        %v649 = vmul.f32 %v631, %v648
        %s650 = scalar_lea.vmem %s338, 24 [#allocation2]
        %651 = vst.msk [vmem:[%s650] sm:$0xff] %vm407, %v649
        %v652 = vpack.c.bf16 %v649, %v649
        %653 = vrot.lane.b32.xlu0 %v510, 32
        %v654 = vpop.permute.xlu0 %653
        %v656 = vsel %vm407, %v652, 0
        %v659 = vsel %vm437, %v654, 0
        %661 = vmatpush.bf16.msra.mxu0 0
        %662 = vmatpush.bf16.msra.mxu0 0
        %663 = vmatpush.bf16.msra.mxu0 0
        %664 = vmatpush.bf16.msra.mxu0 0
        %665 = vmatpush.bf16.msra.mxu0 0
        %666 = vmatpush.bf16.msra.mxu0 0
        %667 = vmatpush.bf16.msra.mxu0 0
        %668 = vmatpush.bf16.msra.mxu0 %v659
        %669 = vmatmul.bf16.gmra.mxu0 %v656
        %v670 = vpop.f32.mrf.mxu0
        %v671 = vadd.f32 0.0, %v670
        %v672 = vpop.f32.mrf.mxu0
        %673 = vdwg.mxu0
        %675 = vrot.lane.b32.xlu0 %v529, 32
        %v676 = vpop.permute.xlu0 %675
        %679 = vrot.lane.b32.xlu0 %v600, 64
        %v680 = vpop.permute.xlu0 %679
        %683 = vrot.lane.b32.xlu0 %v671, 96
        %v684 = vpop.permute.xlu0 %683
        %v686 = vsel %vm387, %v451, %v676
        %vm687 = vcmask 523264
        %v688 = vsel %vm687, %v686, %v680
        %vm689 = vcmask 785408
        %v690 = vsel %vm689, %v688, %v684
        %v691 = vpack.c.bf16 %v690, %v690
        %692 = vst [vmem:[%s373] sm:$0xf] %v691
        %p693 = scmp.lt.s32.totalorder %s25, 1
        %s694 = scalar_select %p693, %s25, 1
        %p695 = scmp.lt.s32.totalorder %s26, 0
        %s696 = scalar_select %p695, %s26, 0
        %s697 = sadd.s32 %s696, %s694
        %s698 = smul.addr %s697, 4
        %s699 = scalar_lea.vmem %s5, %s698
        %s700 = sand.u32 %s203, 1
        %s701 = scalar_lea.sflag [#allocation3], %s700
        %s702 = sand.u32 %s203, 1
        %s703 = smul.addr %s702, 32
        %s704 = scalar_lea.vmem [#allocation2], %s703
        // Predicated region
        $region41: #{decoder_forward.19} parent=39 // pred_check
          %p705 = pneg %p185
        $region42: #{decoder_forward.19} parent=39 // pred_check_branch
          %707 = sbr.rel (%p705) target = $region44
        $region43: #{decoder_forward.19} parent=39 // pred_region
          _
        $region44: #{decoder_forward.19} parent=39 // pred_fallthru
          _
        // Predicated region
        $region45: #{decoder_forward.19} parent=39 // pred_check
          %p708 = pneg %p213
        $region46: #{decoder_forward.19} parent=39 // pred_check_branch
          %710 = sbr.rel (%p708) target = $region48
        $region47: #{decoder_forward.19} parent=39 // pred_region
          %712 = vsyncadd %s701, 0
          %s713 = smul.addr %s25, 4
          %s714 = sadd.s32 %s26, %s713
          %s715 = smul.addr %s714, 8
          %s716 = scalar_lea.hbm %s6, %s715
          %s717 = sshll.u32 %s704, 4
          %s718 = int_to_ptr.vmem [resolvable:$true] %s717
          %s719 = sshll.u32 %s716, 4
          %s720 = int_to_ptr.hbm [resolvable:$true] %s719
          %725 = dma.vmem_to_hbm [thread:$0]  %s718, 512, %s720, %s701, 128, 128, 8
        $region48: #{decoder_forward.19} parent=39 // pred_fallthru
          _
      $region40: #{decoder_forward.19} parent=5 // pred_fallthru
        _
      %p726 = scmp.le.s32.totalorder 2, %s16
      // Predicated region
      $region49: #{decoder_forward.19} parent=5 // pred_check
        %p727 = pneg %p726
      $region50: #{decoder_forward.19} parent=5 // pred_check_branch
        %729 = sbr.rel (%p727) target = $region52
      $region51: #{decoder_forward.19} parent=5 // pred_region
        %s730 = ssub.s32 %s16, 2
        // Predicated region
        $region53: #{decoder_forward.19} parent=51 // pred_check
          %p731 = pneg %p191
        $region54: #{decoder_forward.19} parent=51 // pred_check_branch
          %733 = sbr.rel (%p731) target = $region56
        $region55: #{decoder_forward.19} parent=51 // pred_region
          %p734 = scmp.lt.s32.totalorder %s27, 1
          %s735 = scalar_select %p734, %s27, 1
          %p736 = scmp.lt.s32.totalorder %s28, 0
          %s737 = scalar_select %p736, %s28, 0
          %s738 = sadd.s32 %s737, %s735
          %s739 = smul.addr %s738, 4
          %s740 = scalar_lea.vmem %s5, %s739
        $region56: #{decoder_forward.19} parent=51 // pred_fallthru
          _
        // Predicated region
        $region57: #{decoder_forward.19} parent=51 // pred_check
          %p741 = pneg %p219
        $region58: #{decoder_forward.19} parent=51 // pred_check_branch
          %743 = sbr.rel (%p741) target = $region60
        $region59: #{decoder_forward.19} parent=51 // pred_region
          %s744 = sand.u32 %s204, 1
          %s745 = scalar_lea.sflag [#allocation3], %s744
          %s746 = sand.u32 %s204, 1
          %s747 = smul.addr %s746, 32
          %s748 = scalar_lea.vmem [#allocation2], %s747
          %750 = dma.done %s745, 512
        $region60: #{decoder_forward.19} parent=51 // pred_fallthru
          _
      $region52: #{decoder_forward.19} parent=5 // pred_fallthru
        _
    $region6: #{decoder_forward.19} parent=1 // loop_footer
      %s20 = sadd.s32 1, %s16
    $region7: #{decoder_forward.19} parent=1 // loop_footer_branch
      %15 = sbr.rel target = $region3
    $region8: #{decoder_forward.19} parent=1 // loop_exit
      _
    %751 = vsyncpa [#allocation3], 1
    %s752 = scalar_lea.sflag [#allocation3], 1
    %753 = vsyncpa %s752, 1

// kernel: decoder_forward.18
$region0: #{decoder_forward.18}
  #allocation0 [shape = 'u32[]', space=smem, size = 0x4, offset = 0x4, fixed_abs, tag = 'smem constant byte address 0x4 - core index']
  #allocation1 [shape = 'u32[72,128]{1,0:T(1,128)}', space=vmem, size = 0x9000, scoped, tag = 'internal scratch']
  #allocation2 [shape = 'f32[16,128]{1,0:T(8,128)}', space=vmem, size = 0x2000, scoped, tag = 'scratch operand']
  %s0 = inlined_call_operand.vmem [shape: f32[16,128], index: 0, kind: input, shape index: {}]
  %s1 = inlined_call_operand.vmem [shape: bf16[128,384], index: 1, kind: input, shape index: {}]
  %s2 = inlined_call_operand.vmem [shape: f32[1,384], index: 2, kind: input, shape index: {}]
  %s3 = inlined_call_operand.vmem [shape: bf16[16,384], index: 3, kind: output, shape index: {}]
  %s4 = sld [smem:[#allocation0]]
  $region131: #{decoder_forward.18} parent=0
    _
  %s6 = ssub.s32 1, %s4
  %s7 = scalar_select 0, %s6, %s4
  $region1: #{decoder_forward.18} parent=0
    #allocation3 [shape = 'u8[65536]{0}', space=vmem, size = 0x10000, scoped, tag = 'input window, operand 1']
    #allocation4 [shape = 'u8[8192]{0}', space=vmem, size = 0x2000, scoped, tag = 'output window, operand 0']
    loop: start=0, step=1, limit=5
    $region2: #{decoder_forward.18} parent=1 // loop_pre_header
      _
    $region3: #{decoder_forward.18} parent=1 // loop_header
      %s9 = sphi 0, %s13
      %p10 = scmp.ge.s32.totalorder %s9, 5
      %s16 = sphi 0, %s35
      %s17 = sphi 0, %s31
      %s18 = sphi 0, %s27
      %s19 = sphi 0, %s16
      %s20 = sphi 0, %s17
      %s21 = sphi 0, %s18
      %s22 = sphi 0, %s19
      %s23 = sphi 0, %s20
      %s24 = sphi 0, %s21
      %s40 = sphi 0, %s42
      %s43 = sphi 0, %s40
      %s44 = sphi 0, %s43
      %s60 = sphi 0, %s44
      %s68 = sphi 0, %s70
      %s71 = sphi 0, %s68
      %s72 = sphi 0, %s71
      %s88 = sphi 0, %s72
      %s94 = sphi 0, %s96
      %s97 = sphi 0, %s94
      %s98 = sphi 0, %s97
      %s114 = sphi 0, %s98
      %s122 = sphi 0, %s124
      %s125 = sphi 0, %s122
      %s126 = sphi 0, %s125
      %s142 = sphi 0, %s126
    $region4: #{decoder_forward.18} parent=1 // loop_header_branch
      %12 = sbr.rel (%p10) target = $region8
    $region5: #{decoder_forward.18} parent=1 // loop_body
      %s14 = ssub.s32 %s9, 1
      %s15 = ssub.s32 %s9, 2
      %s25 = sadd.s32 1, %s18
      %p26 = scmp.ge.s32.totalorder %s25, 1
      %s27 = scalar_select %p26, 0, %s25
      %s28 = sadd.s32 1, %s17
      %s29 = scalar_select %p26, %s28, %s17
      %p30 = scmp.ge.s32.totalorder %s29, 3
      %s31 = scalar_select %p30, 0, %s29
      %s32 = sadd.s32 1, %s16
      %s33 = scalar_select %p30, %s32, %s16
      %p34 = scmp.ge.s32.totalorder %s33, 1
      %s35 = scalar_select %p34, 0, %s33
      %s36 = ssub.s32 %s16, %s35
      %s37 = ssub.s32 %s18, %s27
      %s38 = sor.u32 %s36, %s37
      %p39 = scmp.eq.s32.totalorder %s38, 0
      %s41 = sadd.s32 %s40, 1
      %s42 = scalar_select %p39, %s40, %s41
      %p45 = pneg %p39
      %p46 = scmp.eq.s32.totalorder %s9, 2
      %p47 = por %p45, %p46
      %p48 = scmp.ne.s32.totalorder %s40, %s43
      %p49 = scmp.eq.s32.totalorder %s9, 0
      %p50 = por %p48, %p49
      %p51 = scmp.ne.s32.totalorder %s40, %s43
      %p52 = scmp.eq.s32.totalorder %s14, 2
      %p53 = por %p51, %p52
      %p54 = scmp.ne.s32.totalorder %s43, %s44
      %p55 = scmp.eq.s32.totalorder %s14, 0
      %p56 = por %p54, %p55
      %p57 = scmp.ne.s32.totalorder %s43, %s44
      %p58 = scmp.eq.s32.totalorder %s15, 2
      %p59 = por %p57, %p58
      %p61 = scmp.ne.s32.totalorder %s44, %s60
      %p62 = scmp.eq.s32.totalorder %s15, 0
      %p63 = por %p61, %p62
      %s64 = ssub.s32 %s18, %s27
      %s65 = ssub.s32 %s17, %s31
      %s66 = sor.u32 %s64, %s65
      %p67 = scmp.eq.s32.totalorder %s66, 0
      %s69 = sadd.s32 %s68, 1
      %s70 = scalar_select %p67, %s68, %s69
      %p73 = pneg %p67
      %p74 = scmp.eq.s32.totalorder %s9, 2
      %p75 = por %p73, %p74
      %p76 = scmp.ne.s32.totalorder %s68, %s71
      %p77 = scmp.eq.s32.totalorder %s9, 0
      %p78 = por %p76, %p77
      %p79 = scmp.ne.s32.totalorder %s68, %s71
      %p80 = scmp.eq.s32.totalorder %s14, 2
      %p81 = por %p79, %p80
      %p82 = scmp.ne.s32.totalorder %s71, %s72
      %p83 = scmp.eq.s32.totalorder %s14, 0
      %p84 = por %p82, %p83
      %p85 = scmp.ne.s32.totalorder %s71, %s72
      %p86 = scmp.eq.s32.totalorder %s15, 2
      %p87 = por %p85, %p86
      %p89 = scmp.ne.s32.totalorder %s72, %s88
      %p90 = scmp.eq.s32.totalorder %s15, 0
      %p91 = por %p89, %p90
      %s92 = ssub.s32 %s17, %s31
      %p93 = scmp.eq.s32.totalorder %s92, 0
      %s95 = sadd.s32 %s94, 1
      %s96 = scalar_select %p93, %s94, %s95
      %p99 = pneg %p93
      %p100 = scmp.eq.s32.totalorder %s9, 2
      %p101 = por %p99, %p100
      %p102 = scmp.ne.s32.totalorder %s94, %s97
      %p103 = scmp.eq.s32.totalorder %s9, 0
      %p104 = por %p102, %p103
      %p105 = scmp.ne.s32.totalorder %s94, %s97
      %p106 = scmp.eq.s32.totalorder %s14, 2
      %p107 = por %p105, %p106
      %p108 = scmp.ne.s32.totalorder %s97, %s98
      %p109 = scmp.eq.s32.totalorder %s14, 0
      %p110 = por %p108, %p109
      %p111 = scmp.ne.s32.totalorder %s97, %s98
      %p112 = scmp.eq.s32.totalorder %s15, 2
      %p113 = por %p111, %p112
      %p115 = scmp.ne.s32.totalorder %s98, %s114
      %p116 = scmp.eq.s32.totalorder %s15, 0
      %p117 = por %p115, %p116
      %s118 = ssub.s32 %s16, %s35
      %s119 = ssub.s32 %s17, %s31
      %s120 = sor.u32 %s118, %s119
      %p121 = scmp.eq.s32.totalorder %s120, 0
      %s123 = sadd.s32 %s122, 1
      %s124 = scalar_select %p121, %s122, %s123
      %p127 = pneg %p121
      %p128 = scmp.eq.s32.totalorder %s9, 2
      %p129 = por %p127, %p128
      %p130 = scmp.ne.s32.totalorder %s122, %s125
      %p131 = scmp.eq.s32.totalorder %s9, 0
      %p132 = por %p130, %p131
      %p133 = scmp.ne.s32.totalorder %s122, %s125
      %p134 = scmp.eq.s32.totalorder %s14, 2
      %p135 = por %p133, %p134
      %p136 = scmp.ne.s32.totalorder %s125, %s126
      %p137 = scmp.eq.s32.totalorder %s14, 0
      %p138 = por %p136, %p137
      %p139 = scmp.ne.s32.totalorder %s125, %s126
      %p140 = scmp.eq.s32.totalorder %s15, 2
      %p141 = por %p139, %p140
      %p143 = scmp.ne.s32.totalorder %s126, %s142
      %p144 = scmp.eq.s32.totalorder %s15, 0
      %p145 = por %p143, %p144
      %p146 = scmp.le.s32.totalorder 1, %s9
      %p147 = scmp.lt.s32.totalorder %s9, 4
      %p148 = pnand %p146, %p147
      %p149 = pneg %p148
      // Predicated region
      $region9: #{decoder_forward.18} parent=5 // pred_check
        _
      $region10: #{decoder_forward.18} parent=5 // pred_check_branch
        %151 = sbr.rel (%p148) target = $region12
      $region11: #{decoder_forward.18} parent=5 // pred_region
        %s152 = ssub.s32 %s9, 1
        // Predicated region
        $region13: #{decoder_forward.18} parent=11 // pred_check
          %p153 = pneg %p56
        $region14: #{decoder_forward.18} parent=11 // pred_check_branch
          %155 = sbr.rel (%p153) target = $region16
        $region15: #{decoder_forward.18} parent=11 // pred_region
          %s156 = smul.u32 2, %s19
          %p157 = scmp.lt.s32.totalorder %s156, 1
          %s158 = scalar_select %p157, %s156, 1
          %p159 = scmp.lt.s32.totalorder %s21, 0
          %s160 = scalar_select %p159, %s21, 0
          %s161 = sadd.s32 %s160, %s158
          %s162 = smul.addr %s161, 8
          %s163 = scalar_lea.vmem %s0, %s162
          %s164 = smul.u32 2, %s19
        $region16: #{decoder_forward.18} parent=11 // pred_fallthru
          _
      $region12: #{decoder_forward.18} parent=5 // pred_fallthru
        _
      %p165 = scmp.lt.s32.totalorder %s9, 3
      // Predicated region
      $region17: #{decoder_forward.18} parent=5 // pred_check
        %p166 = pneg %p165
      $region18: #{decoder_forward.18} parent=5 // pred_check_branch
        %168 = sbr.rel (%p166) target = $region20
      $region19: #{decoder_forward.18} parent=5 // pred_region
        // Predicated region
        $region21: #{decoder_forward.18} parent=19 // pred_check
          %p169 = pneg %p78
        $region22: #{decoder_forward.18} parent=19 // pred_check_branch
          %171 = sbr.rel (%p169) target = $region24
        $region23: #{decoder_forward.18} parent=19 // pred_region
          %s172 = sand.u32 %s68, 1
          %s173 = sand.u32 %s68, 1
          %s174 = smul.addr %s173, 64
          %s175 = scalar_lea.vmem [#allocation3], %s174
          %s176 = smul.u32 16, %s18
          %s177 = smul.addr %s176, 3
          %s178 = sadd.s32 %s17, %s177
          %s179 = smul.addr %s178, 4
          %s180 = scalar_lea.vmem %s1, %s179
          // Predicated region
          $region25: #{decoder_forward.18} parent=23 // pred_check
            _
          $region26: #{decoder_forward.18} parent=23 // pred_check_branch
            %182 = sbr.rel (0) target = $region28
          $region27: #{decoder_forward.18} parent=23 // pred_region
            // Predicated region
            $region29: #{decoder_forward.18} parent=27 // pred_check
              _
            $region30: #{decoder_forward.18} parent=27 // pred_check_branch
              %184 = sbr.rel target = $region32
            $region31: #{decoder_forward.18} parent=27 // pred_region
              // Predicated region
              $region44: #{decoder_forward.18} parent=31 // pred_check
                _
              $region45: #{decoder_forward.18} parent=31 // pred_check_branch
                %230 = sbr.rel (0) target = $region47
              $region46: #{decoder_forward.18} parent=31 // pred_region
                loop: start=0, step=1, limit=1
                $region48: #{decoder_forward.18} parent=46 // loop_pre_header
                  _
                $region49: #{decoder_forward.18} parent=46 // loop_header
                  %s232 = sphi 0, %s236
                  %p233 = scmp.ge.s32.totalorder %s232, 1
                  %s237 = sphi %s180, %s180
                  %s238 = sphi %s175, %s175
                $region50: #{decoder_forward.18} parent=46 // loop_header_branch
                  %235 = sbr.rel (%p233) target = $region54
                $region51: #{decoder_forward.18} parent=46 // loop_body
                  _
                $region52: #{decoder_forward.18} parent=46 // loop_footer
                  %s236 = sadd.s32 1, %s232
                $region53: #{decoder_forward.18} parent=46 // loop_footer_branch
                  %231 = sbr.rel target = $region49
                $region54: #{decoder_forward.18} parent=46 // loop_exit
                  _
                %s240 = ssub.s32 16, 1
                loop: start=0, step=1, limit=1
                $region55: #{decoder_forward.18} parent=46 // loop_pre_header
                  _
                $region56: #{decoder_forward.18} parent=46 // loop_header
                  %s242 = sphi 0, %s246
                  %p243 = scmp.ge.s32.totalorder %s242, 1
                  %s247 = sphi %s180, %s180
                  %s248 = sphi %s175, %s175
                $region57: #{decoder_forward.18} parent=46 // loop_header_branch
                  %245 = sbr.rel (%p243) target = $region61
                $region58: #{decoder_forward.18} parent=46 // loop_body
                  %v249 = vld [vmem:[%s247] sm:%s240]
                  %250 = vst [vmem:[%s248] sm:%s240] %v249
                  %v251 = vld [vmem:[%s247 + $0xc] sm:%s240]
                  %252 = vst [vmem:[%s248 + $0x4] sm:%s240] %v251
                  %v253 = vld [vmem:[%s247 + $0x18] sm:%s240]
                  %254 = vst [vmem:[%s248 + $0x8] sm:%s240] %v253
                  %v255 = vld [vmem:[%s247 + $0x24] sm:%s240]
                  %256 = vst [vmem:[%s248 + $0xc] sm:%s240] %v255
                  %v257 = vld [vmem:[%s247 + $0x30] sm:%s240]
                  %258 = vst [vmem:[%s248 + $0x10] sm:%s240] %v257
                  %v259 = vld [vmem:[%s247 + $0x3c] sm:%s240]
                  %260 = vst [vmem:[%s248 + $0x14] sm:%s240] %v259
                  %v261 = vld [vmem:[%s247 + $0x48] sm:%s240]
                  %262 = vst [vmem:[%s248 + $0x18] sm:%s240] %v261
                  %v263 = vld [vmem:[%s247 + $0x54] sm:%s240]
                  %264 = vst [vmem:[%s248 + $0x1c] sm:%s240] %v263
                  %v265 = vld [vmem:[%s247 + $0x60] sm:%s240]
                  %266 = vst [vmem:[%s248 + $0x20] sm:%s240] %v265
                  %v267 = vld [vmem:[%s247 + $0x6c] sm:%s240]
                  %268 = vst [vmem:[%s248 + $0x24] sm:%s240] %v267
                  %v269 = vld [vmem:[%s247 + $0x78] sm:%s240]
                  %270 = vst [vmem:[%s248 + $0x28] sm:%s240] %v269
                  %v271 = vld [vmem:[%s247 + $0x84] sm:%s240]
                  %272 = vst [vmem:[%s248 + $0x2c] sm:%s240] %v271
                  %v273 = vld [vmem:[%s247 + $0x90] sm:%s240]
                  %274 = vst [vmem:[%s248 + $0x30] sm:%s240] %v273
                  %v275 = vld [vmem:[%s247 + $0x9c] sm:%s240]
                  %276 = vst [vmem:[%s248 + $0x34] sm:%s240] %v275
                  %v277 = vld [vmem:[%s247 + $0xa8] sm:%s240]
                  %278 = vst [vmem:[%s248 + $0x38] sm:%s240] %v277
                  %v279 = vld [vmem:[%s247 + $0xb4] sm:%s240]
                  %280 = vst [vmem:[%s248 + $0x3c] sm:%s240] %v279
                $region59: #{decoder_forward.18} parent=46 // loop_footer
                  %s246 = sadd.s32 1, %s242
                $region60: #{decoder_forward.18} parent=46 // loop_footer_branch
                  %241 = sbr.rel target = $region56
                $region61: #{decoder_forward.18} parent=46 // loop_exit
                  _
              $region47: #{decoder_forward.18} parent=31 // pred_fallthru
                _
            $region32: #{decoder_forward.18} parent=27 // pred_fallthru
              _
            // Predicated region
            $region33: #{decoder_forward.18} parent=27 // pred_check
              _
            $region34: #{decoder_forward.18} parent=27 // pred_check_branch
              %186 = sbr.rel (0) target = $region36
            $region35: #{decoder_forward.18} parent=27 // pred_region
              %s188 = ssub.s32 16, 1
              loop: start=0, step=1, limit=1
              $region37: #{decoder_forward.18} parent=35 // loop_pre_header
                _
              $region38: #{decoder_forward.18} parent=35 // loop_header
                %s190 = sphi 0, %s194
                %p191 = scmp.ge.s32.totalorder %s190, 1
                %s195 = sphi %s180, %s180
                %s196 = sphi %s175, %s175
              $region39: #{decoder_forward.18} parent=35 // loop_header_branch
                %193 = sbr.rel (%p191) target = $region43
              $region40: #{decoder_forward.18} parent=35 // loop_body
                %v197 = vld [vmem:[%s195] sm:%s188]
                %198 = vst [vmem:[%s196] sm:%s188] %v197
                %v199 = vld [vmem:[%s195 + $0xc] sm:%s188]
                %200 = vst [vmem:[%s196 + $0x4] sm:%s188] %v199
                %v201 = vld [vmem:[%s195 + $0x18] sm:%s188]
                %202 = vst [vmem:[%s196 + $0x8] sm:%s188] %v201
                %v203 = vld [vmem:[%s195 + $0x24] sm:%s188]
                %204 = vst [vmem:[%s196 + $0xc] sm:%s188] %v203
                %v205 = vld [vmem:[%s195 + $0x30] sm:%s188]
                %206 = vst [vmem:[%s196 + $0x10] sm:%s188] %v205
                %v207 = vld [vmem:[%s195 + $0x3c] sm:%s188]
                %208 = vst [vmem:[%s196 + $0x14] sm:%s188] %v207
                %v209 = vld [vmem:[%s195 + $0x48] sm:%s188]
                %210 = vst [vmem:[%s196 + $0x18] sm:%s188] %v209
                %v211 = vld [vmem:[%s195 + $0x54] sm:%s188]
                %212 = vst [vmem:[%s196 + $0x1c] sm:%s188] %v211
                %v213 = vld [vmem:[%s195 + $0x60] sm:%s188]
                %214 = vst [vmem:[%s196 + $0x20] sm:%s188] %v213
                %v215 = vld [vmem:[%s195 + $0x6c] sm:%s188]
                %216 = vst [vmem:[%s196 + $0x24] sm:%s188] %v215
                %v217 = vld [vmem:[%s195 + $0x78] sm:%s188]
                %218 = vst [vmem:[%s196 + $0x28] sm:%s188] %v217
                %v219 = vld [vmem:[%s195 + $0x84] sm:%s188]
                %220 = vst [vmem:[%s196 + $0x2c] sm:%s188] %v219
                %v221 = vld [vmem:[%s195 + $0x90] sm:%s188]
                %222 = vst [vmem:[%s196 + $0x30] sm:%s188] %v221
                %v223 = vld [vmem:[%s195 + $0x9c] sm:%s188]
                %224 = vst [vmem:[%s196 + $0x34] sm:%s188] %v223
                %v225 = vld [vmem:[%s195 + $0xa8] sm:%s188]
                %226 = vst [vmem:[%s196 + $0x38] sm:%s188] %v225
                %v227 = vld [vmem:[%s195 + $0xb4] sm:%s188]
                %228 = vst [vmem:[%s196 + $0x3c] sm:%s188] %v227
              $region41: #{decoder_forward.18} parent=35 // loop_footer
                %s194 = sadd.s32 1, %s190
              $region42: #{decoder_forward.18} parent=35 // loop_footer_branch
                %189 = sbr.rel target = $region38
              $region43: #{decoder_forward.18} parent=35 // loop_exit
                _
            $region36: #{decoder_forward.18} parent=27 // pred_fallthru
              _
          $region28: #{decoder_forward.18} parent=23 // pred_fallthru
            _
          %281 = vnop
        $region24: #{decoder_forward.18} parent=19 // pred_fallthru
          _
        // Predicated region
        $region62: #{decoder_forward.18} parent=19 // pred_check
          %p282 = pneg %p104
        $region63: #{decoder_forward.18} parent=19 // pred_check_branch
          %284 = sbr.rel (%p282) target = $region65
        $region64: #{decoder_forward.18} parent=19 // pred_region
          %p285 = scmp.lt.s32.totalorder %s17, 2
          %s286 = scalar_select %p285, %s17, 2
          %s287 = scalar_lea.vmem %s2, %s286
        $region65: #{decoder_forward.18} parent=19 // pred_fallthru
          _
      $region20: #{decoder_forward.18} parent=5 // pred_fallthru
        _
      %p288 = scmp.le.s32.totalorder 1, %s9
      %p289 = scmp.lt.s32.totalorder %s9, 4
      %p290 = pnand %p288, %p289
      %p291 = pneg %p290
      // Predicated region
      $region66: #{decoder_forward.18} parent=5 // pred_check
        _
      $region67: #{decoder_forward.18} parent=5 // pred_check_branch
        %293 = sbr.rel (%p290) target = $region69
      $region68: #{decoder_forward.18} parent=5 // pred_region
        %s294 = ssub.s32 %s9, 1
        %s295 = sand.u32 %s71, 1
        %s296 = sand.u32 %s71, 1
        %s297 = smul.addr %s296, 64
        %s298 = scalar_lea.vmem [#allocation3], %s297
        // Predicated region
        $region70: #{decoder_forward.18} parent=68 // pred_check
          %p299 = pneg %p84
        $region71: #{decoder_forward.18} parent=68 // pred_check_branch
          %301 = sbr.rel (%p299) target = $region73
        $region72: #{decoder_forward.18} parent=68 // pred_region
          _
        $region73: #{decoder_forward.18} parent=68 // pred_fallthru
          _
        %s302 = smul.u32 2, %s19
        %p303 = scmp.lt.s32.totalorder %s302, 1
        %s304 = scalar_select %p303, %s302, 1
        %p305 = scmp.lt.s32.totalorder %s21, 0
        %s306 = scalar_select %p305, %s21, 0
        %s307 = sadd.s32 %s306, %s304
        %s308 = smul.addr %s307, 8
        %s309 = scalar_lea.vmem %s0, %s308
        %p310 = pneg %p56
        %p311 = pneg %p53
        %s312 = sand.u32 %s71, 1
        %s313 = sand.u32 %s71, 1
        %s314 = smul.addr %s313, 64
        %s315 = scalar_lea.vmem [#allocation3], %s314
        %p316 = pneg %p84
        %p317 = pneg %p81
        %p318 = scmp.lt.s32.totalorder %s20, 2
        %s319 = scalar_select %p318, %s20, 2
        %s320 = scalar_lea.vmem %s2, %s319
        %p321 = pneg %p110
        %p322 = pneg %p107
        %p323 = pneg %p138
        %p324 = pneg %p135
        %s325 = sand.u32 %s125, 1
        %s326 = sand.u32 %s125, 1
        %s327 = smul.addr %s326, 8
        %s328 = scalar_lea.vmem [#allocation4], %s327
        %s329 = smul.u32 2, %s19
        %p330 = scmp.lt.s32.totalorder %s329, 1
        %s331 = scalar_select %p330, %s329, 1
        %p332 = scmp.lt.s32.totalorder %s21, 0
        %s333 = scalar_select %p332, %s21, 0
        %s334 = sadd.s32 %s333, %s331
        %s335 = smul.addr %s334, 8
        %s336 = scalar_lea.vmem %s0, %s335
        %s337 = smul.u32 2, %s19
        %s338 = smul.u32 16, %s21
        %p339 = scmp.lt.s32.totalorder %s20, 2
        %s340 = scalar_select %p339, %s20, 2
        %s341 = scalar_lea.vmem %s2, %s340
        %s342 = smul.u32 2, %s19
        %p343 = scmp.eq.s32.totalorder %s21, 0
        // Predicated region
        $region74: #{decoder_forward.18} parent=68 // pred_check
          %p344 = pneg %p343
        $region75: #{decoder_forward.18} parent=68 // pred_check_branch
          %346 = sbr.rel (%p344) target = $region77
        $region76: #{decoder_forward.18} parent=68 // pred_region
          %347 = vst [vmem:[#allocation2] sm:$0xff] 0.0
          %348 = vst [vmem:[#allocation2 + $0x8] sm:$0xff] 0.0
        $region77: #{decoder_forward.18} parent=68 // pred_fallthru
          _
        %v349 = vld [vmem:[#allocation2] sm:$0xff]
        %v350 = vld [vmem:[#allocation2 + $0x8] sm:$0xff]
        %v351 = vld [vmem:[%s336] sm:$0xff]
        %v352 = vld [vmem:[%s336 + $0x8] sm:$0xff]
        %v353 = vpack.c.bf16 %v352, %v351
        %v354 = vld [vmem:[%s298] sm:$0xf]
        %v355 = vld [vmem:[%s298 + $0x4] sm:$0xf]
        %v356 = vld [vmem:[%s298 + $0x8] sm:$0xf]
        %v357 = vld [vmem:[%s298 + $0xc] sm:$0xf]
        %v358 = vld [vmem:[%s298 + $0x10] sm:$0xf]
        %v359 = vld [vmem:[%s298 + $0x14] sm:$0xf]
        %v360 = vld [vmem:[%s298 + $0x18] sm:$0xf]
        %v361 = vld [vmem:[%s298 + $0x1c] sm:$0xf]
        %v362 = vld [vmem:[%s298 + $0x20] sm:$0xf]
        %v363 = vld [vmem:[%s298 + $0x24] sm:$0xf]
        %v364 = vld [vmem:[%s298 + $0x28] sm:$0xf]
        %v365 = vld [vmem:[%s298 + $0x2c] sm:$0xf]
        %v366 = vld [vmem:[%s298 + $0x30] sm:$0xf]
        %v367 = vld [vmem:[%s298 + $0x34] sm:$0xf]
        %v368 = vld [vmem:[%s298 + $0x38] sm:$0xf]
        %v369 = vld [vmem:[%s298 + $0x3c] sm:$0xf]
        %v386 = vunpack.c.l.b16 %v354
        %v387 = vunpack.c.l.b16 %v355
        %v388 = vunpack.c.l.b16 %v356
        %v389 = vunpack.c.l.b16 %v357
        %v390 = vunpack.c.l.b16 %v358
        %v391 = vunpack.c.l.b16 %v359
        %v392 = vunpack.c.l.b16 %v360
        %v393 = vunpack.c.l.b16 %v361
        %v394 = vunpack.c.l.b16 %v362
        %v395 = vunpack.c.l.b16 %v363
        %v396 = vunpack.c.l.b16 %v364
        %v397 = vunpack.c.l.b16 %v365
        %v398 = vunpack.c.l.b16 %v366
        %v399 = vunpack.c.l.b16 %v367
        %v400 = vunpack.c.l.b16 %v368
        %v401 = vunpack.c.l.b16 %v369
        %v402 = vpack.c.b16 %v387, %v386
        %v403 = vpack.c.b16 %v389, %v388
        %v404 = vpack.c.b16 %v391, %v390
        %v405 = vpack.c.b16 %v393, %v392
        %v406 = vpack.c.b16 %v395, %v394
        %v407 = vpack.c.b16 %v397, %v396
        %v408 = vpack.c.b16 %v399, %v398
        %v409 = vpack.c.b16 %v401, %v400
        %418 = vmatpush.bf16.msra.mxu0 %v409
        %419 = vmatpush.bf16.msra.mxu0 %v408
        %420 = vmatpush.bf16.msra.mxu0 %v407
        %421 = vmatpush.bf16.msra.mxu0 %v406
        %422 = vmatpush.bf16.msra.mxu0 %v405
        %423 = vmatpush.bf16.msra.mxu0 %v404
        %424 = vmatpush.bf16.msra.mxu0 %v403
        %425 = vmatpush.bf16.msra.mxu0 %v402
        %426 = vmatmul.bf16.gmra.mxu0 %v353
        %v427 = vpop.f32.mrf.mxu0
        %v428 = vadd.f32 0.0, %v427
        %v429 = vpop.f32.mrf.mxu0
        %v430 = vadd.f32 0.0, %v429
        %431 = vdwg.mxu0
        %v432 = vadd.f32 %v349, %v428
        %v433 = vadd.f32 %v350, %v430
        %434 = vst [vmem:[#allocation2] sm:$0xff] %v432
        %435 = vst [vmem:[#allocation2 + $0x8] sm:$0xff] %v433
        // Predicated region
        $region78: #{decoder_forward.18} parent=68 // pred_check
          %p436 = pneg %p343
        $region79: #{decoder_forward.18} parent=68 // pred_check_branch
          %438 = sbr.rel (%p436) target = $region81
        $region80: #{decoder_forward.18} parent=68 // pred_region
          %v439 = vld [vmem:[#allocation2] sm:$0xff]
          %v440 = vld [vmem:[#allocation2 + $0x8] sm:$0xff]
          %v441 = vld [vmem:[%s341] sm:$0x1]
          %v443 = vperm.slane %v441, 0
          %v445 = vadd.f32 %v439, %v443
          %v446 = vadd.f32 %v440, %v443
          %v447 = vpack.c.bf16 %v445, %v445
          %v448 = vpack.c.bf16 %v446, %v446
          %449 = vst [vmem:[%s328] sm:$0xf] %v447
          %450 = vst [vmem:[%s328 + $0x4] sm:$0xf] %v448
        $region81: #{decoder_forward.18} parent=68 // pred_fallthru
          _
        %s451 = sand.u32 %s125, 1
        %s452 = sand.u32 %s125, 1
        %s453 = smul.addr %s452, 8
        %s454 = scalar_lea.vmem [#allocation4], %s453
        // Predicated region
        $region82: #{decoder_forward.18} parent=68 // pred_check
          %p455 = pneg %p135
        $region83: #{decoder_forward.18} parent=68 // pred_check_branch
          %457 = sbr.rel (%p455) target = $region85
        $region84: #{decoder_forward.18} parent=68 // pred_region
          %s458 = smul.u32 2, %s19
          %s459 = smul.addr %s458, 3
          %s460 = sadd.s32 %s20, %s459
          %s461 = smul.addr %s460, 4
          %s462 = scalar_lea.vmem %s3, %s461
          // Predicated region
          $region86: #{decoder_forward.18} parent=84 // pred_check
            _
          $region87: #{decoder_forward.18} parent=84 // pred_check_branch
            %464 = sbr.rel (0) target = $region89
          $region88: #{decoder_forward.18} parent=84 // pred_region
            // Predicated region
            $region90: #{decoder_forward.18} parent=88 // pred_check
              _
            $region91: #{decoder_forward.18} parent=88 // pred_check_branch
              %466 = sbr.rel target = $region93
            $region92: #{decoder_forward.18} parent=88 // pred_region
              // Predicated region
              $region105: #{decoder_forward.18} parent=92 // pred_check
                _
              $region106: #{decoder_forward.18} parent=92 // pred_check_branch
                %484 = sbr.rel (0) target = $region108
              $region107: #{decoder_forward.18} parent=92 // pred_region
                loop: start=0, step=1, limit=1
                $region109: #{decoder_forward.18} parent=107 // loop_pre_header
                  _
                $region110: #{decoder_forward.18} parent=107 // loop_header
                  %s486 = sphi 0, %s490
                  %p487 = scmp.ge.s32.totalorder %s486, 1
                  %s491 = sphi %s454, %s454
                  %s492 = sphi %s462, %s462
                $region111: #{decoder_forward.18} parent=107 // loop_header_branch
                  %489 = sbr.rel (%p487) target = $region115
                $region112: #{decoder_forward.18} parent=107 // loop_body
                  _
                $region113: #{decoder_forward.18} parent=107 // loop_footer
                  %s490 = sadd.s32 1, %s486
                $region114: #{decoder_forward.18} parent=107 // loop_footer_branch
                  %485 = sbr.rel target = $region110
                $region115: #{decoder_forward.18} parent=107 // loop_exit
                  _
                %s494 = ssub.s32 16, 1
                loop: start=0, step=1, limit=1
                $region116: #{decoder_forward.18} parent=107 // loop_pre_header
                  _
                $region117: #{decoder_forward.18} parent=107 // loop_header
                  %s496 = sphi 0, %s500
                  %p497 = scmp.ge.s32.totalorder %s496, 1
                  %s501 = sphi %s454, %s454
                  %s502 = sphi %s462, %s462
                $region118: #{decoder_forward.18} parent=107 // loop_header_branch
                  %499 = sbr.rel (%p497) target = $region122
                $region119: #{decoder_forward.18} parent=107 // loop_body
                  %v503 = vld [vmem:[%s501] sm:%s494]
                  %504 = vst [vmem:[%s502] sm:%s494] %v503
                  %v505 = vld [vmem:[%s501 + $0x4] sm:%s494]
                  %506 = vst [vmem:[%s502 + $0xc] sm:%s494] %v505
                $region120: #{decoder_forward.18} parent=107 // loop_footer
                  %s500 = sadd.s32 1, %s496
                $region121: #{decoder_forward.18} parent=107 // loop_footer_branch
                  %495 = sbr.rel target = $region117
                $region122: #{decoder_forward.18} parent=107 // loop_exit
                  _
              $region108: #{decoder_forward.18} parent=92 // pred_fallthru
                _
            $region93: #{decoder_forward.18} parent=88 // pred_fallthru
              _
            // Predicated region
            $region94: #{decoder_forward.18} parent=88 // pred_check
              _
            $region95: #{decoder_forward.18} parent=88 // pred_check_branch
              %468 = sbr.rel (0) target = $region97
            $region96: #{decoder_forward.18} parent=88 // pred_region
              %s470 = ssub.s32 16, 1
              loop: start=0, step=1, limit=1
              $region98: #{decoder_forward.18} parent=96 // loop_pre_header
                _
              $region99: #{decoder_forward.18} parent=96 // loop_header
                %s472 = sphi 0, %s476
                %p473 = scmp.ge.s32.totalorder %s472, 1
                %s477 = sphi %s454, %s454
                %s478 = sphi %s462, %s462
              $region100: #{decoder_forward.18} parent=96 // loop_header_branch
                %475 = sbr.rel (%p473) target = $region104
              $region101: #{decoder_forward.18} parent=96 // loop_body
                %v479 = vld [vmem:[%s477] sm:%s470]
                %480 = vst [vmem:[%s478] sm:%s470] %v479
                %v481 = vld [vmem:[%s477 + $0x4] sm:%s470]
                %482 = vst [vmem:[%s478 + $0xc] sm:%s470] %v481
              $region102: #{decoder_forward.18} parent=96 // loop_footer
                %s476 = sadd.s32 1, %s472
              $region103: #{decoder_forward.18} parent=96 // loop_footer_branch
                %471 = sbr.rel target = $region99
              $region104: #{decoder_forward.18} parent=96 // loop_exit
                _
            $region97: #{decoder_forward.18} parent=88 // pred_fallthru
              _
          $region89: #{decoder_forward.18} parent=84 // pred_fallthru
            _
          %507 = vnop
        $region85: #{decoder_forward.18} parent=68 // pred_fallthru
          _
      $region69: #{decoder_forward.18} parent=5 // pred_fallthru
        _
      %p508 = scmp.le.s32.totalorder 2, %s9
      // Predicated region
      $region123: #{decoder_forward.18} parent=5 // pred_check
        %p509 = pneg %p508
      $region124: #{decoder_forward.18} parent=5 // pred_check_branch
        %511 = sbr.rel (%p509) target = $region126
      $region125: #{decoder_forward.18} parent=5 // pred_region
        %s512 = ssub.s32 %s9, 2
        // Predicated region
        $region127: #{decoder_forward.18} parent=125 // pred_check
          %p513 = pneg %p141
        $region128: #{decoder_forward.18} parent=125 // pred_check_branch
          %515 = sbr.rel (%p513) target = $region130
        $region129: #{decoder_forward.18} parent=125 // pred_region
          %s516 = sand.u32 %s126, 1
          %s517 = sand.u32 %s126, 1
          %s518 = smul.addr %s517, 8
          %s519 = scalar_lea.vmem [#allocation4], %s518
        $region130: #{decoder_forward.18} parent=125 // pred_fallthru
          _
      $region126: #{decoder_forward.18} parent=5 // pred_fallthru
        _
    $region6: #{decoder_forward.18} parent=1 // loop_footer
      %s13 = sadd.s32 1, %s9
    $region7: #{decoder_forward.18} parent=1 // loop_footer_branch
      %8 = sbr.rel target = $region3
    $region8: #{decoder_forward.18} parent=1 // loop_exit
      _

// kernel: decoder_forward.22
$region0: #{decoder_forward.22}
  #allocation0 [shape = 'u32[]', space=smem, size = 0x4, offset = 0x4, fixed_abs, tag = 'smem constant byte address 0x4 - core index']
  #allocation1 [shape = 'u32[72,128]{1,0:T(1,128)}', space=vmem, size = 0x9000, scoped, tag = 'internal scratch']
  #allocation2 [shape = 'f32[16,256]{1,0:T(8,128)}', space=vmem, size = 0x4000, scoped, tag = 'scratch operand']
  %s0 = inlined_call_operand.vmem [shape: bf16[16,128], index: 0, kind: input, shape index: {}]
  %s1 = inlined_call_operand.vmem [shape: bf16[128,256], index: 1, kind: input, shape index: {}]
  %s2 = inlined_call_operand.vmem [shape: f32[1,256], index: 2, kind: input, shape index: {}]
  %s3 = inlined_call_operand.vmem [shape: bf16[16,256], index: 3, kind: output, shape index: {}]
  %s4 = sld [smem:[#allocation0]]
  $region30: #{decoder_forward.22} parent=0
    _
  %s6 = ssub.s32 1, %s4
  %s7 = scalar_select 0, %s6, %s4
  // Predicated region
  $region2: #{decoder_forward.22} parent=0 // pred_check
    _
  $region3: #{decoder_forward.22} parent=0 // pred_check_branch
    %9 = sbr.rel (0) target = $region5
  $region4: #{decoder_forward.22} parent=0 // pred_region
    _
  $region5: #{decoder_forward.22} parent=0 // pred_fallthru
    _
  // Predicated region
  $region6: #{decoder_forward.22} parent=0 // pred_check
    _
  $region7: #{decoder_forward.22} parent=0 // pred_check_branch
    %11 = sbr.rel (0) target = $region9
  $region8: #{decoder_forward.22} parent=0 // pred_region
    _
  $region9: #{decoder_forward.22} parent=0 // pred_fallthru
    _
  // Predicated region
  $region10: #{decoder_forward.22} parent=0 // pred_check
    _
  $region11: #{decoder_forward.22} parent=0 // pred_check_branch
    %13 = sbr.rel (0) target = $region13
  $region12: #{decoder_forward.22} parent=0 // pred_region
    _
  $region13: #{decoder_forward.22} parent=0 // pred_fallthru
    _
  %p14 = scmp.eq.s32.totalorder 0, 0
  // Predicated region
  $region14: #{decoder_forward.22} parent=0 // pred_check
    %p15 = pneg %p14
  $region15: #{decoder_forward.22} parent=0 // pred_check_branch
    %17 = sbr.rel (%p15) target = $region17
  $region16: #{decoder_forward.22} parent=0 // pred_region
    %18 = vst [vmem:[#allocation2] sm:$0xff] 0.0
    %19 = vst [vmem:[#allocation2 + $0x8] sm:$0xff] 0.0
    %20 = vst [vmem:[#allocation2 + $0x10] sm:$0xff] 0.0
    %21 = vst [vmem:[#allocation2 + $0x18] sm:$0xff] 0.0
  $region17: #{decoder_forward.22} parent=0 // pred_fallthru
    _
  %v22 = vld [vmem:[#allocation2] sm:$0xff]
  %v23 = vld [vmem:[#allocation2 + $0x8] sm:$0xff]
  %v24 = vld [vmem:[#allocation2 + $0x10] sm:$0xff]
  %v25 = vld [vmem:[#allocation2 + $0x18] sm:$0xff]
  %v26 = vld [vmem:[%s0] sm:$0xf]
  %v27 = vld [vmem:[%s0 + $0x4] sm:$0xf]
  %v28 = vld [vmem:[%s1] sm:$0xff]
  %v29 = vld [vmem:[%s1 + $0x8] sm:$0xff]
  %v30 = vld [vmem:[%s1 + $0x10] sm:$0xff]
  %v31 = vld [vmem:[%s1 + $0x18] sm:$0xff]
  %v32 = vld [vmem:[%s1 + $0x20] sm:$0xff]
  %v33 = vld [vmem:[%s1 + $0x28] sm:$0xff]
  %v34 = vld [vmem:[%s1 + $0x30] sm:$0xff]
  %v35 = vld [vmem:[%s1 + $0x38] sm:$0xff]
  %v36 = vld [vmem:[%s1 + $0x40] sm:$0xff]
  %v37 = vld [vmem:[%s1 + $0x48] sm:$0xff]
  %v38 = vld [vmem:[%s1 + $0x50] sm:$0xff]
  %v39 = vld [vmem:[%s1 + $0x58] sm:$0xff]
  %v40 = vld [vmem:[%s1 + $0x60] sm:$0xff]
  %v41 = vld [vmem:[%s1 + $0x68] sm:$0xff]
  %v42 = vld [vmem:[%s1 + $0x70] sm:$0xff]
  %v43 = vld [vmem:[%s1 + $0x78] sm:$0xff]
  %v46 = vunpack.c.l.b16 %v26
  %v47 = vunpack.c.l.b16 %v27
  %v48 = vpack.c.b16 %v47, %v46
  %v66 = vunpack.c.l.b16 %v28
  %v67 = vunpack.c.h.b16 %v28
  %v68 = vunpack.c.l.b16 %v29
  %v69 = vunpack.c.h.b16 %v29
  %v70 = vunpack.c.l.b16 %v30
  %v71 = vunpack.c.h.b16 %v30
  %v72 = vunpack.c.l.b16 %v31
  %v73 = vunpack.c.h.b16 %v31
  %v74 = vunpack.c.l.b16 %v32
  %v75 = vunpack.c.h.b16 %v32
  %v76 = vunpack.c.l.b16 %v33
  %v77 = vunpack.c.h.b16 %v33
  %v78 = vunpack.c.l.b16 %v34
  %v79 = vunpack.c.h.b16 %v34
  %v80 = vunpack.c.l.b16 %v35
  %v81 = vunpack.c.h.b16 %v35
  %v82 = vunpack.c.l.b16 %v36
  %v83 = vunpack.c.h.b16 %v36
  %v84 = vunpack.c.l.b16 %v37
  %v85 = vunpack.c.h.b16 %v37
  %v86 = vunpack.c.l.b16 %v38
  %v87 = vunpack.c.h.b16 %v38
  %v88 = vunpack.c.l.b16 %v39
  %v89 = vunpack.c.h.b16 %v39
  %v90 = vunpack.c.l.b16 %v40
  %v91 = vunpack.c.h.b16 %v40
  %v92 = vunpack.c.l.b16 %v41
  %v93 = vunpack.c.h.b16 %v41
  %v94 = vunpack.c.l.b16 %v42
  %v95 = vunpack.c.h.b16 %v42
  %v96 = vunpack.c.l.b16 %v43
  %v97 = vunpack.c.h.b16 %v43
  %v98 = vpack.c.b16 %v68, %v66
  %v99 = vpack.c.b16 %v69, %v67
  %v100 = vpack.c.b16 %v72, %v70
  %v101 = vpack.c.b16 %v73, %v71
  %v102 = vpack.c.b16 %v76, %v74
  %v103 = vpack.c.b16 %v77, %v75
  %v104 = vpack.c.b16 %v80, %v78
  %v105 = vpack.c.b16 %v81, %v79
  %v106 = vpack.c.b16 %v84, %v82
  %v107 = vpack.c.b16 %v85, %v83
  %v108 = vpack.c.b16 %v88, %v86
  %v109 = vpack.c.b16 %v89, %v87
  %v110 = vpack.c.b16 %v92, %v90
  %v111 = vpack.c.b16 %v93, %v91
  %v112 = vpack.c.b16 %v96, %v94
  %v113 = vpack.c.b16 %v97, %v95
  %130 = vmatpush.bf16.msra.mxu0 %v112
  %131 = vmatpush.bf16.msra.mxu0 %v110
  %132 = vmatpush.bf16.msra.mxu0 %v108
  %133 = vmatpush.bf16.msra.mxu0 %v106
  %134 = vmatpush.bf16.msra.mxu0 %v104
  %135 = vmatpush.bf16.msra.mxu0 %v102
  %136 = vmatpush.bf16.msra.mxu0 %v100
  %137 = vmatpush.bf16.msra.mxu0 %v98
  %138 = vmatmul.bf16.gmra.mxu0 %v48
  %v139 = vpop.f32.mrf.mxu0
  %v140 = vadd.f32 0.0, %v139
  %v141 = vpop.f32.mrf.mxu0
  %v142 = vadd.f32 0.0, %v141
  %143 = vdwg.mxu0
  %144 = vmatpush.bf16.msra.mxu0 %v113
  %145 = vmatpush.bf16.msra.mxu0 %v111
  %146 = vmatpush.bf16.msra.mxu0 %v109
  %147 = vmatpush.bf16.msra.mxu0 %v107
  %148 = vmatpush.bf16.msra.mxu0 %v105
  %149 = vmatpush.bf16.msra.mxu0 %v103
  %150 = vmatpush.bf16.msra.mxu0 %v101
  %151 = vmatpush.bf16.msra.mxu0 %v99
  %152 = vmatmul.bf16.gmra.mxu0 %v48
  %v153 = vpop.f32.mrf.mxu0
  %v154 = vadd.f32 0.0, %v153
  %v155 = vpop.f32.mrf.mxu0
  %v156 = vadd.f32 0.0, %v155
  %157 = vdwg.mxu0
  %v158 = vadd.f32 %v22, %v140
  %v159 = vadd.f32 %v23, %v154
  %v160 = vadd.f32 %v24, %v142
  %v161 = vadd.f32 %v25, %v156
  %162 = vst [vmem:[#allocation2] sm:$0xff] %v158
  %163 = vst [vmem:[#allocation2 + $0x8] sm:$0xff] %v159
  %164 = vst [vmem:[#allocation2 + $0x10] sm:$0xff] %v160
  %165 = vst [vmem:[#allocation2 + $0x18] sm:$0xff] %v161
  // Predicated region
  $region18: #{decoder_forward.22} parent=0 // pred_check
    %p166 = pneg %p14
  $region19: #{decoder_forward.22} parent=0 // pred_check_branch
    %168 = sbr.rel (%p166) target = $region21
  $region20: #{decoder_forward.22} parent=0 // pred_region
    %v169 = vld [vmem:[#allocation2] sm:$0xff]
    %v170 = vld [vmem:[#allocation2 + $0x8] sm:$0xff]
    %v171 = vld [vmem:[#allocation2 + $0x10] sm:$0xff]
    %v172 = vld [vmem:[#allocation2 + $0x18] sm:$0xff]
    %v173 = vld [vmem:[%s2] sm:$0x3]
    %v175 = vperm.slane %v173, 0
    %v176 = vperm.slane %v173, 1
    %v179 = vadd.f32 %v169, %v175
    %v180 = vadd.f32 %v170, %v176
    %v181 = vadd.f32 %v171, %v175
    %v182 = vadd.f32 %v172, %v176
    %v183 = vpack.c.bf16 %v180, %v179
    %v184 = vpack.c.bf16 %v182, %v181
    %185 = vst [vmem:[%s3] sm:$0xff] %v183
    %186 = vst [vmem:[%s3 + $0x8] sm:$0xff] %v184
  $region21: #{decoder_forward.22} parent=0 // pred_fallthru
    _
  // Predicated region
  $region22: #{decoder_forward.22} parent=0 // pred_check
    _
  $region23: #{decoder_forward.22} parent=0 // pred_check_branch
    %188 = sbr.rel (0) target = $region25
  $region24: #{decoder_forward.22} parent=0 // pred_region
    _
  $region25: #{decoder_forward.22} parent=0 // pred_fallthru
    _
  // Predicated region
  $region26: #{decoder_forward.22} parent=0 // pred_check
    _
  $region27: #{decoder_forward.22} parent=0 // pred_check_branch
    %190 = sbr.rel (0) target = $region29
  $region28: #{decoder_forward.22} parent=0 // pred_region
    _
  $region29: #{decoder_forward.22} parent=0 // pred_fallthru
    _

// kernel: decoder_forward.23
$region0: #{decoder_forward.23}
  #allocation0 [shape = 'u32[]', space=smem, size = 0x4, offset = 0x4, fixed_abs, tag = 'smem constant byte address 0x4 - core index']
  #allocation1 [shape = 'u32[72,128]{1,0:T(1,128)}', space=vmem, size = 0x9000, scoped, tag = 'internal scratch']
  %s0 = inlined_call_operand.vmem [shape: bf16[2,8,128], index: 0, kind: input, shape index: {}]
  %s1 = inlined_call_operand.vmem [shape: bf16[2,8,256], index: 1, kind: input, shape index: {}, may-alias: {1,2}]
  %s2 = inlined_call_operand.vmem [shape: bf16[2,8,256], index: 2, kind: input, shape index: {}, may-alias: {1,2}]
  %s3 = inlined_call_operand.vmem [shape: f32[8,8], index: 3, kind: input, shape index: {}]
  %s4 = inlined_call_operand.vmem [shape: f32[2,1,8], index: 4, kind: input, shape index: {}]
  %s5 = inlined_call_operand.vmem [shape: bf16[2,8,128], index: 5, kind: output, shape index: {0}]
  %s6 = inlined_call_operand.hbm [shape: f32[2,4,8,8], index: 6, kind: output, shape index: {1}]
  %7 = xla_tuple %s5, %s6
  %s8 = sld [smem:[#allocation0]]
  $region61: #{decoder_forward.23} parent=0
    _
  %s10 = ssub.s32 1, %s8
  %s11 = scalar_select 0, %s10, %s8
  $region1: #{decoder_forward.23} parent=0
    #allocation2 [shape = 'u8[32768]{0}', space=vmem, size = 0x8000, scoped, tag = 'output window, operand 1']
    #allocation3 [shape = 's32[2]{0}', space=sflag, size = 0x8, scoped, tag = 'scoped memory for decoder_forward.23']
    %12 = vsyncpa [#allocation3], 0
    %s13 = scalar_lea.sflag [#allocation3], 1
    %14 = vsyncpa %s13, 0
    loop: start=0, step=1, limit=4
    $region2: #{decoder_forward.23} parent=1 // loop_pre_header
      _
    $region3: #{decoder_forward.23} parent=1 // loop_header
      %s16 = sphi 0, %s20
      %p17 = scmp.ge.s32.totalorder %s16, 4
      %s23 = sphi 0, %s35
      %s24 = sphi 0, %s31
      %s25 = sphi 0, %s23
      %s26 = sphi 0, %s24
      %s27 = sphi 0, %s25
      %s28 = sphi 0, %s26
      %s40 = sphi 0, %s42
      %s43 = sphi 0, %s40
      %s44 = sphi 0, %s43
      %s60 = sphi 0, %s44
      %s66 = sphi 0, %s68
      %s69 = sphi 0, %s66
      %s70 = sphi 0, %s69
      %s86 = sphi 0, %s70
      %s92 = sphi 0, %s94
      %s95 = sphi 0, %s92
      %s96 = sphi 0, %s95
      %s112 = sphi 0, %s96
      %s118 = sphi 0, %s120
      %s121 = sphi 0, %s118
      %s122 = sphi 0, %s121
      %s138 = sphi 0, %s122
      %s144 = sphi 0, %s146
      %s147 = sphi 0, %s144
      %s148 = sphi 0, %s147
      %s164 = sphi 0, %s148
      %s172 = sphi 0, %s174
      %s175 = sphi 0, %s172
      %s176 = sphi 0, %s175
      %s192 = sphi 0, %s176
      %s200 = sphi 0, %s202
      %s203 = sphi 0, %s200
      %s204 = sphi 0, %s203
      %s220 = sphi 0, %s204
    $region4: #{decoder_forward.23} parent=1 // loop_header_branch
      %19 = sbr.rel (%p17) target = $region8
    $region5: #{decoder_forward.23} parent=1 // loop_body
      %s21 = ssub.s32 %s16, 1
      %s22 = ssub.s32 %s16, 2
      %s29 = sadd.s32 1, %s24
      %p30 = scmp.ge.s32.totalorder %s29, 1
      %s31 = scalar_select %p30, 0, %s29
      %s32 = sadd.s32 1, %s23
      %s33 = scalar_select %p30, %s32, %s23
      %p34 = scmp.ge.s32.totalorder %s33, 2
      %s35 = scalar_select %p34, 0, %s33
      %s36 = ssub.s32 %s23, %s35
      %s37 = ssub.s32 %s24, %s31
      %s38 = sor.u32 %s36, %s37
      %p39 = scmp.eq.s32.totalorder %s38, 0
      %s41 = sadd.s32 %s40, 1
      %s42 = scalar_select %p39, %s40, %s41
      %p45 = pneg %p39
      %p46 = scmp.eq.s32.totalorder %s16, 1
      %p47 = por %p45, %p46
      %p48 = scmp.ne.s32.totalorder %s40, %s43
      %p49 = scmp.eq.s32.totalorder %s16, 0
      %p50 = por %p48, %p49
      %p51 = scmp.ne.s32.totalorder %s40, %s43
      %p52 = scmp.eq.s32.totalorder %s21, 1
      %p53 = por %p51, %p52
      %p54 = scmp.ne.s32.totalorder %s43, %s44
      %p55 = scmp.eq.s32.totalorder %s21, 0
      %p56 = por %p54, %p55
      %p57 = scmp.ne.s32.totalorder %s43, %s44
      %p58 = scmp.eq.s32.totalorder %s22, 1
      %p59 = por %p57, %p58
      %p61 = scmp.ne.s32.totalorder %s44, %s60
      %p62 = scmp.eq.s32.totalorder %s22, 0
      %p63 = por %p61, %p62
      %s64 = ssub.s32 %s23, %s35
      %p65 = scmp.eq.s32.totalorder %s64, 0
      %s67 = sadd.s32 %s66, 1
      %s68 = scalar_select %p65, %s66, %s67
      %p71 = pneg %p65
      %p72 = scmp.eq.s32.totalorder %s16, 1
      %p73 = por %p71, %p72
      %p74 = scmp.ne.s32.totalorder %s66, %s69
      %p75 = scmp.eq.s32.totalorder %s16, 0
      %p76 = por %p74, %p75
      %p77 = scmp.ne.s32.totalorder %s66, %s69
      %p78 = scmp.eq.s32.totalorder %s21, 1
      %p79 = por %p77, %p78
      %p80 = scmp.ne.s32.totalorder %s69, %s70
      %p81 = scmp.eq.s32.totalorder %s21, 0
      %p82 = por %p80, %p81
      %p83 = scmp.ne.s32.totalorder %s69, %s70
      %p84 = scmp.eq.s32.totalorder %s22, 1
      %p85 = por %p83, %p84
      %p87 = scmp.ne.s32.totalorder %s70, %s86
      %p88 = scmp.eq.s32.totalorder %s22, 0
      %p89 = por %p87, %p88
      %s90 = ssub.s32 %s23, %s35
      %p91 = scmp.eq.s32.totalorder %s90, 0
      %s93 = sadd.s32 %s92, 1
      %s94 = scalar_select %p91, %s92, %s93
      %p97 = pneg %p91
      %p98 = scmp.eq.s32.totalorder %s16, 1
      %p99 = por %p97, %p98
      %p100 = scmp.ne.s32.totalorder %s92, %s95
      %p101 = scmp.eq.s32.totalorder %s16, 0
      %p102 = por %p100, %p101
      %p103 = scmp.ne.s32.totalorder %s92, %s95
      %p104 = scmp.eq.s32.totalorder %s21, 1
      %p105 = por %p103, %p104
      %p106 = scmp.ne.s32.totalorder %s95, %s96
      %p107 = scmp.eq.s32.totalorder %s21, 0
      %p108 = por %p106, %p107
      %p109 = scmp.ne.s32.totalorder %s95, %s96
      %p110 = scmp.eq.s32.totalorder %s22, 1
      %p111 = por %p109, %p110
      %p113 = scmp.ne.s32.totalorder %s96, %s112
      %p114 = scmp.eq.s32.totalorder %s22, 0
      %p115 = por %p113, %p114
      %s116 = ssub.s32 %s24, %s31
      %p117 = scmp.eq.s32.totalorder %s116, 0
      %s119 = sadd.s32 %s118, 1
      %s120 = scalar_select %p117, %s118, %s119
      %p123 = pneg %p117
      %p124 = scmp.eq.s32.totalorder %s16, 1
      %p125 = por %p123, %p124
      %p126 = scmp.ne.s32.totalorder %s118, %s121
      %p127 = scmp.eq.s32.totalorder %s16, 0
      %p128 = por %p126, %p127
      %p129 = scmp.ne.s32.totalorder %s118, %s121
      %p130 = scmp.eq.s32.totalorder %s21, 1
      %p131 = por %p129, %p130
      %p132 = scmp.ne.s32.totalorder %s121, %s122
      %p133 = scmp.eq.s32.totalorder %s21, 0
      %p134 = por %p132, %p133
      %p135 = scmp.ne.s32.totalorder %s121, %s122
      %p136 = scmp.eq.s32.totalorder %s22, 1
      %p137 = por %p135, %p136
      %p139 = scmp.ne.s32.totalorder %s122, %s138
      %p140 = scmp.eq.s32.totalorder %s22, 0
      %p141 = por %p139, %p140
      %s142 = ssub.s32 %s23, %s35
      %p143 = scmp.eq.s32.totalorder %s142, 0
      %s145 = sadd.s32 %s144, 1
      %s146 = scalar_select %p143, %s144, %s145
      %p149 = pneg %p143
      %p150 = scmp.eq.s32.totalorder %s16, 1
      %p151 = por %p149, %p150
      %p152 = scmp.ne.s32.totalorder %s144, %s147
      %p153 = scmp.eq.s32.totalorder %s16, 0
      %p154 = por %p152, %p153
      %p155 = scmp.ne.s32.totalorder %s144, %s147
      %p156 = scmp.eq.s32.totalorder %s21, 1
      %p157 = por %p155, %p156
      %p158 = scmp.ne.s32.totalorder %s147, %s148
      %p159 = scmp.eq.s32.totalorder %s21, 0
      %p160 = por %p158, %p159
      %p161 = scmp.ne.s32.totalorder %s147, %s148
      %p162 = scmp.eq.s32.totalorder %s22, 1
      %p163 = por %p161, %p162
      %p165 = scmp.ne.s32.totalorder %s148, %s164
      %p166 = scmp.eq.s32.totalorder %s22, 0
      %p167 = por %p165, %p166
      %s168 = ssub.s32 %s23, %s35
      %s169 = ssub.s32 %s24, %s31
      %s170 = sor.u32 %s168, %s169
      %p171 = scmp.eq.s32.totalorder %s170, 0
      %s173 = sadd.s32 %s172, 1
      %s174 = scalar_select %p171, %s172, %s173
      %p177 = pneg %p171
      %p178 = scmp.eq.s32.totalorder %s16, 1
      %p179 = por %p177, %p178
      %p180 = scmp.ne.s32.totalorder %s172, %s175
      %p181 = scmp.eq.s32.totalorder %s16, 0
      %p182 = por %p180, %p181
      %p183 = scmp.ne.s32.totalorder %s172, %s175
      %p184 = scmp.eq.s32.totalorder %s21, 1
      %p185 = por %p183, %p184
      %p186 = scmp.ne.s32.totalorder %s175, %s176
      %p187 = scmp.eq.s32.totalorder %s21, 0
      %p188 = por %p186, %p187
      %p189 = scmp.ne.s32.totalorder %s175, %s176
      %p190 = scmp.eq.s32.totalorder %s22, 1
      %p191 = por %p189, %p190
      %p193 = scmp.ne.s32.totalorder %s176, %s192
      %p194 = scmp.eq.s32.totalorder %s22, 0
      %p195 = por %p193, %p194
      %s196 = ssub.s32 %s23, %s35
      %s197 = ssub.s32 %s24, %s31
      %s198 = sor.u32 %s196, %s197
      %p199 = scmp.eq.s32.totalorder %s198, 0
      %s201 = sadd.s32 %s200, 1
      %s202 = scalar_select %p199, %s200, %s201
      %p205 = pneg %p199
      %p206 = scmp.eq.s32.totalorder %s16, 1
      %p207 = por %p205, %p206
      %p208 = scmp.ne.s32.totalorder %s200, %s203
      %p209 = scmp.eq.s32.totalorder %s16, 0
      %p210 = por %p208, %p209
      %p211 = scmp.ne.s32.totalorder %s200, %s203
      %p212 = scmp.eq.s32.totalorder %s21, 1
      %p213 = por %p211, %p212
      %p214 = scmp.ne.s32.totalorder %s203, %s204
      %p215 = scmp.eq.s32.totalorder %s21, 0
      %p216 = por %p214, %p215
      %p217 = scmp.ne.s32.totalorder %s203, %s204
      %p218 = scmp.eq.s32.totalorder %s22, 1
      %p219 = por %p217, %p218
      %p221 = scmp.ne.s32.totalorder %s204, %s220
      %p222 = scmp.eq.s32.totalorder %s22, 0
      %p223 = por %p221, %p222
      %p224 = scmp.le.s32.totalorder 1, %s16
      %p225 = scmp.lt.s32.totalorder %s16, 3
      %p226 = pnand %p224, %p225
      %p227 = pneg %p226
      // Predicated region
      $region9: #{decoder_forward.23} parent=5 // pred_check
        _
      $region10: #{decoder_forward.23} parent=5 // pred_check_branch
        %229 = sbr.rel (%p226) target = $region12
      $region11: #{decoder_forward.23} parent=5 // pred_region
        %s230 = ssub.s32 %s16, 1
        // Predicated region
        $region13: #{decoder_forward.23} parent=11 // pred_check
          %p231 = pneg %p134
        $region14: #{decoder_forward.23} parent=11 // pred_check_branch
          %233 = sbr.rel (%p231) target = $region16
        $region15: #{decoder_forward.23} parent=11 // pred_region
          %p234 = scmp.lt.s32.totalorder %s26, 0
          %s235 = scalar_select %p234, %s26, 0
          %s236 = smul.addr %s235, 8
          %s237 = scalar_lea.vmem %s3, %s236
        $region16: #{decoder_forward.23} parent=11 // pred_fallthru
          _
      $region12: #{decoder_forward.23} parent=5 // pred_fallthru
        _
      %p238 = scmp.lt.s32.totalorder %s16, 2
      // Predicated region
      $region17: #{decoder_forward.23} parent=5 // pred_check
        %p239 = pneg %p238
      $region18: #{decoder_forward.23} parent=5 // pred_check_branch
        %241 = sbr.rel (%p239) target = $region20
      $region19: #{decoder_forward.23} parent=5 // pred_region
        // Predicated region
        $region21: #{decoder_forward.23} parent=19 // pred_check
          %p242 = pneg %p50
        $region22: #{decoder_forward.23} parent=19 // pred_check_branch
          %244 = sbr.rel (%p242) target = $region24
        $region23: #{decoder_forward.23} parent=19 // pred_region
          %p245 = scmp.lt.s32.totalorder %s23, 1
          %s246 = scalar_select %p245, %s23, 1
          %p247 = scmp.lt.s32.totalorder %s24, 0
          %s248 = scalar_select %p247, %s24, 0
          %s249 = sadd.s32 %s248, %s246
          %s250 = smul.addr %s249, 4
          %s251 = scalar_lea.vmem %s0, %s250
        $region24: #{decoder_forward.23} parent=19 // pred_fallthru
          _
        // Predicated region
        $region25: #{decoder_forward.23} parent=19 // pred_check
          %p252 = pneg %p76
        $region26: #{decoder_forward.23} parent=19 // pred_check_branch
          %254 = sbr.rel (%p252) target = $region28
        $region27: #{decoder_forward.23} parent=19 // pred_region
          %p255 = scmp.lt.s32.totalorder %s23, 1
          %s256 = scalar_select %p255, %s23, 1
          %s257 = smul.addr %s256, 2
          %s258 = smul.addr %s257, 4
          %s259 = scalar_lea.vmem %s1, %s258
        $region28: #{decoder_forward.23} parent=19 // pred_fallthru
          _
        // Predicated region
        $region29: #{decoder_forward.23} parent=19 // pred_check
          %p260 = pneg %p102
        $region30: #{decoder_forward.23} parent=19 // pred_check_branch
          %262 = sbr.rel (%p260) target = $region32
        $region31: #{decoder_forward.23} parent=19 // pred_region
          %p263 = scmp.lt.s32.totalorder %s23, 1
          %s264 = scalar_select %p263, %s23, 1
          %s265 = smul.addr %s264, 2
          %s266 = sadd.s32 1, %s265
          %s267 = smul.addr %s266, 4
          %s268 = scalar_lea.vmem %s2, %s267
        $region32: #{decoder_forward.23} parent=19 // pred_fallthru
          _
        // Predicated region
        $region33: #{decoder_forward.23} parent=19 // pred_check
          %p269 = pneg %p154
        $region34: #{decoder_forward.23} parent=19 // pred_check_branch
          %271 = sbr.rel (%p269) target = $region36
        $region35: #{decoder_forward.23} parent=19 // pred_region
          %p272 = scmp.lt.s32.totalorder %s23, 1
          %s273 = scalar_select %p272, %s23, 1
          %s274 = scalar_lea.vmem %s4, %s273
        $region36: #{decoder_forward.23} parent=19 // pred_fallthru
          _
      $region20: #{decoder_forward.23} parent=5 // pred_fallthru
        _
      %p275 = scmp.le.s32.totalorder 1, %s16
      %p276 = scmp.lt.s32.totalorder %s16, 3
      %p277 = pnand %p275, %p276
      %p278 = pneg %p277
      // Predicated region
      $region37: #{decoder_forward.23} parent=5 // pred_check
        _
      $region38: #{decoder_forward.23} parent=5 // pred_check_branch
        %280 = sbr.rel (%p277) target = $region40
      $region39: #{decoder_forward.23} parent=5 // pred_region
        %s281 = ssub.s32 %s16, 1
        %p282 = scmp.lt.s32.totalorder %s25, 1
        %s283 = scalar_select %p282, %s25, 1
        %p284 = scmp.lt.s32.totalorder %s26, 0
        %s285 = scalar_select %p284, %s26, 0
        %s286 = sadd.s32 %s285, %s283
        %s287 = smul.addr %s286, 4
        %s288 = scalar_lea.vmem %s0, %s287
        %p289 = pneg %p56
        %p290 = pneg %p53
        %p291 = scmp.lt.s32.totalorder %s25, 1
        %s292 = scalar_select %p291, %s25, 1
        %s293 = smul.addr %s292, 2
        %s294 = smul.addr %s293, 4
        %s295 = scalar_lea.vmem %s1, %s294
        %p296 = pneg %p82
        %p297 = pneg %p79
        %p298 = scmp.lt.s32.totalorder %s25, 1
        %s299 = scalar_select %p298, %s25, 1
        %s300 = smul.addr %s299, 2
        %s301 = sadd.s32 1, %s300
        %s302 = smul.addr %s301, 4
        %s303 = scalar_lea.vmem %s2, %s302
        %p304 = pneg %p108
        %p305 = pneg %p105
        %p306 = scmp.lt.s32.totalorder %s26, 0
        %s307 = scalar_select %p306, %s26, 0
        %s308 = smul.addr %s307, 8
        %s309 = scalar_lea.vmem %s3, %s308
        %p310 = pneg %p134
        %p311 = pneg %p131
        %p312 = scmp.lt.s32.totalorder %s25, 1
        %s313 = scalar_select %p312, %s25, 1
        %s314 = scalar_lea.vmem %s4, %s313
        %p315 = pneg %p160
        %p316 = pneg %p157
        %p317 = pneg %p188
        %p318 = pneg %p185
        %p319 = scmp.lt.s32.totalorder %s25, 1
        %s320 = scalar_select %p319, %s25, 1
        %p321 = scmp.lt.s32.totalorder %s26, 0
        %s322 = scalar_select %p321, %s26, 0
        %s323 = sadd.s32 %s322, %s320
        %s324 = smul.addr %s323, 4
        %s325 = scalar_lea.vmem %s5, %s324
        %p326 = pneg %p216
        %p327 = pneg %p213
        %s328 = sand.u32 %s203, 1
        %s329 = scalar_lea.sflag [#allocation3], %s328
        %s330 = sand.u32 %s203, 1
        %s331 = smul.addr %s330, 32
        %s332 = scalar_lea.vmem [#allocation2], %s331
        %p333 = scmp.lt.s32.totalorder %s25, 1
        %s334 = scalar_select %p333, %s25, 1
        %p335 = scmp.lt.s32.totalorder %s26, 0
        %s336 = scalar_select %p335, %s26, 0
        %s337 = sadd.s32 %s336, %s334
        %s338 = smul.addr %s337, 4
        %s339 = scalar_lea.vmem %s0, %s338
        %p340 = scmp.lt.s32.totalorder %s25, 1
        %s341 = scalar_select %p340, %s25, 1
        %s342 = smul.addr %s341, 2
        %s343 = smul.addr %s342, 4
        %s344 = scalar_lea.vmem %s1, %s343
        %p345 = scmp.lt.s32.totalorder %s25, 1
        %s346 = scalar_select %p345, %s25, 1
        %s347 = smul.addr %s346, 2
        %s348 = sadd.s32 1, %s347
        %s349 = smul.addr %s348, 4
        %s350 = scalar_lea.vmem %s2, %s349
        %p351 = scmp.lt.s32.totalorder %s26, 0
        %s352 = scalar_select %p351, %s26, 0
        %s353 = smul.addr %s352, 8
        %s354 = scalar_lea.vmem %s3, %s353
        %p355 = scmp.lt.s32.totalorder %s25, 1
        %s356 = scalar_select %p355, %s25, 1
        %s357 = scalar_lea.vmem %s4, %s356
        %p358 = scmp.lt.s32.totalorder %s25, 1
        %s359 = scalar_select %p358, %s25, 1
        %p360 = scmp.lt.s32.totalorder %s26, 0
        %s361 = scalar_select %p360, %s26, 0
        %s362 = sadd.s32 %s361, %s359
        %s363 = smul.addr %s362, 4
        %s364 = scalar_lea.vmem %s5, %s363
        %v366 = vld [vmem:[%s339] sm:$0xf]
        %v367 = vld [vmem:[%s344] sm:$0xf]
        %v368 = vld [vmem:[%s350] sm:$0xf]
        %v369 = vld [vmem:[%s354] sm:$0xff]
        %v370 = vld [vmem:[%s357] sm:$0x1]
        %v372 = vperm.slane %v370, 0
        %v374 = vadd.f32 %v369, %v372
        %v375 = vunpack.c.l.bf16 %v366
        %v376 = vmul.f32 %v375, 0.17675781
        %v377 = vpack.c.bf16 %v376, %v376
        %vm378 = vcmask 261120
        %v380 = vsel %vm378, %v377, 0
        %v383 = vsel %vm378, %v367, 0
        %385 = vmatpush.bf16.xpose.msra.mxu0 0
        %386 = vmatpush.bf16.xpose.msra.mxu0 0
        %387 = vmatpush.bf16.xpose.msra.mxu0 0
        %388 = vmatpush.bf16.xpose.msra.mxu0 0
        %389 = vmatpush.bf16.xpose.msra.mxu0 0
        %390 = vmatpush.bf16.xpose.msra.mxu0 0
        %391 = vmatpush.bf16.xpose.msra.mxu0 0
        %392 = vmatpush.bf16.xpose.msra.mxu0 %v383
        %393 = vmatmul.bf16.gmra.mxu0 %v380
        %v394 = vpop.f32.mrf.mxu0
        %v395 = vadd.f32 %v374, %v394
        %v396 = vpop.f32.mrf.mxu0
        %397 = vdwg.mxu0
        %vm398 = vcmask 64512
        %v399 = vsel %vm398, %v395, -inf
        %400 = vmax.xlane.f32.xlu0 %v399
        %v401 = vpop.xlane.xlu0 %400
        %v402 = vsub.f32 %v395, %v401
        %v403 = vmul.f32 %v402, 1.442695
        %v404 = vpow.pop %v403
        %v405 = vsel %vm398, %v404, 0.0
        %406 = vadd.xlane.f32.xlu0 %v405
        %v407 = vpop.xlane.xlu0 %406
        %v408 = vrcp.pop %v407
        %v409 = vmul.f32 %v407, %v408
        %v410 = vsub.f32 1.0, %v409
        %v411 = vmul.f32 %v408, %v410
        %v412 = vadd.f32 %v408, %v411
        %vm413 = vweird.f32 %v407
        %vm414 = vweird.f32 %v408
        %vm415 = vmor %vm413, %vm414
        %v416 = vsel %vm415, %v408, %v412
        %v417 = vand.u32 2147483647, %v407
        %vm418 = vcmp.eq.f32.partialorder %v417, 8.507059e+37
        %v419 = vand.u32 %v407, 2147483648
        %v420 = vor.u32 1.1754944e-38, %v419
        %v421 = vsel %vm418, %v420, %v416
        %v422 = vmul.f32 %v404, %v421
        %423 = vst.msk [vmem:[%s332] sm:$0xff] %vm398, %v422
        %v424 = vpack.c.bf16 %v422, %v422
        %v426 = vsel %vm398, %v424, 0
        %vm428 = vcmask 1043456
        %v430 = vsel %vm428, %v368, 0
        %432 = vmatpush.bf16.msra.mxu0 0
        %433 = vmatpush.bf16.msra.mxu0 0
        %434 = vmatpush.bf16.msra.mxu0 0
        %435 = vmatpush.bf16.msra.mxu0 0
        %436 = vmatpush.bf16.msra.mxu0 0
        %437 = vmatpush.bf16.msra.mxu0 0
        %438 = vmatpush.bf16.msra.mxu0 0
        %439 = vmatpush.bf16.msra.mxu0 %v430
        %440 = vmatmul.bf16.gmra.mxu0 %v426
        %v441 = vpop.f32.mrf.mxu0
        %v442 = vadd.f32 0.0, %v441
        %v443 = vpop.f32.mrf.mxu0
        %444 = vdwg.mxu0
        %446 = vrot.lane.b32.xlu0 %v377, 96
        %v447 = vpop.permute.xlu0 %446
        %v449 = vunpack.c.l.b16 %v367
        %v450 = vpack.c.b16 %v449, %v449
        %451 = vrot.lane.b32.xlu0 %v450, 96
        %v452 = vpop.permute.xlu0 %451
        %v454 = vsel %vm378, %v447, 0
        %v457 = vsel %vm378, %v452, 0
        %459 = vmatpush.bf16.xpose.msra.mxu0 0
        %460 = vmatpush.bf16.xpose.msra.mxu0 0
        %461 = vmatpush.bf16.xpose.msra.mxu0 0
        %462 = vmatpush.bf16.xpose.msra.mxu0 0
        %463 = vmatpush.bf16.xpose.msra.mxu0 0
        %464 = vmatpush.bf16.xpose.msra.mxu0 0
        %465 = vmatpush.bf16.xpose.msra.mxu0 0
        %466 = vmatpush.bf16.xpose.msra.mxu0 %v457
        %467 = vmatmul.bf16.gmra.mxu0 %v454
        %v468 = vpop.f32.mrf.mxu0
        %v469 = vadd.f32 %v374, %v468
        %v470 = vpop.f32.mrf.mxu0
        %471 = vdwg.mxu0
        %v472 = vsel %vm398, %v469, -inf
        %473 = vmax.xlane.f32.xlu0 %v472
        %v474 = vpop.xlane.xlu0 %473
        %v475 = vsub.f32 %v469, %v474
        %v476 = vmul.f32 %v475, 1.442695
        %v477 = vpow.pop %v476
        %v478 = vsel %vm398, %v477, 0.0
        %479 = vadd.xlane.f32.xlu0 %v478
        %v480 = vpop.xlane.xlu0 %479
        %v481 = vrcp.pop %v480
        %v482 = vmul.f32 %v480, %v481
        %v483 = vsub.f32 1.0, %v482
        %v484 = vmul.f32 %v481, %v483
        %v485 = vadd.f32 %v481, %v484
        %vm486 = vweird.f32 %v480
        %vm487 = vweird.f32 %v481
        %vm488 = vmor %vm486, %vm487
        %v489 = vsel %vm488, %v481, %v485
        %v490 = vand.u32 2147483647, %v480
        %vm491 = vcmp.eq.f32.partialorder %v490, 8.507059e+37
        %v492 = vand.u32 %v480, 2147483648
        %v493 = vor.u32 1.1754944e-38, %v492
        %v494 = vsel %vm491, %v493, %v489
        %v495 = vmul.f32 %v477, %v494
        %s496 = scalar_lea.vmem %s332, 8 [#allocation2]
        %497 = vst.msk [vmem:[%s496] sm:$0xff] %vm398, %v495
        %v498 = vpack.c.bf16 %v495, %v495
        %v500 = vunpack.c.l.b16 %v368
        %v501 = vpack.c.b16 %v500, %v500
        %502 = vrot.lane.b32.xlu0 %v501, 96
        %v503 = vpop.permute.xlu0 %502
        %v505 = vsel %vm398, %v498, 0
        %v508 = vsel %vm428, %v503, 0
        %510 = vmatpush.bf16.msra.mxu0 0
        %511 = vmatpush.bf16.msra.mxu0 0
        %512 = vmatpush.bf16.msra.mxu0 0
        %513 = vmatpush.bf16.msra.mxu0 0
        %514 = vmatpush.bf16.msra.mxu0 0
        %515 = vmatpush.bf16.msra.mxu0 0
        %516 = vmatpush.bf16.msra.mxu0 0
        %517 = vmatpush.bf16.msra.mxu0 %v508
        %518 = vmatmul.bf16.gmra.mxu0 %v505
        %v519 = vpop.f32.mrf.mxu0
        %v520 = vadd.f32 0.0, %v519
        %v521 = vpop.f32.mrf.mxu0
        %522 = vdwg.mxu0
        %523 = vrot.lane.b32.xlu0 %v377, 64
        %v524 = vpop.permute.xlu0 %523
        %525 = vrot.lane.b32.xlu0 %v450, 64
        %v526 = vpop.permute.xlu0 %525
        %v528 = vsel %vm378, %v524, 0
        %v531 = vsel %vm378, %v526, 0
        %533 = vmatpush.bf16.xpose.msra.mxu0 0
        %534 = vmatpush.bf16.xpose.msra.mxu0 0
        %535 = vmatpush.bf16.xpose.msra.mxu0 0
        %536 = vmatpush.bf16.xpose.msra.mxu0 0
        %537 = vmatpush.bf16.xpose.msra.mxu0 0
        %538 = vmatpush.bf16.xpose.msra.mxu0 0
        %539 = vmatpush.bf16.xpose.msra.mxu0 0
        %540 = vmatpush.bf16.xpose.msra.mxu0 %v531
        %541 = vmatmul.bf16.gmra.mxu0 %v528
        %v542 = vpop.f32.mrf.mxu0
        %v543 = vadd.f32 %v374, %v542
        %v544 = vpop.f32.mrf.mxu0
        %545 = vdwg.mxu0
        %v546 = vsel %vm398, %v543, -inf
        %547 = vmax.xlane.f32.xlu0 %v546
        %v548 = vpop.xlane.xlu0 %547
        %v549 = vsub.f32 %v543, %v548
        %v550 = vmul.f32 %v549, 1.442695
        %v551 = vpow.pop %v550
        %v552 = vsel %vm398, %v551, 0.0
        %553 = vadd.xlane.f32.xlu0 %v552
        %v554 = vpop.xlane.xlu0 %553
        %v555 = vrcp.pop %v554
        %v556 = vmul.f32 %v554, %v555
        %v557 = vsub.f32 1.0, %v556
        %v558 = vmul.f32 %v555, %v557
        %v559 = vadd.f32 %v555, %v558
        %vm560 = vweird.f32 %v554
        %vm561 = vweird.f32 %v555
        %vm562 = vmor %vm560, %vm561
        %v563 = vsel %vm562, %v555, %v559
        %v564 = vand.u32 2147483647, %v554
        %vm565 = vcmp.eq.f32.partialorder %v564, 8.507059e+37
        %v566 = vand.u32 %v554, 2147483648
        %v567 = vor.u32 1.1754944e-38, %v566
        %v568 = vsel %vm565, %v567, %v563
        %v569 = vmul.f32 %v551, %v568
        %s570 = scalar_lea.vmem %s332, 16 [#allocation2]
        %571 = vst.msk [vmem:[%s570] sm:$0xff] %vm398, %v569
        %v572 = vpack.c.bf16 %v569, %v569
        %573 = vrot.lane.b32.xlu0 %v501, 64
        %v574 = vpop.permute.xlu0 %573
        %v576 = vsel %vm398, %v572, 0
        %v579 = vsel %vm428, %v574, 0
        %581 = vmatpush.bf16.msra.mxu0 0
        %582 = vmatpush.bf16.msra.mxu0 0
        %583 = vmatpush.bf16.msra.mxu0 0
        %584 = vmatpush.bf16.msra.mxu0 0
        %585 = vmatpush.bf16.msra.mxu0 0
        %586 = vmatpush.bf16.msra.mxu0 0
        %587 = vmatpush.bf16.msra.mxu0 0
        %588 = vmatpush.bf16.msra.mxu0 %v579
        %589 = vmatmul.bf16.gmra.mxu0 %v576
        %v590 = vpop.f32.mrf.mxu0
        %v591 = vadd.f32 0.0, %v590
        %v592 = vpop.f32.mrf.mxu0
        %593 = vdwg.mxu0
        %594 = vrot.lane.b32.xlu0 %v377, 32
        %v595 = vpop.permute.xlu0 %594
        %596 = vrot.lane.b32.xlu0 %v450, 32
        %v597 = vpop.permute.xlu0 %596
        %v599 = vsel %vm378, %v595, 0
        %v602 = vsel %vm378, %v597, 0
        %604 = vmatpush.bf16.xpose.msra.mxu0 0
        %605 = vmatpush.bf16.xpose.msra.mxu0 0
        %606 = vmatpush.bf16.xpose.msra.mxu0 0
        %607 = vmatpush.bf16.xpose.msra.mxu0 0
        %608 = vmatpush.bf16.xpose.msra.mxu0 0
        %609 = vmatpush.bf16.xpose.msra.mxu0 0
        %610 = vmatpush.bf16.xpose.msra.mxu0 0
        %611 = vmatpush.bf16.xpose.msra.mxu0 %v602
        %612 = vmatmul.bf16.gmra.mxu0 %v599
        %v613 = vpop.f32.mrf.mxu0
        %v614 = vadd.f32 %v374, %v613
        %v615 = vpop.f32.mrf.mxu0
        %616 = vdwg.mxu0
        %v617 = vsel %vm398, %v614, -inf
        %618 = vmax.xlane.f32.xlu0 %v617
        %v619 = vpop.xlane.xlu0 %618
        %v620 = vsub.f32 %v614, %v619
        %v621 = vmul.f32 %v620, 1.442695
        %v622 = vpow.pop %v621
        %v623 = vsel %vm398, %v622, 0.0
        %624 = vadd.xlane.f32.xlu0 %v623
        %v625 = vpop.xlane.xlu0 %624
        %v626 = vrcp.pop %v625
        %v627 = vmul.f32 %v625, %v626
        %v628 = vsub.f32 1.0, %v627
        %v629 = vmul.f32 %v626, %v628
        %v630 = vadd.f32 %v626, %v629
        %vm631 = vweird.f32 %v625
        %vm632 = vweird.f32 %v626
        %vm633 = vmor %vm631, %vm632
        %v634 = vsel %vm633, %v626, %v630
        %v635 = vand.u32 2147483647, %v625
        %vm636 = vcmp.eq.f32.partialorder %v635, 8.507059e+37
        %v637 = vand.u32 %v625, 2147483648
        %v638 = vor.u32 1.1754944e-38, %v637
        %v639 = vsel %vm636, %v638, %v634
        %v640 = vmul.f32 %v622, %v639
        %s641 = scalar_lea.vmem %s332, 24 [#allocation2]
        %642 = vst.msk [vmem:[%s641] sm:$0xff] %vm398, %v640
        %v643 = vpack.c.bf16 %v640, %v640
        %644 = vrot.lane.b32.xlu0 %v501, 32
        %v645 = vpop.permute.xlu0 %644
        %v647 = vsel %vm398, %v643, 0
        %v650 = vsel %vm428, %v645, 0
        %652 = vmatpush.bf16.msra.mxu0 0
        %653 = vmatpush.bf16.msra.mxu0 0
        %654 = vmatpush.bf16.msra.mxu0 0
        %655 = vmatpush.bf16.msra.mxu0 0
        %656 = vmatpush.bf16.msra.mxu0 0
        %657 = vmatpush.bf16.msra.mxu0 0
        %658 = vmatpush.bf16.msra.mxu0 0
        %659 = vmatpush.bf16.msra.mxu0 %v650
        %660 = vmatmul.bf16.gmra.mxu0 %v647
        %v661 = vpop.f32.mrf.mxu0
        %v662 = vadd.f32 0.0, %v661
        %v663 = vpop.f32.mrf.mxu0
        %664 = vdwg.mxu0
        %666 = vrot.lane.b32.xlu0 %v520, 32
        %v667 = vpop.permute.xlu0 %666
        %670 = vrot.lane.b32.xlu0 %v591, 64
        %v671 = vpop.permute.xlu0 %670
        %674 = vrot.lane.b32.xlu0 %v662, 96
        %v675 = vpop.permute.xlu0 %674
        %v677 = vsel %vm378, %v442, %v667
        %vm678 = vcmask 523264
        %v679 = vsel %vm678, %v677, %v671
        %vm680 = vcmask 785408
        %v681 = vsel %vm680, %v679, %v675
        %v682 = vpack.c.bf16 %v681, %v681
        %683 = vst [vmem:[%s364] sm:$0xf] %v682
        %p684 = scmp.lt.s32.totalorder %s25, 1
        %s685 = scalar_select %p684, %s25, 1
        %p686 = scmp.lt.s32.totalorder %s26, 0
        %s687 = scalar_select %p686, %s26, 0
        %s688 = sadd.s32 %s687, %s685
        %s689 = smul.addr %s688, 4
        %s690 = scalar_lea.vmem %s5, %s689
        %s691 = sand.u32 %s203, 1
        %s692 = scalar_lea.sflag [#allocation3], %s691
        %s693 = sand.u32 %s203, 1
        %s694 = smul.addr %s693, 32
        %s695 = scalar_lea.vmem [#allocation2], %s694
        // Predicated region
        $region41: #{decoder_forward.23} parent=39 // pred_check
          %p696 = pneg %p185
        $region42: #{decoder_forward.23} parent=39 // pred_check_branch
          %698 = sbr.rel (%p696) target = $region44
        $region43: #{decoder_forward.23} parent=39 // pred_region
          _
        $region44: #{decoder_forward.23} parent=39 // pred_fallthru
          _
        // Predicated region
        $region45: #{decoder_forward.23} parent=39 // pred_check
          %p699 = pneg %p213
        $region46: #{decoder_forward.23} parent=39 // pred_check_branch
          %701 = sbr.rel (%p699) target = $region48
        $region47: #{decoder_forward.23} parent=39 // pred_region
          %703 = vsyncadd %s692, 0
          %s704 = smul.addr %s25, 4
          %s705 = sadd.s32 %s26, %s704
          %s706 = smul.addr %s705, 8
          %s707 = scalar_lea.hbm %s6, %s706
          %s708 = sshll.u32 %s695, 4
          %s709 = int_to_ptr.vmem [resolvable:$true] %s708
          %s710 = sshll.u32 %s707, 4
          %s711 = int_to_ptr.hbm [resolvable:$true] %s710
          %716 = dma.vmem_to_hbm [thread:$0]  %s709, 512, %s711, %s692, 128, 128, 8
        $region48: #{decoder_forward.23} parent=39 // pred_fallthru
          _
      $region40: #{decoder_forward.23} parent=5 // pred_fallthru
        _
      %p717 = scmp.le.s32.totalorder 2, %s16
      // Predicated region
      $region49: #{decoder_forward.23} parent=5 // pred_check
        %p718 = pneg %p717
      $region50: #{decoder_forward.23} parent=5 // pred_check_branch
        %720 = sbr.rel (%p718) target = $region52
      $region51: #{decoder_forward.23} parent=5 // pred_region
        %s721 = ssub.s32 %s16, 2
        // Predicated region
        $region53: #{decoder_forward.23} parent=51 // pred_check
          %p722 = pneg %p191
        $region54: #{decoder_forward.23} parent=51 // pred_check_branch
          %724 = sbr.rel (%p722) target = $region56
        $region55: #{decoder_forward.23} parent=51 // pred_region
          %p725 = scmp.lt.s32.totalorder %s27, 1
          %s726 = scalar_select %p725, %s27, 1
          %p727 = scmp.lt.s32.totalorder %s28, 0
          %s728 = scalar_select %p727, %s28, 0
          %s729 = sadd.s32 %s728, %s726
          %s730 = smul.addr %s729, 4
          %s731 = scalar_lea.vmem %s5, %s730
        $region56: #{decoder_forward.23} parent=51 // pred_fallthru
          _
        // Predicated region
        $region57: #{decoder_forward.23} parent=51 // pred_check
          %p732 = pneg %p219
        $region58: #{decoder_forward.23} parent=51 // pred_check_branch
          %734 = sbr.rel (%p732) target = $region60
        $region59: #{decoder_forward.23} parent=51 // pred_region
          %s735 = sand.u32 %s204, 1
          %s736 = scalar_lea.sflag [#allocation3], %s735
          %s737 = sand.u32 %s204, 1
          %s738 = smul.addr %s737, 32
          %s739 = scalar_lea.vmem [#allocation2], %s738
          %741 = dma.done %s736, 512
        $region60: #{decoder_forward.23} parent=51 // pred_fallthru
          _
      $region52: #{decoder_forward.23} parent=5 // pred_fallthru
        _
    $region6: #{decoder_forward.23} parent=1 // loop_footer
      %s20 = sadd.s32 1, %s16
    $region7: #{decoder_forward.23} parent=1 // loop_footer_branch
      %15 = sbr.rel target = $region3
    $region8: #{decoder_forward.23} parent=1 // loop_exit
      _
    %742 = vsyncpa [#allocation3], 1
    %s743 = scalar_lea.sflag [#allocation3], 1
    %744 = vsyncpa %s743, 1

// kernel: decoder_forward.26
$region0: #{decoder_forward.26}
  #allocation0 [shape = 'u32[]', space=smem, size = 0x4, offset = 0x4, fixed_abs, tag = 'smem constant byte address 0x4 - core index']
  #allocation1 [shape = 'u32[72,128]{1,0:T(1,128)}', space=vmem, size = 0x9000, scoped, tag = 'internal scratch']
  #allocation2 [shape = 'f32[16,128]{1,0:T(8,128)}', space=vmem, size = 0x2000, scoped, tag = 'scratch operand']
  %s0 = inlined_call_operand.vmem [shape: bf16[16,256], index: 0, kind: input, shape index: {}]
  %s1 = inlined_call_operand.vmem [shape: bf16[256,128], index: 1, kind: input, shape index: {}]
  %s2 = inlined_call_operand.vmem [shape: f32[1,128], index: 2, kind: input, shape index: {}]
  %s3 = inlined_call_operand.vmem [shape: f32[16,128], index: 3, kind: input, shape index: {}]
  %s4 = inlined_call_operand.vmem [shape: f32[1,128], index: 4, kind: input, shape index: {}]
  %s5 = inlined_call_operand.vmem [shape: f32[1,128], index: 5, kind: input, shape index: {}]
  %s6 = inlined_call_operand.vmem [shape: f32[16,128], index: 6, kind: output, shape index: {}]
  %s7 = sld [smem:[#allocation0]]
  $region42: #{decoder_forward.26} parent=0
    _
  %s9 = ssub.s32 1, %s7
  %s10 = scalar_select 0, %s9, %s7
  // Predicated region
  $region2: #{decoder_forward.26} parent=0 // pred_check
    _
  $region3: #{decoder_forward.26} parent=0 // pred_check_branch
    %12 = sbr.rel (0) target = $region5
  $region4: #{decoder_forward.26} parent=0 // pred_region
    _
  $region5: #{decoder_forward.26} parent=0 // pred_fallthru
    _
  // Predicated region
  $region6: #{decoder_forward.26} parent=0 // pred_check
    _
  $region7: #{decoder_forward.26} parent=0 // pred_check_branch
    %14 = sbr.rel (0) target = $region9
  $region8: #{decoder_forward.26} parent=0 // pred_region
    _
  $region9: #{decoder_forward.26} parent=0 // pred_fallthru
    _
  // Predicated region
  $region10: #{decoder_forward.26} parent=0 // pred_check
    _
  $region11: #{decoder_forward.26} parent=0 // pred_check_branch
    %16 = sbr.rel (0) target = $region13
  $region12: #{decoder_forward.26} parent=0 // pred_region
    _
  $region13: #{decoder_forward.26} parent=0 // pred_fallthru
    _
  // Predicated region
  $region14: #{decoder_forward.26} parent=0 // pred_check
    _
  $region15: #{decoder_forward.26} parent=0 // pred_check_branch
    %18 = sbr.rel (0) target = $region17
  $region16: #{decoder_forward.26} parent=0 // pred_region
    _
  $region17: #{decoder_forward.26} parent=0 // pred_fallthru
    _
  // Predicated region
  $region18: #{decoder_forward.26} parent=0 // pred_check
    _
  $region19: #{decoder_forward.26} parent=0 // pred_check_branch
    %20 = sbr.rel (0) target = $region21
  $region20: #{decoder_forward.26} parent=0 // pred_region
    _
  $region21: #{decoder_forward.26} parent=0 // pred_fallthru
    _
  // Predicated region
  $region22: #{decoder_forward.26} parent=0 // pred_check
    _
  $region23: #{decoder_forward.26} parent=0 // pred_check_branch
    %22 = sbr.rel (0) target = $region25
  $region24: #{decoder_forward.26} parent=0 // pred_region
    _
  $region25: #{decoder_forward.26} parent=0 // pred_fallthru
    _
  %p23 = scmp.eq.s32.totalorder 0, 0
  // Predicated region
  $region26: #{decoder_forward.26} parent=0 // pred_check
    %p24 = pneg %p23
  $region27: #{decoder_forward.26} parent=0 // pred_check_branch
    %26 = sbr.rel (%p24) target = $region29
  $region28: #{decoder_forward.26} parent=0 // pred_region
    %27 = vst [vmem:[#allocation2] sm:$0xff] 0.0
    %28 = vst [vmem:[#allocation2 + $0x8] sm:$0xff] 0.0
  $region29: #{decoder_forward.26} parent=0 // pred_fallthru
    _
  %v29 = vld [vmem:[#allocation2] sm:$0xff]
  %v30 = vld [vmem:[#allocation2 + $0x8] sm:$0xff]
  %v31 = vld [vmem:[%s0] sm:$0xff]
  %v32 = vld [vmem:[%s0 + $0x8] sm:$0xff]
  %v33 = vld [vmem:[%s1] sm:$0xf]
  %v34 = vld [vmem:[%s1 + $0x4] sm:$0xf]
  %v35 = vld [vmem:[%s1 + $0x8] sm:$0xf]
  %v36 = vld [vmem:[%s1 + $0xc] sm:$0xf]
  %v37 = vld [vmem:[%s1 + $0x10] sm:$0xf]
  %v38 = vld [vmem:[%s1 + $0x14] sm:$0xf]
  %v39 = vld [vmem:[%s1 + $0x18] sm:$0xf]
  %v40 = vld [vmem:[%s1 + $0x1c] sm:$0xf]
  %v41 = vld [vmem:[%s1 + $0x20] sm:$0xf]
  %v42 = vld [vmem:[%s1 + $0x24] sm:$0xf]
  %v43 = vld [vmem:[%s1 + $0x28] sm:$0xf]
  %v44 = vld [vmem:[%s1 + $0x2c] sm:$0xf]
  %v45 = vld [vmem:[%s1 + $0x30] sm:$0xf]
  %v46 = vld [vmem:[%s1 + $0x34] sm:$0xf]
  %v47 = vld [vmem:[%s1 + $0x38] sm:$0xf]
  %v48 = vld [vmem:[%s1 + $0x3c] sm:$0xf]
  %v49 = vld [vmem:[%s1 + $0x40] sm:$0xf]
  %v50 = vld [vmem:[%s1 + $0x44] sm:$0xf]
  %v51 = vld [vmem:[%s1 + $0x48] sm:$0xf]
  %v52 = vld [vmem:[%s1 + $0x4c] sm:$0xf]
  %v53 = vld [vmem:[%s1 + $0x50] sm:$0xf]
  %v54 = vld [vmem:[%s1 + $0x54] sm:$0xf]
  %v55 = vld [vmem:[%s1 + $0x58] sm:$0xf]
  %v56 = vld [vmem:[%s1 + $0x5c] sm:$0xf]
  %v57 = vld [vmem:[%s1 + $0x60] sm:$0xf]
  %v58 = vld [vmem:[%s1 + $0x64] sm:$0xf]
  %v59 = vld [vmem:[%s1 + $0x68] sm:$0xf]
  %v60 = vld [vmem:[%s1 + $0x6c] sm:$0xf]
  %v61 = vld [vmem:[%s1 + $0x70] sm:$0xf]
  %v62 = vld [vmem:[%s1 + $0x74] sm:$0xf]
  %v63 = vld [vmem:[%s1 + $0x78] sm:$0xf]
  %v64 = vld [vmem:[%s1 + $0x7c] sm:$0xf]
  %v67 = vunpack.c.l.b16 %v31
  %v68 = vunpack.c.h.b16 %v31
  %v69 = vunpack.c.l.b16 %v32
  %v70 = vunpack.c.h.b16 %v32
  %v71 = vpack.c.b16 %v69, %v67
  %v72 = vpack.c.b16 %v70, %v68
  %v107 = vunpack.c.l.b16 %v33
  %v108 = vunpack.c.l.b16 %v34
  %v109 = vunpack.c.l.b16 %v35
  %v110 = vunpack.c.l.b16 %v36
  %v111 = vunpack.c.l.b16 %v37
  %v112 = vunpack.c.l.b16 %v38
  %v113 = vunpack.c.l.b16 %v39
  %v114 = vunpack.c.l.b16 %v40
  %v115 = vunpack.c.l.b16 %v41
  %v116 = vunpack.c.l.b16 %v42
  %v117 = vunpack.c.l.b16 %v43
  %v118 = vunpack.c.l.b16 %v44
  %v119 = vunpack.c.l.b16 %v45
  %v120 = vunpack.c.l.b16 %v46
  %v121 = vunpack.c.l.b16 %v47
  %v122 = vunpack.c.l.b16 %v48
  %v123 = vunpack.c.l.b16 %v49
  %v124 = vunpack.c.l.b16 %v50
  %v125 = vunpack.c.l.b16 %v51
  %v126 = vunpack.c.l.b16 %v52
  %v127 = vunpack.c.l.b16 %v53
  %v128 = vunpack.c.l.b16 %v54
  %v129 = vunpack.c.l.b16 %v55
  %v130 = vunpack.c.l.b16 %v56
  %v131 = vunpack.c.l.b16 %v57
  %v132 = vunpack.c.l.b16 %v58
  %v133 = vunpack.c.l.b16 %v59
  %v134 = vunpack.c.l.b16 %v60
  %v135 = vunpack.c.l.b16 %v61
  %v136 = vunpack.c.l.b16 %v62
  %v137 = vunpack.c.l.b16 %v63
  %v138 = vunpack.c.l.b16 %v64
  %v139 = vpack.c.b16 %v108, %v107
  %v140 = vpack.c.b16 %v110, %v109
  %v141 = vpack.c.b16 %v112, %v111
  %v142 = vpack.c.b16 %v114, %v113
  %v143 = vpack.c.b16 %v116, %v115
  %v144 = vpack.c.b16 %v118, %v117
  %v145 = vpack.c.b16 %v120, %v119
  %v146 = vpack.c.b16 %v122, %v121
  %v147 = vpack.c.b16 %v124, %v123
  %v148 = vpack.c.b16 %v126, %v125
  %v149 = vpack.c.b16 %v128, %v127
  %v150 = vpack.c.b16 %v130, %v129
  %v151 = vpack.c.b16 %v132, %v131
  %v152 = vpack.c.b16 %v134, %v133
  %v153 = vpack.c.b16 %v136, %v135
  %v154 = vpack.c.b16 %v138, %v137
  %171 = vmatpush.bf16.msra.mxu0 %v146
  %172 = vmatpush.bf16.msra.mxu0 %v145
  %173 = vmatpush.bf16.msra.mxu0 %v144
  %174 = vmatpush.bf16.msra.mxu0 %v143
  %175 = vmatpush.bf16.msra.mxu0 %v142
  %176 = vmatpush.bf16.msra.mxu0 %v141
  %177 = vmatpush.bf16.msra.mxu0 %v140
  %178 = vmatpush.bf16.msra.mxu0 %v139
  %179 = vmatmul.bf16.gmra.mxu0 %v71
  %v180 = vpop.f32.mrf.mxu0
  %v181 = vadd.f32 0.0, %v180
  %v182 = vpop.f32.mrf.mxu0
  %v183 = vadd.f32 0.0, %v182
  %184 = vdwg.mxu0
  %185 = vmatpush.bf16.msra.mxu0 %v154
  %186 = vmatpush.bf16.msra.mxu0 %v153
  %187 = vmatpush.bf16.msra.mxu0 %v152
  %188 = vmatpush.bf16.msra.mxu0 %v151
  %189 = vmatpush.bf16.msra.mxu0 %v150
  %190 = vmatpush.bf16.msra.mxu0 %v149
  %191 = vmatpush.bf16.msra.mxu0 %v148
  %192 = vmatpush.bf16.msra.mxu0 %v147
  %193 = vmatmul.bf16.gmra.mxu0 %v72
  %v194 = vpop.f32.mrf.mxu0
  %v195 = vadd.f32 %v181, %v194
  %v196 = vpop.f32.mrf.mxu0
  %v197 = vadd.f32 %v183, %v196
  %198 = vdwg.mxu0
  %v199 = vadd.f32 %v29, %v195
  %v200 = vadd.f32 %v30, %v197
  %201 = vst [vmem:[#allocation2] sm:$0xff] %v199
  %202 = vst [vmem:[#allocation2 + $0x8] sm:$0xff] %v200
  // Predicated region
  $region30: #{decoder_forward.26} parent=0 // pred_check
    %p203 = pneg %p23
  $region31: #{decoder_forward.26} parent=0 // pred_check_branch
    %205 = sbr.rel (%p203) target = $region33
  $region32: #{decoder_forward.26} parent=0 // pred_region
    %v206 = vld [vmem:[#allocation2] sm:$0xff]
    %v207 = vld [vmem:[#allocation2 + $0x8] sm:$0xff]
    %v208 = vld [vmem:[%s2] sm:$0x1]
    %v210 = vperm.slane %v208, 0
    %v212 = vadd.f32 %v206, %v210
    %v213 = vadd.f32 %v207, %v210
    %v214 = vld [vmem:[%s3] sm:$0xff]
    %v215 = vld [vmem:[%s3 + $0x8] sm:$0xff]
    %v216 = vadd.f32 %v212, %v214
    %v217 = vadd.f32 %v213, %v215
    %218 = vadd.xlane.f32.xlu0 %v216
    %v219 = vpop.xlane.xlu0 %218
    %220 = vadd.xlane.f32.xlu0 %v217
    %v221 = vpop.xlane.xlu0 %220
    %v222 = vrcp.pop 128.0
    %v223 = vmul.f32 128.0, %v222
    %v224 = vsub.f32 1.0, %v223
    %v225 = vmul.f32 %v222, %v224
    %v226 = vadd.f32 %v222, %v225
    %vm227 = vweird.f32 %v222
    %v228 = vsel %vm227, %v222, %v226
    %v229 = vmul.f32 %v219, %v228
    %v230 = vmul.f32 %v221, %v228
    %v231 = vsub.f32 %v216, %v229
    %v232 = vsub.f32 %v217, %v230
    %v233 = vmul.f32 %v231, %v231
    %v234 = vmul.f32 %v232, %v232
    %235 = vadd.xlane.f32.xlu0 %v233
    %v236 = vpop.xlane.xlu0 %235
    %237 = vadd.xlane.f32.xlu0 %v234
    %v238 = vpop.xlane.xlu0 %237
    %v239 = vmul.f32 %v236, %v228
    %v240 = vmul.f32 %v238, %v228
    %v241 = vadd.f32 %v239, 1e-05
    %v242 = vadd.f32 %v240, 1e-05
    %v243 = vrsqrt.pop %v241
    %v244 = vmul.f32 %v243, %v241
    %v245 = vmul.f32 %v244, %v243
    %v246 = vmul.f32 0.5, %v245
    %v247 = vsub.f32 1.5, %v246
    %v248 = vmul.f32 %v243, %v247
    %vm249 = vweird.f32 %v241
    %vm250 = vweird.f32 %v243
    %vm251 = vmor %vm249, %vm250
    %v252 = vsel %vm251, %v243, %v248
    %v253 = vrsqrt.pop %v242
    %v254 = vmul.f32 %v253, %v242
    %v255 = vmul.f32 %v254, %v253
    %v256 = vmul.f32 0.5, %v255
    %v257 = vsub.f32 1.5, %v256
    %v258 = vmul.f32 %v253, %v257
    %vm259 = vweird.f32 %v242
    %vm260 = vweird.f32 %v253
    %vm261 = vmor %vm259, %vm260
    %v262 = vsel %vm261, %v253, %v258
    %v263 = vmul.f32 %v231, %v252
    %v264 = vmul.f32 %v232, %v262
    %v265 = vld [vmem:[%s4] sm:$0x1]
    %v267 = vperm.slane %v265, 0
    %v269 = vmul.f32 %v263, %v267
    %v270 = vmul.f32 %v264, %v267
    %v271 = vld [vmem:[%s5] sm:$0x1]
    %v273 = vperm.slane %v271, 0
    %v275 = vadd.f32 %v269, %v273
    %v276 = vadd.f32 %v270, %v273
    %277 = vst [vmem:[%s6] sm:$0xff] %v275
    %278 = vst [vmem:[%s6 + $0x8] sm:$0xff] %v276
  $region33: #{decoder_forward.26} parent=0 // pred_fallthru
    _
  // Predicated region
  $region34: #{decoder_forward.26} parent=0 // pred_check
    _
  $region35: #{decoder_forward.26} parent=0 // pred_check_branch
    %280 = sbr.rel (0) target = $region37
  $region36: #{decoder_forward.26} parent=0 // pred_region
    _
  $region37: #{decoder_forward.26} parent=0 // pred_fallthru
    _
  // Predicated region
  $region38: #{decoder_forward.26} parent=0 // pred_check
    _
  $region39: #{decoder_forward.26} parent=0 // pred_check_branch
    %282 = sbr.rel (0) target = $region41
  $region40: #{decoder_forward.26} parent=0 // pred_region
    _
  $region41: #{decoder_forward.26} parent=0 // pred_fallthru
    _

// kernel: decoder_forward.25
$region0: #{decoder_forward.25}
  #allocation0 [shape = 'u32[]', space=smem, size = 0x4, offset = 0x4, fixed_abs, tag = 'smem constant byte address 0x4 - core index']
  #allocation1 [shape = 'u32[72,128]{1,0:T(1,128)}', space=vmem, size = 0x9000, scoped, tag = 'internal scratch']
  #allocation2 [shape = 'f32[16,256]{1,0:T(8,128)}', space=vmem, size = 0x4000, scoped, tag = 'scratch operand']
  %s0 = inlined_call_operand.vmem [shape: f32[16,128], index: 0, kind: input, shape index: {}]
  %s1 = inlined_call_operand.vmem [shape: bf16[128,256], index: 1, kind: input, shape index: {}]
  %s2 = inlined_call_operand.vmem [shape: f32[1,256], index: 2, kind: input, shape index: {}]
  %s3 = inlined_call_operand.vmem [shape: bf16[16,256], index: 3, kind: output, shape index: {}]
  %s4 = sld [smem:[#allocation0]]
  $region30: #{decoder_forward.25} parent=0
    _
  %s6 = ssub.s32 1, %s4
  %s7 = scalar_select 0, %s6, %s4
  // Predicated region
  $region2: #{decoder_forward.25} parent=0 // pred_check
    _
  $region3: #{decoder_forward.25} parent=0 // pred_check_branch
    %9 = sbr.rel (0) target = $region5
  $region4: #{decoder_forward.25} parent=0 // pred_region
    _
  $region5: #{decoder_forward.25} parent=0 // pred_fallthru
    _
  // Predicated region
  $region6: #{decoder_forward.25} parent=0 // pred_check
    _
  $region7: #{decoder_forward.25} parent=0 // pred_check_branch
    %11 = sbr.rel (0) target = $region9
  $region8: #{decoder_forward.25} parent=0 // pred_region
    _
  $region9: #{decoder_forward.25} parent=0 // pred_fallthru
    _
  // Predicated region
  $region10: #{decoder_forward.25} parent=0 // pred_check
    _
  $region11: #{decoder_forward.25} parent=0 // pred_check_branch
    %13 = sbr.rel (0) target = $region13
  $region12: #{decoder_forward.25} parent=0 // pred_region
    _
  $region13: #{decoder_forward.25} parent=0 // pred_fallthru
    _
  %p14 = scmp.eq.s32.totalorder 0, 0
  // Predicated region
  $region14: #{decoder_forward.25} parent=0 // pred_check
    %p15 = pneg %p14
  $region15: #{decoder_forward.25} parent=0 // pred_check_branch
    %17 = sbr.rel (%p15) target = $region17
  $region16: #{decoder_forward.25} parent=0 // pred_region
    %18 = vst [vmem:[#allocation2] sm:$0xff] 0.0
    %19 = vst [vmem:[#allocation2 + $0x8] sm:$0xff] 0.0
    %20 = vst [vmem:[#allocation2 + $0x10] sm:$0xff] 0.0
    %21 = vst [vmem:[#allocation2 + $0x18] sm:$0xff] 0.0
  $region17: #{decoder_forward.25} parent=0 // pred_fallthru
    _
  %v22 = vld [vmem:[#allocation2] sm:$0xff]
  %v23 = vld [vmem:[#allocation2 + $0x8] sm:$0xff]
  %v24 = vld [vmem:[#allocation2 + $0x10] sm:$0xff]
  %v25 = vld [vmem:[#allocation2 + $0x18] sm:$0xff]
  %v26 = vld [vmem:[%s0] sm:$0xff]
  %v27 = vld [vmem:[%s0 + $0x8] sm:$0xff]
  %v28 = vpack.c.bf16 %v27, %v26
  %v29 = vld [vmem:[%s1] sm:$0xff]
  %v30 = vld [vmem:[%s1 + $0x8] sm:$0xff]
  %v31 = vld [vmem:[%s1 + $0x10] sm:$0xff]
  %v32 = vld [vmem:[%s1 + $0x18] sm:$0xff]
  %v33 = vld [vmem:[%s1 + $0x20] sm:$0xff]
  %v34 = vld [vmem:[%s1 + $0x28] sm:$0xff]
  %v35 = vld [vmem:[%s1 + $0x30] sm:$0xff]
  %v36 = vld [vmem:[%s1 + $0x38] sm:$0xff]
  %v37 = vld [vmem:[%s1 + $0x40] sm:$0xff]
  %v38 = vld [vmem:[%s1 + $0x48] sm:$0xff]
  %v39 = vld [vmem:[%s1 + $0x50] sm:$0xff]
  %v40 = vld [vmem:[%s1 + $0x58] sm:$0xff]
  %v41 = vld [vmem:[%s1 + $0x60] sm:$0xff]
  %v42 = vld [vmem:[%s1 + $0x68] sm:$0xff]
  %v43 = vld [vmem:[%s1 + $0x70] sm:$0xff]
  %v44 = vld [vmem:[%s1 + $0x78] sm:$0xff]
  %v61 = vunpack.c.l.b16 %v29
  %v62 = vunpack.c.h.b16 %v29
  %v63 = vunpack.c.l.b16 %v30
  %v64 = vunpack.c.h.b16 %v30
  %v65 = vunpack.c.l.b16 %v31
  %v66 = vunpack.c.h.b16 %v31
  %v67 = vunpack.c.l.b16 %v32
  %v68 = vunpack.c.h.b16 %v32
  %v69 = vunpack.c.l.b16 %v33
  %v70 = vunpack.c.h.b16 %v33
  %v71 = vunpack.c.l.b16 %v34
  %v72 = vunpack.c.h.b16 %v34
  %v73 = vunpack.c.l.b16 %v35
  %v74 = vunpack.c.h.b16 %v35
  %v75 = vunpack.c.l.b16 %v36
  %v76 = vunpack.c.h.b16 %v36
  %v77 = vunpack.c.l.b16 %v37
  %v78 = vunpack.c.h.b16 %v37
  %v79 = vunpack.c.l.b16 %v38
  %v80 = vunpack.c.h.b16 %v38
  %v81 = vunpack.c.l.b16 %v39
  %v82 = vunpack.c.h.b16 %v39
  %v83 = vunpack.c.l.b16 %v40
  %v84 = vunpack.c.h.b16 %v40
  %v85 = vunpack.c.l.b16 %v41
  %v86 = vunpack.c.h.b16 %v41
  %v87 = vunpack.c.l.b16 %v42
  %v88 = vunpack.c.h.b16 %v42
  %v89 = vunpack.c.l.b16 %v43
  %v90 = vunpack.c.h.b16 %v43
  %v91 = vunpack.c.l.b16 %v44
  %v92 = vunpack.c.h.b16 %v44
  %v93 = vpack.c.b16 %v63, %v61
  %v94 = vpack.c.b16 %v64, %v62
  %v95 = vpack.c.b16 %v67, %v65
  %v96 = vpack.c.b16 %v68, %v66
  %v97 = vpack.c.b16 %v71, %v69
  %v98 = vpack.c.b16 %v72, %v70
  %v99 = vpack.c.b16 %v75, %v73
  %v100 = vpack.c.b16 %v76, %v74
  %v101 = vpack.c.b16 %v79, %v77
  %v102 = vpack.c.b16 %v80, %v78
  %v103 = vpack.c.b16 %v83, %v81
  %v104 = vpack.c.b16 %v84, %v82
  %v105 = vpack.c.b16 %v87, %v85
  %v106 = vpack.c.b16 %v88, %v86
  %v107 = vpack.c.b16 %v91, %v89
  %v108 = vpack.c.b16 %v92, %v90
  %125 = vmatpush.bf16.msra.mxu0 %v107
  %126 = vmatpush.bf16.msra.mxu0 %v105
  %127 = vmatpush.bf16.msra.mxu0 %v103
  %128 = vmatpush.bf16.msra.mxu0 %v101
  %129 = vmatpush.bf16.msra.mxu0 %v99
  %130 = vmatpush.bf16.msra.mxu0 %v97
  %131 = vmatpush.bf16.msra.mxu0 %v95
  %132 = vmatpush.bf16.msra.mxu0 %v93
  %133 = vmatmul.bf16.gmra.mxu0 %v28
  %v134 = vpop.f32.mrf.mxu0
  %v135 = vadd.f32 0.0, %v134
  %v136 = vpop.f32.mrf.mxu0
  %v137 = vadd.f32 0.0, %v136
  %138 = vdwg.mxu0
  %139 = vmatpush.bf16.msra.mxu0 %v108
  %140 = vmatpush.bf16.msra.mxu0 %v106
  %141 = vmatpush.bf16.msra.mxu0 %v104
  %142 = vmatpush.bf16.msra.mxu0 %v102
  %143 = vmatpush.bf16.msra.mxu0 %v100
  %144 = vmatpush.bf16.msra.mxu0 %v98
  %145 = vmatpush.bf16.msra.mxu0 %v96
  %146 = vmatpush.bf16.msra.mxu0 %v94
  %147 = vmatmul.bf16.gmra.mxu0 %v28
  %v148 = vpop.f32.mrf.mxu0
  %v149 = vadd.f32 0.0, %v148
  %v150 = vpop.f32.mrf.mxu0
  %v151 = vadd.f32 0.0, %v150
  %152 = vdwg.mxu0
  %v153 = vadd.f32 %v22, %v135
  %v154 = vadd.f32 %v23, %v149
  %v155 = vadd.f32 %v24, %v137
  %v156 = vadd.f32 %v25, %v151
  %157 = vst [vmem:[#allocation2] sm:$0xff] %v153
  %158 = vst [vmem:[#allocation2 + $0x8] sm:$0xff] %v154
  %159 = vst [vmem:[#allocation2 + $0x10] sm:$0xff] %v155
  %160 = vst [vmem:[#allocation2 + $0x18] sm:$0xff] %v156
  // Predicated region
  $region18: #{decoder_forward.25} parent=0 // pred_check
    %p161 = pneg %p14
  $region19: #{decoder_forward.25} parent=0 // pred_check_branch
    %163 = sbr.rel (%p161) target = $region21
  $region20: #{decoder_forward.25} parent=0 // pred_region
    %v164 = vld [vmem:[#allocation2] sm:$0xff]
    %v165 = vld [vmem:[#allocation2 + $0x8] sm:$0xff]
    %v166 = vld [vmem:[#allocation2 + $0x10] sm:$0xff]
    %v167 = vld [vmem:[#allocation2 + $0x18] sm:$0xff]
    %v168 = vld [vmem:[%s2] sm:$0x3]
    %v170 = vperm.slane %v168, 0
    %v171 = vperm.slane %v168, 1
    %v174 = vadd.f32 %v164, %v170
    %v175 = vadd.f32 %v165, %v171
    %v176 = vadd.f32 %v166, %v170
    %v177 = vadd.f32 %v167, %v171
    %v178 = vmax.f32 %v174, 0.0
    %v179 = vmax.f32 %v175, 0.0
    %v180 = vmax.f32 %v176, 0.0
    %v181 = vmax.f32 %v177, 0.0
    %v182 = vpack.c.bf16 %v179, %v178
    %v183 = vpack.c.bf16 %v181, %v180
    %184 = vst [vmem:[%s3] sm:$0xff] %v182
    %185 = vst [vmem:[%s3 + $0x8] sm:$0xff] %v183
  $region21: #{decoder_forward.25} parent=0 // pred_fallthru
    _
  // Predicated region
  $region22: #{decoder_forward.25} parent=0 // pred_check
    _
  $region23: #{decoder_forward.25} parent=0 // pred_check_branch
    %187 = sbr.rel (0) target = $region25
  $region24: #{decoder_forward.25} parent=0 // pred_region
    _
  $region25: #{decoder_forward.25} parent=0 // pred_fallthru
    _
  // Predicated region
  $region26: #{decoder_forward.25} parent=0 // pred_check
    _
  $region27: #{decoder_forward.25} parent=0 // pred_check_branch
    %189 = sbr.rel (0) target = $region29
  $region28: #{decoder_forward.25} parent=0 // pred_region
    _
  $region29: #{decoder_forward.25} parent=0 // pred_fallthru
    _

// kernel: decoder_forward.35
$region0: #{decoder_forward.35}
  #allocation0 [shape = 'u32[]', space=smem, size = 0x4, offset = 0x4, fixed_abs, tag = 'smem constant byte address 0x4 - core index']
  #allocation1 [shape = 'u32[72,128]{1,0:T(1,128)}', space=vmem, size = 0x9000, scoped, tag = 'internal scratch']
  #allocation2 [shape = 'f32[16,128]{1,0:T(8,128)}', space=vmem, size = 0x2000, scoped, tag = 'scratch operand']
  %s0 = inlined_call_operand.vmem [shape: bf16[16,256], index: 0, kind: input, shape index: {}]
  %s1 = inlined_call_operand.vmem [shape: bf16[256,128], index: 1, kind: input, shape index: {}]
  %s2 = inlined_call_operand.vmem [shape: f32[1,128], index: 2, kind: input, shape index: {}]
  %s3 = inlined_call_operand.vmem [shape: f32[16,128], index: 3, kind: input, shape index: {}]
  %s4 = inlined_call_operand.vmem [shape: f32[1,128], index: 4, kind: input, shape index: {}]
  %s5 = inlined_call_operand.vmem [shape: f32[1,128], index: 5, kind: input, shape index: {}]
  %s6 = inlined_call_operand.hbm [shape: f32[16,128], index: 6, kind: output, shape index: {}]
  %s7 = sld [smem:[#allocation0]]
  $region42: #{decoder_forward.35} parent=0
    _
  %s9 = ssub.s32 1, %s7
  %s10 = scalar_select 0, %s9, %s7
  $region1: #{decoder_forward.35} parent=0
    #allocation3 [shape = 'u8[8192]{0}', space=vmem, size = 0x2000, scoped, tag = 'output window, operand 0, single buffered']
    #allocation4 [shape = 's32[1]{0}', space=sflag, size = 0x4, scoped, tag = 'scoped memory for decoder_forward.35']
    %11 = vsyncpa [#allocation4], 0
    // Predicated region
    $region2: #{decoder_forward.35} parent=1 // pred_check
      _
    $region3: #{decoder_forward.35} parent=1 // pred_check_branch
      %13 = sbr.rel (0) target = $region5
    $region4: #{decoder_forward.35} parent=1 // pred_region
      _
    $region5: #{decoder_forward.35} parent=1 // pred_fallthru
      _
    // Predicated region
    $region6: #{decoder_forward.35} parent=1 // pred_check
      _
    $region7: #{decoder_forward.35} parent=1 // pred_check_branch
      %15 = sbr.rel (0) target = $region9
    $region8: #{decoder_forward.35} parent=1 // pred_region
      _
    $region9: #{decoder_forward.35} parent=1 // pred_fallthru
      _
    // Predicated region
    $region10: #{decoder_forward.35} parent=1 // pred_check
      _
    $region11: #{decoder_forward.35} parent=1 // pred_check_branch
      %17 = sbr.rel (0) target = $region13
    $region12: #{decoder_forward.35} parent=1 // pred_region
      _
    $region13: #{decoder_forward.35} parent=1 // pred_fallthru
      _
    // Predicated region
    $region14: #{decoder_forward.35} parent=1 // pred_check
      _
    $region15: #{decoder_forward.35} parent=1 // pred_check_branch
      %19 = sbr.rel (0) target = $region17
    $region16: #{decoder_forward.35} parent=1 // pred_region
      _
    $region17: #{decoder_forward.35} parent=1 // pred_fallthru
      _
    // Predicated region
    $region18: #{decoder_forward.35} parent=1 // pred_check
      _
    $region19: #{decoder_forward.35} parent=1 // pred_check_branch
      %21 = sbr.rel (0) target = $region21
    $region20: #{decoder_forward.35} parent=1 // pred_region
      _
    $region21: #{decoder_forward.35} parent=1 // pred_fallthru
      _
    // Predicated region
    $region22: #{decoder_forward.35} parent=1 // pred_check
      _
    $region23: #{decoder_forward.35} parent=1 // pred_check_branch
      %23 = sbr.rel (0) target = $region25
    $region24: #{decoder_forward.35} parent=1 // pred_region
      _
    $region25: #{decoder_forward.35} parent=1 // pred_fallthru
      _
    %p24 = scmp.eq.s32.totalorder 0, 0
    // Predicated region
    $region26: #{decoder_forward.35} parent=1 // pred_check
      %p25 = pneg %p24
    $region27: #{decoder_forward.35} parent=1 // pred_check_branch
      %27 = sbr.rel (%p25) target = $region29
    $region28: #{decoder_forward.35} parent=1 // pred_region
      %28 = vst [vmem:[#allocation2] sm:$0xff] 0.0
      %29 = vst [vmem:[#allocation2 + $0x8] sm:$0xff] 0.0
    $region29: #{decoder_forward.35} parent=1 // pred_fallthru
      _
    %v30 = vld [vmem:[#allocation2] sm:$0xff]
    %v31 = vld [vmem:[#allocation2 + $0x8] sm:$0xff]
    %v32 = vld [vmem:[%s0] sm:$0xff]
    %v33 = vld [vmem:[%s0 + $0x8] sm:$0xff]
    %v34 = vld [vmem:[%s1] sm:$0xf]
    %v35 = vld [vmem:[%s1 + $0x4] sm:$0xf]
    %v36 = vld [vmem:[%s1 + $0x8] sm:$0xf]
    %v37 = vld [vmem:[%s1 + $0xc] sm:$0xf]
    %v38 = vld [vmem:[%s1 + $0x10] sm:$0xf]
    %v39 = vld [vmem:[%s1 + $0x14] sm:$0xf]
    %v40 = vld [vmem:[%s1 + $0x18] sm:$0xf]
    %v41 = vld [vmem:[%s1 + $0x1c] sm:$0xf]
    %v42 = vld [vmem:[%s1 + $0x20] sm:$0xf]
    %v43 = vld [vmem:[%s1 + $0x24] sm:$0xf]
    %v44 = vld [vmem:[%s1 + $0x28] sm:$0xf]
    %v45 = vld [vmem:[%s1 + $0x2c] sm:$0xf]
    %v46 = vld [vmem:[%s1 + $0x30] sm:$0xf]
    %v47 = vld [vmem:[%s1 + $0x34] sm:$0xf]
    %v48 = vld [vmem:[%s1 + $0x38] sm:$0xf]
    %v49 = vld [vmem:[%s1 + $0x3c] sm:$0xf]
    %v50 = vld [vmem:[%s1 + $0x40] sm:$0xf]
    %v51 = vld [vmem:[%s1 + $0x44] sm:$0xf]
    %v52 = vld [vmem:[%s1 + $0x48] sm:$0xf]
    %v53 = vld [vmem:[%s1 + $0x4c] sm:$0xf]
    %v54 = vld [vmem:[%s1 + $0x50] sm:$0xf]
    %v55 = vld [vmem:[%s1 + $0x54] sm:$0xf]
    %v56 = vld [vmem:[%s1 + $0x58] sm:$0xf]
    %v57 = vld [vmem:[%s1 + $0x5c] sm:$0xf]
    %v58 = vld [vmem:[%s1 + $0x60] sm:$0xf]
    %v59 = vld [vmem:[%s1 + $0x64] sm:$0xf]
    %v60 = vld [vmem:[%s1 + $0x68] sm:$0xf]
    %v61 = vld [vmem:[%s1 + $0x6c] sm:$0xf]
    %v62 = vld [vmem:[%s1 + $0x70] sm:$0xf]
    %v63 = vld [vmem:[%s1 + $0x74] sm:$0xf]
    %v64 = vld [vmem:[%s1 + $0x78] sm:$0xf]
    %v65 = vld [vmem:[%s1 + $0x7c] sm:$0xf]
    %v68 = vunpack.c.l.b16 %v32
    %v69 = vunpack.c.h.b16 %v32
    %v70 = vunpack.c.l.b16 %v33
    %v71 = vunpack.c.h.b16 %v33
    %v72 = vpack.c.b16 %v70, %v68
    %v73 = vpack.c.b16 %v71, %v69
    %v108 = vunpack.c.l.b16 %v34
    %v109 = vunpack.c.l.b16 %v35
    %v110 = vunpack.c.l.b16 %v36
    %v111 = vunpack.c.l.b16 %v37
    %v112 = vunpack.c.l.b16 %v38
    %v113 = vunpack.c.l.b16 %v39
    %v114 = vunpack.c.l.b16 %v40
    %v115 = vunpack.c.l.b16 %v41
    %v116 = vunpack.c.l.b16 %v42
    %v117 = vunpack.c.l.b16 %v43
    %v118 = vunpack.c.l.b16 %v44
    %v119 = vunpack.c.l.b16 %v45
    %v120 = vunpack.c.l.b16 %v46
    %v121 = vunpack.c.l.b16 %v47
    %v122 = vunpack.c.l.b16 %v48
    %v123 = vunpack.c.l.b16 %v49
    %v124 = vunpack.c.l.b16 %v50
    %v125 = vunpack.c.l.b16 %v51
    %v126 = vunpack.c.l.b16 %v52
    %v127 = vunpack.c.l.b16 %v53
    %v128 = vunpack.c.l.b16 %v54
    %v129 = vunpack.c.l.b16 %v55
    %v130 = vunpack.c.l.b16 %v56
    %v131 = vunpack.c.l.b16 %v57
    %v132 = vunpack.c.l.b16 %v58
    %v133 = vunpack.c.l.b16 %v59
    %v134 = vunpack.c.l.b16 %v60
    %v135 = vunpack.c.l.b16 %v61
    %v136 = vunpack.c.l.b16 %v62
    %v137 = vunpack.c.l.b16 %v63
    %v138 = vunpack.c.l.b16 %v64
    %v139 = vunpack.c.l.b16 %v65
    %v140 = vpack.c.b16 %v109, %v108
    %v141 = vpack.c.b16 %v111, %v110
    %v142 = vpack.c.b16 %v113, %v112
    %v143 = vpack.c.b16 %v115, %v114
    %v144 = vpack.c.b16 %v117, %v116
    %v145 = vpack.c.b16 %v119, %v118
    %v146 = vpack.c.b16 %v121, %v120
    %v147 = vpack.c.b16 %v123, %v122
    %v148 = vpack.c.b16 %v125, %v124
    %v149 = vpack.c.b16 %v127, %v126
    %v150 = vpack.c.b16 %v129, %v128
    %v151 = vpack.c.b16 %v131, %v130
    %v152 = vpack.c.b16 %v133, %v132
    %v153 = vpack.c.b16 %v135, %v134
    %v154 = vpack.c.b16 %v137, %v136
    %v155 = vpack.c.b16 %v139, %v138
    %172 = vmatpush.bf16.msra.mxu0 %v147
    %173 = vmatpush.bf16.msra.mxu0 %v146
    %174 = vmatpush.bf16.msra.mxu0 %v145
    %175 = vmatpush.bf16.msra.mxu0 %v144
    %176 = vmatpush.bf16.msra.mxu0 %v143
    %177 = vmatpush.bf16.msra.mxu0 %v142
    %178 = vmatpush.bf16.msra.mxu0 %v141
    %179 = vmatpush.bf16.msra.mxu0 %v140
    %180 = vmatmul.bf16.gmra.mxu0 %v72
    %v181 = vpop.f32.mrf.mxu0
    %v182 = vadd.f32 0.0, %v181
    %v183 = vpop.f32.mrf.mxu0
    %v184 = vadd.f32 0.0, %v183
    %185 = vdwg.mxu0
    %186 = vmatpush.bf16.msra.mxu0 %v155
    %187 = vmatpush.bf16.msra.mxu0 %v154
    %188 = vmatpush.bf16.msra.mxu0 %v153
    %189 = vmatpush.bf16.msra.mxu0 %v152
    %190 = vmatpush.bf16.msra.mxu0 %v151
    %191 = vmatpush.bf16.msra.mxu0 %v150
    %192 = vmatpush.bf16.msra.mxu0 %v149
    %193 = vmatpush.bf16.msra.mxu0 %v148
    %194 = vmatmul.bf16.gmra.mxu0 %v73
    %v195 = vpop.f32.mrf.mxu0
    %v196 = vadd.f32 %v182, %v195
    %v197 = vpop.f32.mrf.mxu0
    %v198 = vadd.f32 %v184, %v197
    %199 = vdwg.mxu0
    %v200 = vadd.f32 %v30, %v196
    %v201 = vadd.f32 %v31, %v198
    %202 = vst [vmem:[#allocation2] sm:$0xff] %v200
    %203 = vst [vmem:[#allocation2 + $0x8] sm:$0xff] %v201
    // Predicated region
    $region30: #{decoder_forward.35} parent=1 // pred_check
      %p204 = pneg %p24
    $region31: #{decoder_forward.35} parent=1 // pred_check_branch
      %206 = sbr.rel (%p204) target = $region33
    $region32: #{decoder_forward.35} parent=1 // pred_region
      %v207 = vld [vmem:[#allocation2] sm:$0xff]
      %v208 = vld [vmem:[#allocation2 + $0x8] sm:$0xff]
      %v209 = vld [vmem:[%s2] sm:$0x1]
      %v211 = vperm.slane %v209, 0
      %v213 = vadd.f32 %v207, %v211
      %v214 = vadd.f32 %v208, %v211
      %v215 = vld [vmem:[%s3] sm:$0xff]
      %v216 = vld [vmem:[%s3 + $0x8] sm:$0xff]
      %v217 = vadd.f32 %v213, %v215
      %v218 = vadd.f32 %v214, %v216
      %219 = vadd.xlane.f32.xlu0 %v217
      %v220 = vpop.xlane.xlu0 %219
      %221 = vadd.xlane.f32.xlu0 %v218
      %v222 = vpop.xlane.xlu0 %221
      %v223 = vrcp.pop 128.0
      %v224 = vmul.f32 128.0, %v223
      %v225 = vsub.f32 1.0, %v224
      %v226 = vmul.f32 %v223, %v225
      %v227 = vadd.f32 %v223, %v226
      %vm228 = vweird.f32 %v223
      %v229 = vsel %vm228, %v223, %v227
      %v230 = vmul.f32 %v220, %v229
      %v231 = vmul.f32 %v222, %v229
      %v232 = vsub.f32 %v217, %v230
      %v233 = vsub.f32 %v218, %v231
      %v234 = vmul.f32 %v232, %v232
      %v235 = vmul.f32 %v233, %v233
      %236 = vadd.xlane.f32.xlu0 %v234
      %v237 = vpop.xlane.xlu0 %236
      %238 = vadd.xlane.f32.xlu0 %v235
      %v239 = vpop.xlane.xlu0 %238
      %v240 = vmul.f32 %v237, %v229
      %v241 = vmul.f32 %v239, %v229
      %v242 = vadd.f32 %v240, 1e-05
      %v243 = vadd.f32 %v241, 1e-05
      %v244 = vrsqrt.pop %v242
      %v245 = vmul.f32 %v244, %v242
      %v246 = vmul.f32 %v245, %v244
      %v247 = vmul.f32 0.5, %v246
      %v248 = vsub.f32 1.5, %v247
      %v249 = vmul.f32 %v244, %v248
      %vm250 = vweird.f32 %v242
      %vm251 = vweird.f32 %v244
      %vm252 = vmor %vm250, %vm251
      %v253 = vsel %vm252, %v244, %v249
      %v254 = vrsqrt.pop %v243
      %v255 = vmul.f32 %v254, %v243
      %v256 = vmul.f32 %v255, %v254
      %v257 = vmul.f32 0.5, %v256
      %v258 = vsub.f32 1.5, %v257
      %v259 = vmul.f32 %v254, %v258
      %vm260 = vweird.f32 %v243
      %vm261 = vweird.f32 %v254
      %vm262 = vmor %vm260, %vm261
      %v263 = vsel %vm262, %v254, %v259
      %v264 = vmul.f32 %v232, %v253
      %v265 = vmul.f32 %v233, %v263
      %v266 = vld [vmem:[%s4] sm:$0x1]
      %v268 = vperm.slane %v266, 0
      %v270 = vmul.f32 %v264, %v268
      %v271 = vmul.f32 %v265, %v268
      %v272 = vld [vmem:[%s5] sm:$0x1]
      %v274 = vperm.slane %v272, 0
      %v276 = vadd.f32 %v270, %v274
      %v277 = vadd.f32 %v271, %v274
      %278 = vst [vmem:[#allocation3] sm:$0xff] %v276
      %279 = vst [vmem:[#allocation3 + $0x8] sm:$0xff] %v277
    $region33: #{decoder_forward.35} parent=1 // pred_fallthru
      _
    // Predicated region
    $region34: #{decoder_forward.35} parent=1 // pred_check
      _
    $region35: #{decoder_forward.35} parent=1 // pred_check_branch
      %281 = sbr.rel (0) target = $region37
    $region36: #{decoder_forward.35} parent=1 // pred_region
      %283 = vsyncadd [#allocation4], 0
      %s284 = sshll.u32 [#allocation3], 4
      %s285 = int_to_ptr.vmem [resolvable:$true] %s284
      %s286 = sshll.u32 %s6, 4
      %s287 = int_to_ptr.hbm [resolvable:$true] %s286
      %292 = dma.vmem_to_hbm [thread:$0]  %s285, 256, %s287, [#allocation4], 128, 128, 8
    $region37: #{decoder_forward.35} parent=1 // pred_fallthru
      _
    // Predicated region
    $region38: #{decoder_forward.35} parent=1 // pred_check
      _
    $region39: #{decoder_forward.35} parent=1 // pred_check_branch
      %294 = sbr.rel (0) target = $region41
    $region40: #{decoder_forward.35} parent=1 // pred_region
      %296 = dma.done [#allocation4], 256
    $region41: #{decoder_forward.35} parent=1 // pred_fallthru
      _
    %297 = vsyncpa [#allocation4], 1

</llo_original>
